<compile_context>
chip_gen: v7x
topology: tpu7x:2x2x1
jax: 0.10.0
libtpu: 0.0.40
codegen_flags: <defaults>
</compile_context>

<pallas_src>
import functools
import math

import jax
import jax.numpy as jnp
from jax.experimental import pallas as pl
from jax.experimental.pallas import tpu as pltpu


# ----------------------------------------------------------------------------
# Helpers
# ----------------------------------------------------------------------------
_VMEM_LIMIT = 64 * 1024 * 1024   # scoped-VMEM budget; actual block usage ≤ ~8 MiB


def _pick_tile(dim, preferred):
    """Largest 128-aligned tile that divides `dim` (falls back to full extent
    only for tiny demo dims; real dims are padded to 128-multiples at init)."""
    for t in (preferred, 768, 512, 384, 256, 128):
        if t <= dim and dim % t == 0:
            return t
    return dim


def _gelu(x):
    # TODO(synk): HF BERT uses exact erf-GELU; tanh approximation used here for
    # robust Mosaic lowering (numerically very close).
    return 0.5 * x * (1.0 + jnp.tanh(0.7978845608028654 * (x + 0.044715 * x * x * x)))


def _to_bf16(x):
    return x if x.dtype == jnp.bfloat16 else x.astype(jnp.bfloat16)


# ----------------------------------------------------------------------------
# Pallas kernels
# ----------------------------------------------------------------------------
def _matmul_bias_kernel(x_ref, w_ref, b_ref, o_ref, acc_ref, *, activation):
    """Tiled matmul: bf16 MXU operands, f32 accumulator, bias (+GELU) finalize."""
    @pl.when(pl.program_id(2) == 0)
    def _():
        acc_ref[...] = jnp.zeros_like(acc_ref)

    acc_ref[...] += jnp.dot(_to_bf16(x_ref[...]), _to_bf16(w_ref[...]),
                            preferred_element_type=jnp.float32)

    @pl.when(pl.program_id(2) == pl.num_programs(2) - 1)
    def _():
        y = acc_ref[...] + b_ref[...]                 # f32
        if activation == "gelu":
            y = _gelu(y)
        o_ref[...] = y.astype(o_ref.dtype)


def _matmul_ln_kernel(*refs, activation, has_residual, eps):
    """Matmul + bias (+GELU) (+residual add) + LayerNorm, fused into the
    last-k finalize. Requires the full output width (N) as one tile."""
    if has_residual:
        x_ref, w_ref, b_ref, r_ref, g_ref, be_ref, o_ref, acc_ref = refs
    else:
        x_ref, w_ref, b_ref, g_ref, be_ref, o_ref, acc_ref = refs

    @pl.when(pl.program_id(1) == 0)
    def _():
        acc_ref[...] = jnp.zeros_like(acc_ref)

    acc_ref[...] += jnp.dot(_to_bf16(x_ref[...]), _to_bf16(w_ref[...]),
                            preferred_element_type=jnp.float32)

    @pl.when(pl.program_id(1) == pl.num_programs(1) - 1)
    def _():
        y = acc_ref[...] + b_ref[...]                 # f32
        if activation == "gelu":
            y = _gelu(y)
        if has_residual:
            y = y + r_ref[...].astype(jnp.float32)
        mu = jnp.mean(y, axis=-1, keepdims=True)
        yc = y - mu
        var = jnp.mean(yc * yc, axis=-1, keepdims=True)
        yn = yc * jax.lax.rsqrt(var + eps)
        o_ref[...] = (yn * g_ref[...] + be_ref[...]).astype(o_ref.dtype)


def _qkv_matmul_kernel(x_ref, w_ref, b_ref, o_ref, acc_ref):
    """Stacked QKV projection: grid leading axis n in {q,k,v}, weight (3,H,H)."""
    @pl.when(pl.program_id(2) == 0)
    def _():
        acc_ref[...] = jnp.zeros_like(acc_ref)

    acc_ref[...] += jnp.dot(_to_bf16(x_ref[...]), _to_bf16(w_ref[0]),
                            preferred_element_type=jnp.float32)

    @pl.when(pl.program_id(2) == pl.num_programs(2) - 1)
    def _():
        o_ref[0] = (acc_ref[...] + b_ref[0]).astype(o_ref.dtype)


def _embed_ln_kernel(we_ref, pe_ref, te_ref, g_ref, b_ref, o_ref, *, eps):
    """Fused word+pos+type embedding add + LayerNorm (all math in f32)."""
    x = (we_ref[0].astype(jnp.float32) + pe_ref[...].astype(jnp.float32)
         + te_ref[...].astype(jnp.float32))
    mu = jnp.mean(x, axis=-1, keepdims=True)
    xc = x - mu
    var = jnp.mean(xc * xc, axis=-1, keepdims=True)
    y = xc * jax.lax.rsqrt(var + eps)
    o_ref[0] = (y * g_ref[...] + b_ref[...]).astype(o_ref.dtype)


def _attention_kernel(q_ref, k_ref, v_ref, mb_ref, o_ref, *,
                      scale, heads_per_block, head_dim):
    """Attention for one (batch, head-group) block.

    Q/K/V are windows of the stacked (3, B, S, H) projection selected purely by
    BlockSpec index_maps (no HBM slices / transposes). Scores, mask add and
    softmax in f32; MXU matmuls use bf16 inputs.
    """
    # TODO(synk): for long sequences (v7x 64 MiB VMEM) switch to a flash-style
    # KV-tiled online-softmax loop instead of materializing (S, S) scores.
    qb = _to_bf16(q_ref[0, 0])                      # (S, gH)
    kb = _to_bf16(k_ref[0, 0])
    vb = _to_bf16(v_ref[0, 0])
    mb = mb_ref[0].astype(jnp.float32)              # (1, S) additive mask bias

    outs = []
    for h in range(heads_per_block):                # static unrolled head loop
        lo, hi = h * head_dim, (h + 1) * head_dim
        q, k, v = qb[:, lo:hi], kb[:, lo:hi], vb[:, lo:hi]
        s = jax.lax.dot_general(q, k, (((1,), (1,)), ((), ())),
                                preferred_element_type=jnp.float32) * scale
        s = s + mb
        s = s - jnp.max(s, axis=-1, keepdims=True)
        p = jnp.exp(s)
        denom = jnp.sum(p, axis=-1, keepdims=True)
        p = p * pl.reciprocal(denom, approx=True)   # EUP, not a VPU divide
        outs.append(jnp.dot(p.astype(jnp.bfloat16), v,
                            preferred_element_type=jnp.float32))
    # Single lane-dense store of the whole head-group.
    o_ref[0] = jnp.concatenate(outs, axis=-1).astype(o_ref.dtype)


# ----------------------------------------------------------------------------
# Pallas wrappers
# ----------------------------------------------------------------------------
def matmul_bias(x, w, b, activation=None, out_dtype=jnp.bfloat16,
                bm=512, bn=512, bk=512):
    M, K = x.shape
    _, N = w.shape
    tm, tn, tk = _pick_tile(M, bm), _pick_tile(N, bn), _pick_tile(K, bk)
    kernel = functools.partial(_matmul_bias_kernel, activation=activation)
    return pl.pallas_call(
        kernel,
        out_shape=jax.ShapeDtypeStruct((M, N), out_dtype),
        grid_spec=pltpu.PrefetchScalarGridSpec(
            num_scalar_prefetch=0,
            grid=(M // tm, N // tn, K // tk),
            in_specs=[
                pl.BlockSpec((tm, tk), lambda i, j, k: (i, k)),
                pl.BlockSpec((tk, tn), lambda i, j, k: (k, j)),
                pl.BlockSpec((1, tn), lambda i, j, k: (0, j)),
            ],
            out_specs=pl.BlockSpec((tm, tn), lambda i, j, k: (i, j)),
            scratch_shapes=[pltpu.VMEM((tm, tn), jnp.float32)],
        ),
        compiler_params=pltpu.CompilerParams(
            dimension_semantics=("parallel", "parallel", "arbitrary"),
            vmem_limit_bytes=_VMEM_LIMIT),
    )(x, w, b.reshape(1, N).astype(jnp.float32))


def matmul_bias_ln(x, w, b, gamma, beta, residual=None, activation=None,
                   eps=1e-12, out_dtype=jnp.bfloat16, bm=512, bk=512):
    """Matmul with the whole output width as one tile so residual+LN can be
    fused into the finalize (N = hidden, 768 for real BERT = 6x128 lanes)."""
    M, K = x.shape
    _, N = w.shape
    tm, tk = _pick_tile(M, bm), _pick_tile(K, bk)
    has_res = residual is not None
    kernel = functools.partial(_matmul_ln_kernel, activation=activation,
                               has_residual=has_res, eps=eps)
    row_spec = pl.BlockSpec((tm, N), lambda i, k: (i, 0))
    vec_spec = pl.BlockSpec((1, N), lambda i, k: (0, 0))
    in_specs = [pl.BlockSpec((tm, tk), lambda i, k: (i, k)),
                pl.BlockSpec((tk, N), lambda i, k: (k, 0)),
                vec_spec]
    args = [x, w, b.reshape(1, N).astype(jnp.float32)]
    if has_res:
        in_specs.append(row_spec)
        args.append(residual)
    in_specs += [vec_spec, vec_spec]
    args += [gamma.reshape(1, N).astype(jnp.float32),
             beta.reshape(1, N).astype(jnp.float32)]
    return pl.pallas_call(
        kernel,
        out_shape=jax.ShapeDtypeStruct((M, N), out_dtype),
        grid_spec=pltpu.PrefetchScalarGridSpec(
            num_scalar_prefetch=0,
            grid=(M // tm, K // tk),
            in_specs=in_specs,
            out_specs=row_spec,
            scratch_shapes=[pltpu.VMEM((tm, N), jnp.float32)],
        ),
        compiler_params=pltpu.CompilerParams(
            dimension_semantics=("parallel", "arbitrary"),
            vmem_limit_bytes=_VMEM_LIMIT),
    )(*args)


def qkv_projection(x, wqkv, bqkv, out_dtype=jnp.bfloat16, bm=512, bk=512):
    """x:(M,H) @ wqkv:(3,H,H) + bqkv:(3,H) -> stacked (3,M,H) (no XLA slices)."""
    M, K = x.shape
    _, _, N = wqkv.shape
    tm, tk = _pick_tile(M, bm), _pick_tile(K, bk)
    return pl.pallas_call(
        _qkv_matmul_kernel,
        out_shape=jax.ShapeDtypeStruct((3, M, N), out_dtype),
        grid_spec=pltpu.PrefetchScalarGridSpec(
            num_scalar_prefetch=0,
            grid=(3, M // tm, K // tk),
            in_specs=[
                pl.BlockSpec((tm, tk), lambda n, i, k: (i, k)),
                pl.BlockSpec((1, tk, N), lambda n, i, k: (n, k, 0)),
                pl.BlockSpec((1, 1, N), lambda n, i, k: (n, 0, 0)),
            ],
            out_specs=pl.BlockSpec((1, tm, N), lambda n, i, k: (n, i, 0)),
            scratch_shapes=[pltpu.VMEM((tm, N), jnp.float32)],
        ),
        compiler_params=pltpu.CompilerParams(
            dimension_semantics=("parallel", "parallel", "arbitrary"),
            vmem_limit_bytes=_VMEM_LIMIT),
    )(x, wqkv, bqkv.reshape(3, 1, N).astype(jnp.float32))


def embed_layer_norm(we, pe, te, gamma, beta, eps=1e-12, out_dtype=jnp.bfloat16):
    """Fused (word + pos + type) embedding add and LayerNorm."""
    B, S, H = we.shape
    kernel = functools.partial(_embed_ln_kernel, eps=eps)
    return pl.pallas_call(
        kernel,
        out_shape=jax.ShapeDtypeStruct((B, S, H), out_dtype),
        grid=(B,),
        in_specs=[
            pl.BlockSpec((1, S, H), lambda b: (b, 0, 0)),
            pl.BlockSpec((S, H), lambda b: (0, 0)),
            pl.BlockSpec((1, H), lambda b: (0, 0)),
            pl.BlockSpec((1, H), lambda b: (0, 0)),
            pl.BlockSpec((1, H), lambda b: (0, 0)),
        ],
        out_specs=pl.BlockSpec((1, S, H), lambda b: (b, 0, 0)),
        compiler_params=pltpu.CompilerParams(
            dimension_semantics=("parallel",),
            vmem_limit_bytes=_VMEM_LIMIT),
    )(we, pe, te.reshape(1, H).astype(jnp.float32),
      gamma.reshape(1, H).astype(jnp.float32),
      beta.reshape(1, H).astype(jnp.float32))


def multi_head_attention(qkv, mask_bias, num_heads, head_dim):
    """qkv: stacked (3, B, S, H); mask_bias: (B, 1, S) additive f32.

    Heads are grouped so the per-block hidden width is 128 lanes (or the full
    H when H < 128); Q/K/V blocks are selected by index_map over the leading
    stacked axis — no HBM slices or head transposes.
    """
    _, B, S, H = qkv.shape
    hpb = max(1, 128 // head_dim)
    while num_heads % hpb:
        hpb -= 1
    gH = hpb * head_dim
    if gH % 128 != 0 and gH != H:       # keep BlockSpec last-dim constraint valid
        hpb, gH = num_heads, H
    scale = 1.0 / math.sqrt(head_dim)
    kernel = functools.partial(_attention_kernel, scale=scale,
                               heads_per_block=hpb, head_dim=head_dim)

    def qkv_spec(which):
        return pl.BlockSpec((1, 1, S, gH), lambda b, j: (which, b, 0, j))

    return pl.pallas_call(
        kernel,
        out_shape=jax.ShapeDtypeStruct((B, S, H), jnp.bfloat16),
        grid=(B, num_heads // hpb),
        in_specs=[
            qkv_spec(0), qkv_spec(1), qkv_spec(2),
            pl.BlockSpec((1, 1, S), lambda b, j: (b, 0, 0)),
        ],
        out_specs=pl.BlockSpec((1, S, gH), lambda b, j: (b, 0, j)),
        compiler_params=pltpu.CompilerParams(
            dimension_semantics=("parallel", "parallel"),
            vmem_limit_bytes=_VMEM_LIMIT),
    )(qkv, qkv, qkv, mask_bias)


# ----------------------------------------------------------------------------
# Parameter construction (deterministic, synthetic; matmul weights in bf16)
# ----------------------------------------------------------------------------
def init_params(key, cfg):
    H, I, V, P = cfg["hidden"], cfg["intermediate"], cfg["vocab"], cfg["max_pos"]
    # Pad vocab to a 256-multiple so the decoder matmul always tiles with
    # 128-aligned lane blocks (real BERT: 30522 -> 30720).
    V_pad = ((V + 255) // 256) * 256

    def normal(k, shape):
        return jax.random.normal(k, shape, dtype=jnp.float32) * 0.02

    keys = iter(jax.random.split(key, 8 + 8 * cfg["layers"]))
    word_emb = normal(next(keys), (V, H))
    # Tied decoder weight, pre-transposed + padded once at init.
    dec_wt = jnp.zeros((H, V_pad), jnp.float32).at[:, :V].set(word_emb.T)
    params = {
        "word_emb": word_emb,                                   # f32 gather table
        "pos_emb": normal(next(keys), (P, H)),
        "type_emb": normal(next(keys), (2, H)),
        "emb_ln_g": jnp.ones((H,), jnp.float32),
        "emb_ln_b": jnp.zeros((H,), jnp.float32),
        "mlm_w": normal(next(keys), (H, H)).astype(jnp.bfloat16),
        "mlm_b": jnp.zeros((H,), jnp.float32),
        "mlm_ln_g": jnp.ones((H,), jnp.float32),
        "mlm_ln_b": jnp.zeros((H,), jnp.float32),
        "decoder_wt": dec_wt.astype(jnp.bfloat16),              # (H, V_pad) bf16
        "decoder_b": jnp.zeros((V_pad,), jnp.float32),
        "layers": [],
    }
    for _ in range(cfg["layers"]):
        layer = {
            # Stacked QKV projection weight (3, H, H): [q, k, v].
            "wqkv": normal(next(keys), (3, H, H)).astype(jnp.bfloat16),
            "bqkv": jnp.zeros((3, H), jnp.float32),
            "wo": normal(next(keys), (H, H)).astype(jnp.bfloat16),
            "bo": jnp.zeros((H,), jnp.float32),
            "ln1_g": jnp.ones((H,), jnp.float32), "ln1_b": jnp.zeros((H,), jnp.float32),
            "wi": normal(next(keys), (H, I)).astype(jnp.bfloat16),
            "bi": jnp.zeros((I,), jnp.float32),
            "wo2": normal(next(keys), (I, H)).astype(jnp.bfloat16),
            "bo2": jnp.zeros((H,), jnp.float32),
            "ln2_g": jnp.ones((H,), jnp.float32), "ln2_b": jnp.zeros((H,), jnp.float32),
        }
        params["layers"].append(layer)
    return params


# ----------------------------------------------------------------------------
# Forward pass (= BertForMaskedLM(...).logits)
# ----------------------------------------------------------------------------
def bert_forward(params, input_ids, attention_mask, cfg):
    B, S = input_ids.shape
    H, nH, V = cfg["hidden"], cfg["heads"], cfg["vocab"]
    Dh = H // nH
    M = B * S

    # Embedding gathers stay in plain JAX (no clean Pallas gather); the
    # word+pos+type add and LayerNorm are fused in one Pallas kernel.
    we = params["word_emb"][input_ids]                       # (B, S, H) f32
    pe = params["pos_emb"][:S]                               # (S, H)
    # TODO(synk): token_type_ids hard-coded to segment 0 (single-segment use).
    te = params["type_emb"][0]                               # (H,)
    x = embed_layer_norm(we, pe, te, params["emb_ln_g"], params["emb_ln_b"])
    x = x.reshape(M, H)                                      # bf16

    # Additive attention-mask bias, HF-style (kept f32 through softmax).
    mask_bias = ((1.0 - attention_mask.astype(jnp.float32)) * -1e9).reshape(B, 1, S)

    for layer in params["layers"]:
        # --- self-attention: stacked QKV projection, no plain-JAX slices ---
        qkv = qkv_projection(x, layer["wqkv"], layer["bqkv"])          # (3, M, H) bf16
        ctx = multi_head_attention(qkv.reshape(3, B, S, H), mask_bias, nH, Dh)
        # attention-output projection fused with residual add + LayerNorm
        x = matmul_bias_ln(ctx.reshape(M, H), layer["wo"], layer["bo"],
                           layer["ln1_g"], layer["ln1_b"], residual=x)
        # --- feed-forward (bf16 intermediate; output matmul fused with res+LN) ---
        inter = matmul_bias(x, layer["wi"], layer["bi"], activation="gelu")
        x = matmul_bias_ln(inter, layer["wo2"], layer["bo2"],
                           layer["ln2_g"], layer["ln2_b"], residual=x)

    # --- MLM head: dense + GELU + LayerNorm fused; tied padded decoder ---
    h = matmul_bias_ln(x, params["mlm_w"], params["mlm_b"],
                       params["mlm_ln_g"], params["mlm_ln_b"], activation="gelu")
    logits = matmul_bias(h, params["decoder_wt"], params["decoder_b"],
                         out_dtype=jnp.float32)
    V_pad = params["decoder_wt"].shape[1]
    if V_pad != V:
        logits = logits[:, :V]
    return logits.reshape(B, S, V)


# ----------------------------------------------------------------------------
# Demo
# ----------------------------------------------------------------------------
if __name__ == "__main__":
    cfg = dict(vocab=256, hidden=64, heads=4, layers=2, intermediate=256, max_pos=64)
    B, S = 2, 8

    key = jax.random.PRNGKey(0)
    kp, ki = jax.random.split(key)
    params = init_params(kp, cfg)

    input_ids = jax.random.randint(ki, (B, S), 0, cfg["vocab"], dtype=jnp.int32)
    attention_mask = jnp.ones((B, S), dtype=jnp.int32).at[0, -2:].set(0)  # some padding

    fwd = jax.jit(lambda p, ids, m: bert_forward(p, ids, m, cfg))
    logits = jax.block_until_ready(fwd(params, input_ids, attention_mask))

    assert logits.shape == (B, S, cfg["vocab"])
    assert bool(jnp.all(jnp.isfinite(logits)))
    print("KERNEL_OK")
</pallas_src>

<mosaic_0001>
module attributes {stable_mosaic.version = 11 : i64} {
  func.func @_embed_ln_kernel(%arg0: i32, %arg1: memref<1x8x64xf32, #tpu.memory_space<vmem>>, %arg2: memref<8x64xf32, #tpu.memory_space<vmem>>, %arg3: memref<1x64xf32, #tpu.memory_space<vmem>>, %arg4: memref<1x64xf32, #tpu.memory_space<vmem>>, %arg5: memref<1x64xf32, #tpu.memory_space<vmem>>, %arg6: memref<1x8x64xbf16, #tpu.memory_space<vmem>>) attributes {dimension_semantics = [#tpu.dimension_semantics<parallel>], iteration_bounds = array<i64: 2>, scalar_prefetch = 0 : i64, scratch_operands = 0 : i64, tpu.core_type = #tpu.core_type<tc>, window_params = [{transform_indices = @transform_0, window_bounds = array<i64: 1, 8, 64>}, {pipeline_mode = #tpu.pipeline_mode<synchronous>, transform_indices = @transform_1, window_bounds = array<i64: 8, 64>}, {pipeline_mode = #tpu.pipeline_mode<synchronous>, transform_indices = @transform_2, window_bounds = array<i64: 1, 64>}, {pipeline_mode = #tpu.pipeline_mode<synchronous>, transform_indices = @transform_3, window_bounds = array<i64: 1, 64>}, {pipeline_mode = #tpu.pipeline_mode<synchronous>, transform_indices = @transform_4, window_bounds = array<i64: 1, 64>}, {transform_indices = @transform_5, window_bounds = array<i64: 1, 8, 64>}]} {
    %c0 = arith.constant 0 : index
    %c0_0 = arith.constant 0 : index
    %c0_1 = arith.constant 0 : index
    %0 = vector.load %arg1[%c0, %c0_0, %c0_1] : memref<1x8x64xf32, #tpu.memory_space<vmem>>, vector<1x8x64xf32>
    %1 = vector.shape_cast %0 : vector<1x8x64xf32> to vector<8x64xf32>
    %c0_2 = arith.constant 0 : index
    %c0_3 = arith.constant 0 : index
    %2 = vector.load %arg2[%c0_2, %c0_3] : memref<8x64xf32, #tpu.memory_space<vmem>>, vector<8x64xf32>
    %3 = arith.addf %1, %2 : vector<8x64xf32>
    %c0_4 = arith.constant 0 : index
    %c0_5 = arith.constant 0 : index
    %4 = vector.load %arg3[%c0_4, %c0_5] : memref<1x64xf32, #tpu.memory_space<vmem>>, vector<1x64xf32>
    %5 = vector.broadcast %4 : vector<1x64xf32> to vector<8x64xf32>
    %6 = arith.addf %3, %5 : vector<8x64xf32>
    %cst = arith.constant dense<0.000000e+00> : vector<8xf32>
    %7 = vector.multi_reduction <add>, %6, %cst [1] : vector<8x64xf32> to vector<8xf32>
    %8 = vector.shape_cast %7 : vector<8xf32> to vector<8x1xf32>
    %cst_6 = arith.constant 6.400000e+01 : f32
    %9 = vector.broadcast %cst_6 : f32 to vector<8x1xf32>
    %10 = arith.divf %8, %9 : vector<8x1xf32>
    %11 = vector.broadcast %10 : vector<8x1xf32> to vector<8x64xf32>
    %12 = arith.subf %6, %11 : vector<8x64xf32>
    %13 = arith.mulf %12, %12 : vector<8x64xf32>
    %cst_7 = arith.constant dense<0.000000e+00> : vector<8xf32>
    %14 = vector.multi_reduction <add>, %13, %cst_7 [1] : vector<8x64xf32> to vector<8xf32>
    %15 = vector.shape_cast %14 : vector<8xf32> to vector<8x1xf32>
    %cst_8 = arith.constant 6.400000e+01 : f32
    %16 = vector.broadcast %cst_8 : f32 to vector<8x1xf32>
    %17 = arith.divf %15, %16 : vector<8x1xf32>
    %cst_9 = arith.constant 9.99999996E-13 : f32
    %18 = vector.broadcast %cst_9 : f32 to vector<8x1xf32>
    %19 = arith.addf %17, %18 : vector<8x1xf32>
    %20 = math.rsqrt %19 : vector<8x1xf32>
    %21 = vector.broadcast %20 : vector<8x1xf32> to vector<8x64xf32>
    %22 = arith.mulf %12, %21 : vector<8x64xf32>
    %c0_10 = arith.constant 0 : index
    %c0_11 = arith.constant 0 : index
    %23 = vector.load %arg4[%c0_10, %c0_11] : memref<1x64xf32, #tpu.memory_space<vmem>>, vector<1x64xf32>
    %24 = vector.broadcast %23 : vector<1x64xf32> to vector<8x64xf32>
    %25 = arith.mulf %22, %24 : vector<8x64xf32>
    %c0_12 = arith.constant 0 : index
    %c0_13 = arith.constant 0 : index
    %26 = vector.load %arg5[%c0_12, %c0_13] : memref<1x64xf32, #tpu.memory_space<vmem>>, vector<1x64xf32>
    %27 = vector.broadcast %26 : vector<1x64xf32> to vector<8x64xf32>
    %28 = arith.addf %25, %27 : vector<8x64xf32>
    %29 = arith.truncf %28 : vector<8x64xf32> to vector<8x64xbf16>
    %c0_14 = arith.constant 0 : index
    %c0_15 = arith.constant 0 : index
    %c0_16 = arith.constant 0 : index
    %30 = vector.load %arg6[%c0_14, %c0_15, %c0_16] : memref<1x8x64xbf16, #tpu.memory_space<vmem>>, vector<1x8x64xbf16>
    %31 = vector.shape_cast %30 : vector<1x8x64xbf16> to vector<8x64xbf16>
    %32 = vector.shape_cast %29 : vector<8x64xbf16> to vector<1x8x64xbf16>
    tpu.vector_store %arg6[%c0_14, %c0_15, %c0_16], %32 {strides = array<i32>} : memref<1x8x64xbf16, #tpu.memory_space<vmem>>, vector<1x8x64xbf16>,
    return
  }
  func.func @transform_0(%arg0: i32) -> (i32, i32, i32) {
    %c0_i32 = arith.constant 0 : i32
    %c0_i32_0 = arith.constant 0 : i32
    %c0_i32_1 = arith.constant 0 : i32
    return %arg0, %c0_i32, %c0_i32_0 : i32, i32, i32
  }
  func.func @transform_1(%arg0: i32) -> (i32, i32) {
    %c0_i32 = arith.constant 0 : i32
    %c0_i32_0 = arith.constant 0 : i32
    %c0_i32_1 = arith.constant 0 : i32
    return %c0_i32, %c0_i32_0 : i32, i32
  }
  func.func @transform_2(%arg0: i32) -> (i32, i32) {
    %c0_i32 = arith.constant 0 : i32
    %c0_i32_0 = arith.constant 0 : i32
    %c0_i32_1 = arith.constant 0 : i32
    return %c0_i32, %c0_i32_0 : i32, i32
  }
  func.func @transform_3(%arg0: i32) -> (i32, i32) {
    %c0_i32 = arith.constant 0 : i32
    %c0_i32_0 = arith.constant 0 : i32
    %c0_i32_1 = arith.constant 0 : i32
    return %c0_i32, %c0_i32_0 : i32, i32
  }
  func.func @transform_4(%arg0: i32) -> (i32, i32) {
    %c0_i32 = arith.constant 0 : i32
    %c0_i32_0 = arith.constant 0 : i32
    %c0_i32_1 = arith.constant 0 : i32
    return %c0_i32, %c0_i32_0 : i32, i32
  }
  func.func @transform_5(%arg0: i32) -> (i32, i32, i32) {
    %c0_i32 = arith.constant 0 : i32
    %c0_i32_0 = arith.constant 0 : i32
    %c0_i32_1 = arith.constant 0 : i32
    return %arg0, %c0_i32, %c0_i32_0 : i32, i32, i32
  }
}

module attributes {stable_mosaic.version = 11 : i64} {
  func.func @_qkv_matmul_kernel(%arg0: i32, %arg1: i32, %arg2: i32, %arg3: memref<16x64xbf16, #tpu.memory_space<vmem>>, %arg4: memref<1x64x64xbf16, #tpu.memory_space<vmem>>, %arg5: memref<1x1x64xf32, #tpu.memory_space<vmem>>, %arg6: memref<1x16x64xbf16, #tpu.memory_space<vmem>>, %arg7: memref<16x64xf32, #tpu.memory_space<vmem>>) attributes {dimension_semantics = [#tpu.dimension_semantics<parallel>, #tpu.dimension_semantics<parallel>, #tpu.dimension_semantics<arbitrary>], iteration_bounds = array<i64: 3, 1, 1>, scalar_prefetch = 0 : i64, scratch_operands = 1 : i64, tpu.core_type = #tpu.core_type<tc>, window_params = [{transform_indices = @transform_0, window_bounds = array<i64: 16, 64>}, {transform_indices = @transform_1, window_bounds = array<i64: 1, 64, 64>}, {transform_indices = @transform_2, window_bounds = array<i64: 1, 1, 64>}, {transform_indices = @transform_3, window_bounds = array<i64: 1, 16, 64>}]} {
    %c0_i32 = arith.constant 0 : i32
    %0 = arith.cmpi eq, %arg2, %c0_i32 : i32
    %1 = arith.extui %0 : i1 to i32
    %c0_i32_0 = arith.constant 0 : i32
    %2 = arith.cmpi ne, %1, %c0_i32_0 : i32
    scf.if %2 {
      %cst_11 = arith.constant 0.000000e+00 : f32
      %13 = vector.broadcast %cst_11 : f32 to vector<16x64xf32>
      %c0_12 = arith.constant 0 : index
      %c0_13 = arith.constant 0 : index
      %14 = vector.load %arg7[%c0_12, %c0_13] : memref<16x64xf32, #tpu.memory_space<vmem>>, vector<16x64xf32>
      tpu.vector_store %arg7[%c0_12, %c0_13], %13 {strides = array<i32>} : memref<16x64xf32, #tpu.memory_space<vmem>>, vector<16x64xf32>,
    } else {
    }
    %c0 = arith.constant 0 : index
    %c0_1 = arith.constant 0 : index
    %3 = vector.load %arg7[%c0, %c0_1] : memref<16x64xf32, #tpu.memory_space<vmem>>, vector<16x64xf32>
    %c0_2 = arith.constant 0 : index
    %c0_3 = arith.constant 0 : index
    %4 = vector.load %arg3[%c0_2, %c0_3] : memref<16x64xbf16, #tpu.memory_space<vmem>>, vector<16x64xbf16>
    %c0_4 = arith.constant 0 : index
    %c0_5 = arith.constant 0 : index
    %c0_6 = arith.constant 0 : index
    %5 = vector.load %arg4[%c0_4, %c0_5, %c0_6] : memref<1x64x64xbf16, #tpu.memory_space<vmem>>, vector<1x64x64xbf16>
    %6 = vector.shape_cast %5 : vector<1x64x64xbf16> to vector<64x64xbf16>
    %cst = arith.constant dense<0.000000e+00> : vector<16x64xf32>
    %7 = tpu.matmul %4, %6, %cst {dimension_numbers = #tpu.dot_dimension_numbers<[1], [0], [0], [1], [0, 0, 1, 1], [], []>} : vector<16x64xbf16>, vector<64x64xbf16>, vector<16x64xf32> -> vector<16x64xf32>
    %8 = arith.addf %3, %7 : vector<16x64xf32>
    %c0_7 = arith.constant 0 : index
    %c0_8 = arith.constant 0 : index
    %9 = vector.load %arg7[%c0_7, %c0_8] : memref<16x64xf32, #tpu.memory_space<vmem>>, vector<16x64xf32>
    tpu.vector_store %arg7[%c0_7, %c0_8], %8 {strides = array<i32>} : memref<16x64xf32, #tpu.memory_space<vmem>>, vector<16x64xf32>,
    %c0_i32_9 = arith.constant 0 : i32
    %10 = arith.cmpi eq, %arg2, %c0_i32_9 : i32
    %11 = arith.extui %10 : i1 to i32
    %c0_i32_10 = arith.constant 0 : i32
    %12 = arith.cmpi ne, %11, %c0_i32_10 : i32
    scf.if %12 {
      %c0_11 = arith.constant 0 : index
      %c0_12 = arith.constant 0 : index
      %13 = vector.load %arg7[%c0_11, %c0_12] : memref<16x64xf32, #tpu.memory_space<vmem>>, vector<16x64xf32>
      %c0_13 = arith.constant 0 : index
      %c0_14 = arith.constant 0 : index
      %c0_15 = arith.constant 0 : index
      %14 = vector.load %arg5[%c0_13, %c0_14, %c0_15] : memref<1x1x64xf32, #tpu.memory_space<vmem>>, vector<1x1x64xf32>
      %15 = vector.shape_cast %14 : vector<1x1x64xf32> to vector<1x64xf32>
      %16 = vector.broadcast %15 : vector<1x64xf32> to vector<16x64xf32>
      %17 = arith.addf %13, %16 : vector<16x64xf32>
      %18 = arith.truncf %17 : vector<16x64xf32> to vector<16x64xbf16>
      %c0_16 = arith.constant 0 : index
      %c0_17 = arith.constant 0 : index
      %c0_18 = arith.constant 0 : index
      %19 = vector.load %arg6[%c0_16, %c0_17, %c0_18] : memref<1x16x64xbf16, #tpu.memory_space<vmem>>, vector<1x16x64xbf16>
      %20 = vector.shape_cast %19 : vector<1x16x64xbf16> to vector<16x64xbf16>
      %21 = vector.shape_cast %18 : vector<16x64xbf16> to vector<1x16x64xbf16>
      tpu.vector_store %arg6[%c0_16, %c0_17, %c0_18], %21 {strides = array<i32>} : memref<1x16x64xbf16, #tpu.memory_space<vmem>>, vector<1x16x64xbf16>,
    } else {
    }
    return
  }
  func.func @transform_0(%arg0: i32, %arg1: i32, %arg2: i32) -> (i32, i32) {
    %c0_i32 = arith.constant 0 : i32
    return %arg1, %arg2 : i32, i32
  }
  func.func @transform_1(%arg0: i32, %arg1: i32, %arg2: i32) -> (i32, i32, i32) {
    %c0_i32 = arith.constant 0 : i32
    %c0_i32_0 = arith.constant 0 : i32
    return %arg0, %arg2, %c0_i32 : i32, i32, i32
  }
  func.func @transform_2(%arg0: i32, %arg1: i32, %arg2: i32) -> (i32, i32, i32) {
    %c0_i32 = arith.constant 0 : i32
    %c0_i32_0 = arith.constant 0 : i32
    %c0_i32_1 = arith.constant 0 : i32
    return %arg0, %c0_i32, %c0_i32_0 : i32, i32, i32
  }
  func.func @transform_3(%arg0: i32, %arg1: i32, %arg2: i32) -> (i32, i32, i32) {
    %c0_i32 = arith.constant 0 : i32
    %c0_i32_0 = arith.constant 0 : i32
    return %arg0, %arg1, %c0_i32 : i32, i32, i32
  }
}

module attributes {stable_mosaic.version = 11 : i64} {
  func.func @_attention_kernel(%arg0: i32, %arg1: i32, %arg2: memref<1x1x8x64xbf16, #tpu.memory_space<vmem>>, %arg3: memref<1x1x8x64xbf16, #tpu.memory_space<vmem>>, %arg4: memref<1x1x8x64xbf16, #tpu.memory_space<vmem>>, %arg5: memref<1x1x8xf32, #tpu.memory_space<vmem>>, %arg6: memref<1x8x64xbf16, #tpu.memory_space<vmem>>) attributes {dimension_semantics = [#tpu.dimension_semantics<parallel>, #tpu.dimension_semantics<parallel>], iteration_bounds = array<i64: 2, 1>, scalar_prefetch = 0 : i64, scratch_operands = 0 : i64, tpu.core_type = #tpu.core_type<tc>, window_params = [{transform_indices = @transform_0, window_bounds = array<i64: 1, 1, 8, 64>}, {transform_indices = @transform_1, window_bounds = array<i64: 1, 1, 8, 64>}, {transform_indices = @transform_2, window_bounds = array<i64: 1, 1, 8, 64>}, {transform_indices = @transform_3, window_bounds = array<i64: 1, 1, 8>}, {transform_indices = @transform_4, window_bounds = array<i64: 1, 8, 64>}]} {
    %c0 = arith.constant 0 : index
    %c0_0 = arith.constant 0 : index
    %c0_1 = arith.constant 0 : index
    %c0_2 = arith.constant 0 : index
    %0 = vector.load %arg2[%c0, %c0_0, %c0_1, %c0_2] : memref<1x1x8x64xbf16, #tpu.memory_space<vmem>>, vector<1x1x8x64xbf16>
    %1 = vector.shape_cast %0 : vector<1x1x8x64xbf16> to vector<8x64xbf16>
    %c0_3 = arith.constant 0 : index
    %c0_4 = arith.constant 0 : index
    %c0_5 = arith.constant 0 : index
    %c0_6 = arith.constant 0 : index
    %2 = vector.load %arg3[%c0_3, %c0_4, %c0_5, %c0_6] : memref<1x1x8x64xbf16, #tpu.memory_space<vmem>>, vector<1x1x8x64xbf16>
    %3 = vector.shape_cast %2 : vector<1x1x8x64xbf16> to vector<8x64xbf16>
    %c0_7 = arith.constant 0 : index
    %c0_8 = arith.constant 0 : index
    %c0_9 = arith.constant 0 : index
    %c0_10 = arith.constant 0 : index
    %4 = vector.load %arg4[%c0_7, %c0_8, %c0_9, %c0_10] : memref<1x1x8x64xbf16, #tpu.memory_space<vmem>>, vector<1x1x8x64xbf16>
    %5 = vector.shape_cast %4 : vector<1x1x8x64xbf16> to vector<8x64xbf16>
    %c0_11 = arith.constant 0 : index
    %c0_12 = arith.constant 0 : index
    %c0_13 = arith.constant 0 : index
    %6 = vector.load %arg5[%c0_11, %c0_12, %c0_13] : memref<1x1x8xf32, #tpu.memory_space<vmem>>, vector<1x1x8xf32>
    %7 = vector.shape_cast %6 : vector<1x1x8xf32> to vector<1x8xf32>
    %8 = vector.extract_strided_slice %1 {offsets = [0, 0], sizes = [8, 16], strides = [1, 1]} : vector<8x64xbf16> to vector<8x16xbf16>
    %9 = vector.extract_strided_slice %3 {offsets = [0, 0], sizes = [8, 16], strides = [1, 1]} : vector<8x64xbf16> to vector<8x16xbf16>
    %10 = vector.extract_strided_slice %5 {offsets = [0, 0], sizes = [8, 16], strides = [1, 1]} : vector<8x64xbf16> to vector<8x16xbf16>
    %cst = arith.constant dense<0.000000e+00> : vector<8x8xf32>
    %11 = tpu.matmul %8, %9, %cst {dimension_numbers = #tpu.dot_dimension_numbers<[1], [1], [0], [0], [0, 0, 1, 0], [], []>} : vector<8x16xbf16>, vector<8x16xbf16>, vector<8x8xf32> -> vector<8x8xf32>
    %cst_14 = arith.constant 2.500000e-01 : f32
    %12 = vector.broadcast %cst_14 : f32 to vector<8x8xf32>
    %13 = arith.mulf %11, %12 : vector<8x8xf32>
    %14 = vector.broadcast %7 : vector<1x8xf32> to vector<8x8xf32>
    %15 = arith.addf %13, %14 : vector<8x8xf32>
    %cst_15 = arith.constant dense<0xFF800000> : vector<8xf32>
    %16 = vector.multi_reduction <maximumf>, %15, %cst_15 [1] : vector<8x8xf32> to vector<8xf32>
    %17 = vector.shape_cast %16 : vector<8xf32> to vector<8x1xf32>
    %18 = vector.broadcast %17 : vector<8x1xf32> to vector<8x8xf32>
    %19 = arith.subf %15, %18 : vector<8x8xf32>
    %20 = math.exp %19 : vector<8x8xf32>
    %cst_16 = arith.constant dense<0.000000e+00> : vector<8xf32>
    %21 = vector.multi_reduction <add>, %20, %cst_16 [1] : vector<8x8xf32> to vector<8xf32>
    %22 = vector.shape_cast %21 : vector<8xf32> to vector<8x1xf32>
    %23 = tpu.reciprocal %22 {approx = true} : vector<8x1xf32> -> vector<8x1xf32>
    %24 = vector.broadcast %23 : vector<8x1xf32> to vector<8x8xf32>
    %25 = arith.mulf %20, %24 : vector<8x8xf32>
    %26 = arith.truncf %25 : vector<8x8xf32> to vector<8x8xbf16>
    %cst_17 = arith.constant dense<0.000000e+00> : vector<8x16xf32>
    %27 = tpu.matmul %26, %10, %cst_17 {dimension_numbers = #tpu.dot_dimension_numbers<[1], [0], [0], [1], [0, 0, 1, 1], [], []>} : vector<8x8xbf16>, vector<8x16xbf16>, vector<8x16xf32> -> vector<8x16xf32>
    %28 = vector.extract_strided_slice %1 {offsets = [0, 16], sizes = [8, 16], strides = [1, 1]} : vector<8x64xbf16> to vector<8x16xbf16>
    %29 = vector.extract_strided_slice %3 {offsets = [0, 16], sizes = [8, 16], strides = [1, 1]} : vector<8x64xbf16> to vector<8x16xbf16>
    %30 = vector.extract_strided_slice %5 {offsets = [0, 16], sizes = [8, 16], strides = [1, 1]} : vector<8x64xbf16> to vector<8x16xbf16>
    %cst_18 = arith.constant dense<0.000000e+00> : vector<8x8xf32>
    %31 = tpu.matmul %28, %29, %cst_18 {dimension_numbers = #tpu.dot_dimension_numbers<[1], [1], [0], [0], [0, 0, 1, 0], [], []>} : vector<8x16xbf16>, vector<8x16xbf16>, vector<8x8xf32> -> vector<8x8xf32>
    %cst_19 = arith.constant 2.500000e-01 : f32
    %32 = vector.broadcast %cst_19 : f32 to vector<8x8xf32>
    %33 = arith.mulf %31, %32 : vector<8x8xf32>
    %34 = vector.broadcast %7 : vector<1x8xf32> to vector<8x8xf32>
    %35 = arith.addf %33, %34 : vector<8x8xf32>
    %cst_20 = arith.constant dense<0xFF800000> : vector<8xf32>
    %36 = vector.multi_reduction <maximumf>, %35, %cst_20 [1] : vector<8x8xf32> to vector<8xf32>
    %37 = vector.shape_cast %36 : vector<8xf32> to vector<8x1xf32>
    %38 = vector.broadcast %37 : vector<8x1xf32> to vector<8x8xf32>
    %39 = arith.subf %35, %38 : vector<8x8xf32>
    %40 = math.exp %39 : vector<8x8xf32>
    %cst_21 = arith.constant dense<0.000000e+00> : vector<8xf32>
    %41 = vector.multi_reduction <add>, %40, %cst_21 [1] : vector<8x8xf32> to vector<8xf32>
    %42 = vector.shape_cast %41 : vector<8xf32> to vector<8x1xf32>
    %43 = tpu.reciprocal %42 {approx = true} : vector<8x1xf32> -> vector<8x1xf32>
    %44 = vector.broadcast %43 : vector<8x1xf32> to vector<8x8xf32>
    %45 = arith.mulf %40, %44 : vector<8x8xf32>
    %46 = arith.truncf %45 : vector<8x8xf32> to vector<8x8xbf16>
    %cst_22 = arith.constant dense<0.000000e+00> : vector<8x16xf32>
    %47 = tpu.matmul %46, %30, %cst_22 {dimension_numbers = #tpu.dot_dimension_numbers<[1], [0], [0], [1], [0, 0, 1, 1], [], []>} : vector<8x8xbf16>, vector<8x16xbf16>, vector<8x16xf32> -> vector<8x16xf32>
    %48 = vector.extract_strided_slice %1 {offsets = [0, 32], sizes = [8, 16], strides = [1, 1]} : vector<8x64xbf16> to vector<8x16xbf16>
    %49 = vector.extract_strided_slice %3 {offsets = [0, 32], sizes = [8, 16], strides = [1, 1]} : vector<8x64xbf16> to vector<8x16xbf16>
    %50 = vector.extract_strided_slice %5 {offsets = [0, 32], sizes = [8, 16], strides = [1, 1]} : vector<8x64xbf16> to vector<8x16xbf16>
    %cst_23 = arith.constant dense<0.000000e+00> : vector<8x8xf32>
    %51 = tpu.matmul %48, %49, %cst_23 {dimension_numbers = #tpu.dot_dimension_numbers<[1], [1], [0], [0], [0, 0, 1, 0], [], []>} : vector<8x16xbf16>, vector<8x16xbf16>, vector<8x8xf32> -> vector<8x8xf32>
    %cst_24 = arith.constant 2.500000e-01 : f32
    %52 = vector.broadcast %cst_24 : f32 to vector<8x8xf32>
    %53 = arith.mulf %51, %52 : vector<8x8xf32>
    %54 = vector.broadcast %7 : vector<1x8xf32> to vector<8x8xf32>
    %55 = arith.addf %53, %54 : vector<8x8xf32>
    %cst_25 = arith.constant dense<0xFF800000> : vector<8xf32>
    %56 = vector.multi_reduction <maximumf>, %55, %cst_25 [1] : vector<8x8xf32> to vector<8xf32>
    %57 = vector.shape_cast %56 : vector<8xf32> to vector<8x1xf32>
    %58 = vector.broadcast %57 : vector<8x1xf32> to vector<8x8xf32>
    %59 = arith.subf %55, %58 : vector<8x8xf32>
    %60 = math.exp %59 : vector<8x8xf32>
    %cst_26 = arith.constant dense<0.000000e+00> : vector<8xf32>
    %61 = vector.multi_reduction <add>, %60, %cst_26 [1] : vector<8x8xf32> to vector<8xf32>
    %62 = vector.shape_cast %61 : vector<8xf32> to vector<8x1xf32>
    %63 = tpu.reciprocal %62 {approx = true} : vector<8x1xf32> -> vector<8x1xf32>
    %64 = vector.broadcast %63 : vector<8x1xf32> to vector<8x8xf32>
    %65 = arith.mulf %60, %64 : vector<8x8xf32>
    %66 = arith.truncf %65 : vector<8x8xf32> to vector<8x8xbf16>
    %cst_27 = arith.constant dense<0.000000e+00> : vector<8x16xf32>
    %67 = tpu.matmul %66, %50, %cst_27 {dimension_numbers = #tpu.dot_dimension_numbers<[1], [0], [0], [1], [0, 0, 1, 1], [], []>} : vector<8x8xbf16>, vector<8x16xbf16>, vector<8x16xf32> -> vector<8x16xf32>
    %68 = vector.extract_strided_slice %1 {offsets = [0, 48], sizes = [8, 16], strides = [1, 1]} : vector<8x64xbf16> to vector<8x16xbf16>
    %69 = vector.extract_strided_slice %3 {offsets = [0, 48], sizes = [8, 16], strides = [1, 1]} : vector<8x64xbf16> to vector<8x16xbf16>
    %70 = vector.extract_strided_slice %5 {offsets = [0, 48], sizes = [8, 16], strides = [1, 1]} : vector<8x64xbf16> to vector<8x16xbf16>
    %cst_28 = arith.constant dense<0.000000e+00> : vector<8x8xf32>
    %71 = tpu.matmul %68, %69, %cst_28 {dimension_numbers = #tpu.dot_dimension_numbers<[1], [1], [0], [0], [0, 0, 1, 0], [], []>} : vector<8x16xbf16>, vector<8x16xbf16>, vector<8x8xf32> -> vector<8x8xf32>
    %cst_29 = arith.constant 2.500000e-01 : f32
    %72 = vector.broadcast %cst_29 : f32 to vector<8x8xf32>
    %73 = arith.mulf %71, %72 : vector<8x8xf32>
    %74 = vector.broadcast %7 : vector<1x8xf32> to vector<8x8xf32>
    %75 = arith.addf %73, %74 : vector<8x8xf32>
    %cst_30 = arith.constant dense<0xFF800000> : vector<8xf32>
    %76 = vector.multi_reduction <maximumf>, %75, %cst_30 [1] : vector<8x8xf32> to vector<8xf32>
    %77 = vector.shape_cast %76 : vector<8xf32> to vector<8x1xf32>
    %78 = vector.broadcast %77 : vector<8x1xf32> to vector<8x8xf32>
    %79 = arith.subf %75, %78 : vector<8x8xf32>
    %80 = math.exp %79 : vector<8x8xf32>
    %cst_31 = arith.constant dense<0.000000e+00> : vector<8xf32>
    %81 = vector.multi_reduction <add>, %80, %cst_31 [1] : vector<8x8xf32> to vector<8xf32>
    %82 = vector.shape_cast %81 : vector<8xf32> to vector<8x1xf32>
    %83 = tpu.reciprocal %82 {approx = true} : vector<8x1xf32> -> vector<8x1xf32>
    %84 = vector.broadcast %83 : vector<8x1xf32> to vector<8x8xf32>
    %85 = arith.mulf %80, %84 : vector<8x8xf32>
    %86 = arith.truncf %85 : vector<8x8xf32> to vector<8x8xbf16>
    %cst_32 = arith.constant dense<0.000000e+00> : vector<8x16xf32>
    %87 = tpu.matmul %86, %70, %cst_32 {dimension_numbers = #tpu.dot_dimension_numbers<[1], [0], [0], [1], [0, 0, 1, 1], [], []>} : vector<8x8xbf16>, vector<8x16xbf16>, vector<8x16xf32> -> vector<8x16xf32>
    %88 = tpu.concatenate %27, %47, %67, %87 in 1 : vector<8x16xf32>, vector<8x16xf32>, vector<8x16xf32>, vector<8x16xf32> -> vector<8x64xf32>
    %89 = arith.truncf %88 : vector<8x64xf32> to vector<8x64xbf16>
    %c0_33 = arith.constant 0 : index
    %c0_34 = arith.constant 0 : index
    %c0_35 = arith.constant 0 : index
    %90 = vector.load %arg6[%c0_33, %c0_34, %c0_35] : memref<1x8x64xbf16, #tpu.memory_space<vmem>>, vector<1x8x64xbf16>
    %91 = vector.shape_cast %90 : vector<1x8x64xbf16> to vector<8x64xbf16>
    %92 = vector.shape_cast %89 : vector<8x64xbf16> to vector<1x8x64xbf16>
    tpu.vector_store %arg6[%c0_33, %c0_34, %c0_35], %92 {strides = array<i32>} : memref<1x8x64xbf16, #tpu.memory_space<vmem>>, vector<1x8x64xbf16>,
    return
  }
  func.func @transform_0(%arg0: i32, %arg1: i32) -> (i32, i32, i32, i32) {
    %c0_i32 = arith.constant 0 : i32
    %c0_i32_0 = arith.constant 0 : i32
    %c0_i32_1 = arith.constant 0 : i32
    return %c0_i32, %arg0, %c0_i32_0, %arg1 : i32, i32, i32, i32
  }
  func.func @transform_1(%arg0: i32, %arg1: i32) -> (i32, i32, i32, i32) {
    %c1_i32 = arith.constant 1 : i32
    %c0_i32 = arith.constant 0 : i32
    %c0_i32_0 = arith.constant 0 : i32
    return %c1_i32, %arg0, %c0_i32, %arg1 : i32, i32, i32, i32
  }
  func.func @transform_2(%arg0: i32, %arg1: i32) -> (i32, i32, i32, i32) {
    %c2_i32 = arith.constant 2 : i32
    %c0_i32 = arith.constant 0 : i32
    %c0_i32_0 = arith.constant 0 : i32
    return %c2_i32, %arg0, %c0_i32, %arg1 : i32, i32, i32, i32
  }
  func.func @transform_3(%arg0: i32, %arg1: i32) -> (i32, i32, i32) {
    %c0_i32 = arith.constant 0 : i32
    %c0_i32_0 = arith.constant 0 : i32
    %c0_i32_1 = arith.constant 0 : i32
    return %arg0, %c0_i32, %c0_i32_0 : i32, i32, i32
  }
  func.func @transform_4(%arg0: i32, %arg1: i32) -> (i32, i32, i32) {
    %c0_i32 = arith.constant 0 : i32
    %c0_i32_0 = arith.constant 0 : i32
    return %arg0, %c0_i32, %arg1 : i32, i32, i32
  }
}

module attributes {stable_mosaic.version = 11 : i64} {
  func.func @_matmul_ln_kernel(%arg0: i32, %arg1: i32, %arg2: memref<16x64xbf16, #tpu.memory_space<vmem>>, %arg3: memref<64x64xbf16, #tpu.memory_space<vmem>>, %arg4: memref<1x64xf32, #tpu.memory_space<vmem>>, %arg5: memref<16x64xbf16, #tpu.memory_space<vmem>>, %arg6: memref<1x64xf32, #tpu.memory_space<vmem>>, %arg7: memref<1x64xf32, #tpu.memory_space<vmem>>, %arg8: memref<16x64xbf16, #tpu.memory_space<vmem>>, %arg9: memref<16x64xf32, #tpu.memory_space<vmem>>) attributes {dimension_semantics = [#tpu.dimension_semantics<parallel>, #tpu.dimension_semantics<arbitrary>], iteration_bounds = array<i64: 1, 1>, scalar_prefetch = 0 : i64, scratch_operands = 1 : i64, tpu.core_type = #tpu.core_type<tc>, window_params = [{transform_indices = @transform_0, window_bounds = array<i64: 16, 64>}, {transform_indices = @transform_1, window_bounds = array<i64: 64, 64>}, {pipeline_mode = #tpu.pipeline_mode<synchronous>, transform_indices = @transform_2, window_bounds = array<i64: 1, 64>}, {transform_indices = @transform_3, window_bounds = array<i64: 16, 64>}, {pipeline_mode = #tpu.pipeline_mode<synchronous>, transform_indices = @transform_4, window_bounds = array<i64: 1, 64>}, {pipeline_mode = #tpu.pipeline_mode<synchronous>, transform_indices = @transform_5, window_bounds = array<i64: 1, 64>}, {transform_indices = @transform_6, window_bounds = array<i64: 16, 64>}]} {
    %c0_i32 = arith.constant 0 : i32
    %0 = arith.cmpi eq, %arg1, %c0_i32 : i32
    %1 = arith.extui %0 : i1 to i32
    %c0_i32_0 = arith.constant 0 : i32
    %2 = arith.cmpi ne, %1, %c0_i32_0 : i32
    scf.if %2 {
      %cst_10 = arith.constant 0.000000e+00 : f32
      %12 = vector.broadcast %cst_10 : f32 to vector<16x64xf32>
      %c0_11 = arith.constant 0 : index
      %c0_12 = arith.constant 0 : index
      %13 = vector.load %arg9[%c0_11, %c0_12] : memref<16x64xf32, #tpu.memory_space<vmem>>, vector<16x64xf32>
      tpu.vector_store %arg9[%c0_11, %c0_12], %12 {strides = array<i32>} : memref<16x64xf32, #tpu.memory_space<vmem>>, vector<16x64xf32>,
    } else {
    }
    %c0 = arith.constant 0 : index
    %c0_1 = arith.constant 0 : index
    %3 = vector.load %arg9[%c0, %c0_1] : memref<16x64xf32, #tpu.memory_space<vmem>>, vector<16x64xf32>
    %c0_2 = arith.constant 0 : index
    %c0_3 = arith.constant 0 : index
    %4 = vector.load %arg2[%c0_2, %c0_3] : memref<16x64xbf16, #tpu.memory_space<vmem>>, vector<16x64xbf16>
    %c0_4 = arith.constant 0 : index
    %c0_5 = arith.constant 0 : index
    %5 = vector.load %arg3[%c0_4, %c0_5] : memref<64x64xbf16, #tpu.memory_space<vmem>>, vector<64x64xbf16>
    %cst = arith.constant dense<0.000000e+00> : vector<16x64xf32>
    %6 = tpu.matmul %4, %5, %cst {dimension_numbers = #tpu.dot_dimension_numbers<[1], [0], [0], [1], [0, 0, 1, 1], [], []>} : vector<16x64xbf16>, vector<64x64xbf16>, vector<16x64xf32> -> vector<16x64xf32>
    %7 = arith.addf %3, %6 : vector<16x64xf32>
    %c0_6 = arith.constant 0 : index
    %c0_7 = arith.constant 0 : index
    %8 = vector.load %arg9[%c0_6, %c0_7] : memref<16x64xf32, #tpu.memory_space<vmem>>, vector<16x64xf32>
    tpu.vector_store %arg9[%c0_6, %c0_7], %7 {strides = array<i32>} : memref<16x64xf32, #tpu.memory_space<vmem>>, vector<16x64xf32>,
    %c0_i32_8 = arith.constant 0 : i32
    %9 = arith.cmpi eq, %arg1, %c0_i32_8 : i32
    %10 = arith.extui %9 : i1 to i32
    %c0_i32_9 = arith.constant 0 : i32
    %11 = arith.cmpi ne, %10, %c0_i32_9 : i32
    scf.if %11 {
      %c0_10 = arith.constant 0 : index
      %c0_11 = arith.constant 0 : index
      %12 = vector.load %arg9[%c0_10, %c0_11] : memref<16x64xf32, #tpu.memory_space<vmem>>, vector<16x64xf32>
      %c0_12 = arith.constant 0 : index
      %c0_13 = arith.constant 0 : index
      %13 = vector.load %arg4[%c0_12, %c0_13] : memref<1x64xf32, #tpu.memory_space<vmem>>, vector<1x64xf32>
      %14 = vector.broadcast %13 : vector<1x64xf32> to vector<16x64xf32>
      %15 = arith.addf %12, %14 : vector<16x64xf32>
      %c0_14 = arith.constant 0 : index
      %c0_15 = arith.constant 0 : index
      %16 = vector.load %arg5[%c0_14, %c0_15] : memref<16x64xbf16, #tpu.memory_space<vmem>>, vector<16x64xbf16>
      %17 = arith.extf %16 : vector<16x64xbf16> to vector<16x64xf32>
      %18 = arith.addf %15, %17 : vector<16x64xf32>
      %cst_16 = arith.constant dense<0.000000e+00> : vector<16xf32>
      %19 = vector.multi_reduction <add>, %18, %cst_16 [1] : vector<16x64xf32> to vector<16xf32>
      %20 = vector.shape_cast %19 : vector<16xf32> to vector<16x1xf32>
      %cst_17 = arith.constant 6.400000e+01 : f32
      %21 = vector.broadcast %cst_17 : f32 to vector<16x1xf32>
      %22 = arith.divf %20, %21 : vector<16x1xf32>
      %23 = vector.broadcast %22 : vector<16x1xf32> to vector<16x64xf32>
      %24 = arith.subf %18, %23 : vector<16x64xf32>
      %25 = arith.mulf %24, %24 : vector<16x64xf32>
      %cst_18 = arith.constant dense<0.000000e+00> : vector<16xf32>
      %26 = vector.multi_reduction <add>, %25, %cst_18 [1] : vector<16x64xf32> to vector<16xf32>
      %27 = vector.shape_cast %26 : vector<16xf32> to vector<16x1xf32>
      %cst_19 = arith.constant 6.400000e+01 : f32
      %28 = vector.broadcast %cst_19 : f32 to vector<16x1xf32>
      %29 = arith.divf %27, %28 : vector<16x1xf32>
      %cst_20 = arith.constant 9.99999996E-13 : f32
      %30 = vector.broadcast %cst_20 : f32 to vector<16x1xf32>
      %31 = arith.addf %29, %30 : vector<16x1xf32>
      %32 = math.rsqrt %31 : vector<16x1xf32>
      %33 = vector.broadcast %32 : vector<16x1xf32> to vector<16x64xf32>
      %34 = arith.mulf %24, %33 : vector<16x64xf32>
      %c0_21 = arith.constant 0 : index
      %c0_22 = arith.constant 0 : index
      %35 = vector.load %arg6[%c0_21, %c0_22] : memref<1x64xf32, #tpu.memory_space<vmem>>, vector<1x64xf32>
      %36 = vector.broadcast %35 : vector<1x64xf32> to vector<16x64xf32>
      %37 = arith.mulf %34, %36 : vector<16x64xf32>
      %c0_23 = arith.constant 0 : index
      %c0_24 = arith.constant 0 : index
      %38 = vector.load %arg7[%c0_23, %c0_24] : memref<1x64xf32, #tpu.memory_space<vmem>>, vector<1x64xf32>
      %39 = vector.broadcast %38 : vector<1x64xf32> to vector<16x64xf32>
      %40 = arith.addf %37, %39 : vector<16x64xf32>
      %41 = arith.truncf %40 : vector<16x64xf32> to vector<16x64xbf16>
      %c0_25 = arith.constant 0 : index
      %c0_26 = arith.constant 0 : index
      %42 = vector.load %arg8[%c0_25, %c0_26] : memref<16x64xbf16, #tpu.memory_space<vmem>>, vector<16x64xbf16>
      tpu.vector_store %arg8[%c0_25, %c0_26], %41 {strides = array<i32>} : memref<16x64xbf16, #tpu.memory_space<vmem>>, vector<16x64xbf16>,
    } else {
    }
    return
  }
  func.func @transform_0(%arg0: i32, %arg1: i32) -> (i32, i32) {
    %c0_i32 = arith.constant 0 : i32
    return %arg0, %arg1 : i32, i32
  }
  func.func @transform_1(%arg0: i32, %arg1: i32) -> (i32, i32) {
    %c0_i32 = arith.constant 0 : i32
    %c0_i32_0 = arith.constant 0 : i32
    return %arg1, %c0_i32 : i32, i32
  }
  func.func @transform_2(%arg0: i32, %arg1: i32) -> (i32, i32) {
    %c0_i32 = arith.constant 0 : i32
    %c0_i32_0 = arith.constant 0 : i32
    %c0_i32_1 = arith.constant 0 : i32
    return %c0_i32, %c0_i32_0 : i32, i32
  }
  func.func @transform_3(%arg0: i32, %arg1: i32) -> (i32, i32) {
    %c0_i32 = arith.constant 0 : i32
    %c0_i32_0 = arith.constant 0 : i32
    return %arg0, %c0_i32 : i32, i32
  }
  func.func @transform_4(%arg0: i32, %arg1: i32) -> (i32, i32) {
    %c0_i32 = arith.constant 0 : i32
    %c0_i32_0 = arith.constant 0 : i32
    %c0_i32_1 = arith.constant 0 : i32
    return %c0_i32, %c0_i32_0 : i32, i32
  }
  func.func @transform_5(%arg0: i32, %arg1: i32) -> (i32, i32) {
    %c0_i32 = arith.constant 0 : i32
    %c0_i32_0 = arith.constant 0 : i32
    %c0_i32_1 = arith.constant 0 : i32
    return %c0_i32, %c0_i32_0 : i32, i32
  }
  func.func @transform_6(%arg0: i32, %arg1: i32) -> (i32, i32) {
    %c0_i32 = arith.constant 0 : i32
    %c0_i32_0 = arith.constant 0 : i32
    return %arg0, %c0_i32 : i32, i32
  }
}

module attributes {stable_mosaic.version = 11 : i64} {
  func.func @_matmul_bias_kernel(%arg0: i32, %arg1: i32, %arg2: i32, %arg3: memref<16x64xbf16, #tpu.memory_space<vmem>>, %arg4: memref<64x256xbf16, #tpu.memory_space<vmem>>, %arg5: memref<1x256xf32, #tpu.memory_space<vmem>>, %arg6: memref<16x256xbf16, #tpu.memory_space<vmem>>, %arg7: memref<16x256xf32, #tpu.memory_space<vmem>>) attributes {dimension_semantics = [#tpu.dimension_semantics<parallel>, #tpu.dimension_semantics<parallel>, #tpu.dimension_semantics<arbitrary>], iteration_bounds = array<i64: 1, 1, 1>, scalar_prefetch = 0 : i64, scratch_operands = 1 : i64, tpu.core_type = #tpu.core_type<tc>, window_params = [{transform_indices = @transform_0, window_bounds = array<i64: 16, 64>}, {transform_indices = @transform_1, window_bounds = array<i64: 64, 256>}, {transform_indices = @transform_2, window_bounds = array<i64: 1, 256>}, {transform_indices = @transform_3, window_bounds = array<i64: 16, 256>}]} {
    %c0_i32 = arith.constant 0 : i32
    %0 = arith.cmpi eq, %arg2, %c0_i32 : i32
    %1 = arith.extui %0 : i1 to i32
    %c0_i32_0 = arith.constant 0 : i32
    %2 = arith.cmpi ne, %1, %c0_i32_0 : i32
    scf.if %2 {
      %cst_10 = arith.constant 0.000000e+00 : f32
      %12 = vector.broadcast %cst_10 : f32 to vector<16x256xf32>
      %c0_11 = arith.constant 0 : index
      %c0_12 = arith.constant 0 : index
      %13 = vector.load %arg7[%c0_11, %c0_12] : memref<16x256xf32, #tpu.memory_space<vmem>>, vector<16x256xf32>
      tpu.vector_store %arg7[%c0_11, %c0_12], %12 {strides = array<i32>} : memref<16x256xf32, #tpu.memory_space<vmem>>, vector<16x256xf32>,
    } else {
    }
    %c0 = arith.constant 0 : index
    %c0_1 = arith.constant 0 : index
    %3 = vector.load %arg7[%c0, %c0_1] : memref<16x256xf32, #tpu.memory_space<vmem>>, vector<16x256xf32>
    %c0_2 = arith.constant 0 : index
    %c0_3 = arith.constant 0 : index
    %4 = vector.load %arg3[%c0_2, %c0_3] : memref<16x64xbf16, #tpu.memory_space<vmem>>, vector<16x64xbf16>
    %c0_4 = arith.constant 0 : index
    %c0_5 = arith.constant 0 : index
    %5 = vector.load %arg4[%c0_4, %c0_5] : memref<64x256xbf16, #tpu.memory_space<vmem>>, vector<64x256xbf16>
    %cst = arith.constant dense<0.000000e+00> : vector<16x256xf32>
    %6 = tpu.matmul %4, %5, %cst {dimension_numbers = #tpu.dot_dimension_numbers<[1], [0], [0], [1], [0, 0, 1, 1], [], []>} : vector<16x64xbf16>, vector<64x256xbf16>, vector<16x256xf32> -> vector<16x256xf32>
    %7 = arith.addf %3, %6 : vector<16x256xf32>
    %c0_6 = arith.constant 0 : index
    %c0_7 = arith.constant 0 : index
    %8 = vector.load %arg7[%c0_6, %c0_7] : memref<16x256xf32, #tpu.memory_space<vmem>>, vector<16x256xf32>
    tpu.vector_store %arg7[%c0_6, %c0_7], %7 {strides = array<i32>} : memref<16x256xf32, #tpu.memory_space<vmem>>, vector<16x256xf32>,
    %c0_i32_8 = arith.constant 0 : i32
    %9 = arith.cmpi eq, %arg2, %c0_i32_8 : i32
    %10 = arith.extui %9 : i1 to i32
    %c0_i32_9 = arith.constant 0 : i32
    %11 = arith.cmpi ne, %10, %c0_i32_9 : i32
    scf.if %11 {
      %c0_10 = arith.constant 0 : index
      %c0_11 = arith.constant 0 : index
      %12 = vector.load %arg7[%c0_10, %c0_11] : memref<16x256xf32, #tpu.memory_space<vmem>>, vector<16x256xf32>
      %c0_12 = arith.constant 0 : index
      %c0_13 = arith.constant 0 : index
      %13 = vector.load %arg5[%c0_12, %c0_13] : memref<1x256xf32, #tpu.memory_space<vmem>>, vector<1x256xf32>
      %14 = vector.broadcast %13 : vector<1x256xf32> to vector<16x256xf32>
      %15 = arith.addf %12, %14 : vector<16x256xf32>
      %cst_14 = arith.constant 5.000000e-01 : f32
      %16 = vector.broadcast %cst_14 : f32 to vector<16x256xf32>
      %17 = arith.mulf %16, %15 : vector<16x256xf32>
      %cst_15 = arith.constant 4.471500e-02 : f32
      %18 = vector.broadcast %cst_15 : f32 to vector<16x256xf32>
      %19 = arith.mulf %18, %15 : vector<16x256xf32>
      %20 = arith.mulf %19, %15 : vector<16x256xf32>
      %21 = arith.mulf %20, %15 : vector<16x256xf32>
      %22 = arith.addf %15, %21 : vector<16x256xf32>
      %cst_16 = arith.constant 0.797884583 : f32
      %23 = vector.broadcast %cst_16 : f32 to vector<16x256xf32>
      %24 = arith.mulf %23, %22 : vector<16x256xf32>
      %25 = math.tanh %24 : vector<16x256xf32>
      %cst_17 = arith.constant 1.000000e+00 : f32
      %26 = vector.broadcast %cst_17 : f32 to vector<16x256xf32>
      %27 = arith.addf %26, %25 : vector<16x256xf32>
      %28 = arith.mulf %17, %27 : vector<16x256xf32>
      %29 = arith.truncf %28 : vector<16x256xf32> to vector<16x256xbf16>
      %c0_18 = arith.constant 0 : index
      %c0_19 = arith.constant 0 : index
      %30 = vector.load %arg6[%c0_18, %c0_19] : memref<16x256xbf16, #tpu.memory_space<vmem>>, vector<16x256xbf16>
      tpu.vector_store %arg6[%c0_18, %c0_19], %29 {strides = array<i32>} : memref<16x256xbf16, #tpu.memory_space<vmem>>, vector<16x256xbf16>,
    } else {
    }
    return
  }
  func.func @transform_0(%arg0: i32, %arg1: i32, %arg2: i32) -> (i32, i32) {
    %c0_i32 = arith.constant 0 : i32
    return %arg0, %arg2 : i32, i32
  }
  func.func @transform_1(%arg0: i32, %arg1: i32, %arg2: i32) -> (i32, i32) {
    %c0_i32 = arith.constant 0 : i32
    return %arg2, %arg1 : i32, i32
  }
  func.func @transform_2(%arg0: i32, %arg1: i32, %arg2: i32) -> (i32, i32) {
    %c0_i32 = arith.constant 0 : i32
    %c0_i32_0 = arith.constant 0 : i32
    return %c0_i32, %arg1 : i32, i32
  }
  func.func @transform_3(%arg0: i32, %arg1: i32, %arg2: i32) -> (i32, i32) {
    %c0_i32 = arith.constant 0 : i32
    return %arg0, %arg1 : i32, i32
  }
}

module attributes {stable_mosaic.version = 11 : i64} {
  func.func @_matmul_ln_kernel(%arg0: i32, %arg1: i32, %arg2: memref<16x256xbf16, #tpu.memory_space<vmem>>, %arg3: memref<256x64xbf16, #tpu.memory_space<vmem>>, %arg4: memref<1x64xf32, #tpu.memory_space<vmem>>, %arg5: memref<16x64xbf16, #tpu.memory_space<vmem>>, %arg6: memref<1x64xf32, #tpu.memory_space<vmem>>, %arg7: memref<1x64xf32, #tpu.memory_space<vmem>>, %arg8: memref<16x64xbf16, #tpu.memory_space<vmem>>, %arg9: memref<16x64xf32, #tpu.memory_space<vmem>>) attributes {dimension_semantics = [#tpu.dimension_semantics<parallel>, #tpu.dimension_semantics<arbitrary>], iteration_bounds = array<i64: 1, 1>, scalar_prefetch = 0 : i64, scratch_operands = 1 : i64, tpu.core_type = #tpu.core_type<tc>, window_params = [{transform_indices = @transform_0, window_bounds = array<i64: 16, 256>}, {transform_indices = @transform_1, window_bounds = array<i64: 256, 64>}, {pipeline_mode = #tpu.pipeline_mode<synchronous>, transform_indices = @transform_2, window_bounds = array<i64: 1, 64>}, {transform_indices = @transform_3, window_bounds = array<i64: 16, 64>}, {pipeline_mode = #tpu.pipeline_mode<synchronous>, transform_indices = @transform_4, window_bounds = array<i64: 1, 64>}, {pipeline_mode = #tpu.pipeline_mode<synchronous>, transform_indices = @transform_5, window_bounds = array<i64: 1, 64>}, {transform_indices = @transform_6, window_bounds = array<i64: 16, 64>}]} {
    %c0_i32 = arith.constant 0 : i32
    %0 = arith.cmpi eq, %arg1, %c0_i32 : i32
    %1 = arith.extui %0 : i1 to i32
    %c0_i32_0 = arith.constant 0 : i32
    %2 = arith.cmpi ne, %1, %c0_i32_0 : i32
    scf.if %2 {
      %cst_10 = arith.constant 0.000000e+00 : f32
      %12 = vector.broadcast %cst_10 : f32 to vector<16x64xf32>
      %c0_11 = arith.constant 0 : index
      %c0_12 = arith.constant 0 : index
      %13 = vector.load %arg9[%c0_11, %c0_12] : memref<16x64xf32, #tpu.memory_space<vmem>>, vector<16x64xf32>
      tpu.vector_store %arg9[%c0_11, %c0_12], %12 {strides = array<i32>} : memref<16x64xf32, #tpu.memory_space<vmem>>, vector<16x64xf32>,
    } else {
    }
    %c0 = arith.constant 0 : index
    %c0_1 = arith.constant 0 : index
    %3 = vector.load %arg9[%c0, %c0_1] : memref<16x64xf32, #tpu.memory_space<vmem>>, vector<16x64xf32>
    %c0_2 = arith.constant 0 : index
    %c0_3 = arith.constant 0 : index
    %4 = vector.load %arg2[%c0_2, %c0_3] : memref<16x256xbf16, #tpu.memory_space<vmem>>, vector<16x256xbf16>
    %c0_4 = arith.constant 0 : index
    %c0_5 = arith.constant 0 : index
    %5 = vector.load %arg3[%c0_4, %c0_5] : memref<256x64xbf16, #tpu.memory_space<vmem>>, vector<256x64xbf16>
    %cst = arith.constant dense<0.000000e+00> : vector<16x64xf32>
    %6 = tpu.matmul %4, %5, %cst {dimension_numbers = #tpu.dot_dimension_numbers<[1], [0], [0], [1], [0, 0, 1, 1], [], []>} : vector<16x256xbf16>, vector<256x64xbf16>, vector<16x64xf32> -> vector<16x64xf32>
    %7 = arith.addf %3, %6 : vector<16x64xf32>
    %c0_6 = arith.constant 0 : index
    %c0_7 = arith.constant 0 : index
    %8 = vector.load %arg9[%c0_6, %c0_7] : memref<16x64xf32, #tpu.memory_space<vmem>>, vector<16x64xf32>
    tpu.vector_store %arg9[%c0_6, %c0_7], %7 {strides = array<i32>} : memref<16x64xf32, #tpu.memory_space<vmem>>, vector<16x64xf32>,
    %c0_i32_8 = arith.constant 0 : i32
    %9 = arith.cmpi eq, %arg1, %c0_i32_8 : i32
    %10 = arith.extui %9 : i1 to i32
    %c0_i32_9 = arith.constant 0 : i32
    %11 = arith.cmpi ne, %10, %c0_i32_9 : i32
    scf.if %11 {
      %c0_10 = arith.constant 0 : index
      %c0_11 = arith.constant 0 : index
      %12 = vector.load %arg9[%c0_10, %c0_11] : memref<16x64xf32, #tpu.memory_space<vmem>>, vector<16x64xf32>
      %c0_12 = arith.constant 0 : index
      %c0_13 = arith.constant 0 : index
      %13 = vector.load %arg4[%c0_12, %c0_13] : memref<1x64xf32, #tpu.memory_space<vmem>>, vector<1x64xf32>
      %14 = vector.broadcast %13 : vector<1x64xf32> to vector<16x64xf32>
      %15 = arith.addf %12, %14 : vector<16x64xf32>
      %c0_14 = arith.constant 0 : index
      %c0_15 = arith.constant 0 : index
      %16 = vector.load %arg5[%c0_14, %c0_15] : memref<16x64xbf16, #tpu.memory_space<vmem>>, vector<16x64xbf16>
      %17 = arith.extf %16 : vector<16x64xbf16> to vector<16x64xf32>
      %18 = arith.addf %15, %17 : vector<16x64xf32>
      %cst_16 = arith.constant dense<0.000000e+00> : vector<16xf32>
      %19 = vector.multi_reduction <add>, %18, %cst_16 [1] : vector<16x64xf32> to vector<16xf32>
      %20 = vector.shape_cast %19 : vector<16xf32> to vector<16x1xf32>
      %cst_17 = arith.constant 6.400000e+01 : f32
      %21 = vector.broadcast %cst_17 : f32 to vector<16x1xf32>
      %22 = arith.divf %20, %21 : vector<16x1xf32>
      %23 = vector.broadcast %22 : vector<16x1xf32> to vector<16x64xf32>
      %24 = arith.subf %18, %23 : vector<16x64xf32>
      %25 = arith.mulf %24, %24 : vector<16x64xf32>
      %cst_18 = arith.constant dense<0.000000e+00> : vector<16xf32>
      %26 = vector.multi_reduction <add>, %25, %cst_18 [1] : vector<16x64xf32> to vector<16xf32>
      %27 = vector.shape_cast %26 : vector<16xf32> to vector<16x1xf32>
      %cst_19 = arith.constant 6.400000e+01 : f32
      %28 = vector.broadcast %cst_19 : f32 to vector<16x1xf32>
      %29 = arith.divf %27, %28 : vector<16x1xf32>
      %cst_20 = arith.constant 9.99999996E-13 : f32
      %30 = vector.broadcast %cst_20 : f32 to vector<16x1xf32>
      %31 = arith.addf %29, %30 : vector<16x1xf32>
      %32 = math.rsqrt %31 : vector<16x1xf32>
      %33 = vector.broadcast %32 : vector<16x1xf32> to vector<16x64xf32>
      %34 = arith.mulf %24, %33 : vector<16x64xf32>
      %c0_21 = arith.constant 0 : index
      %c0_22 = arith.constant 0 : index
      %35 = vector.load %arg6[%c0_21, %c0_22] : memref<1x64xf32, #tpu.memory_space<vmem>>, vector<1x64xf32>
      %36 = vector.broadcast %35 : vector<1x64xf32> to vector<16x64xf32>
      %37 = arith.mulf %34, %36 : vector<16x64xf32>
      %c0_23 = arith.constant 0 : index
      %c0_24 = arith.constant 0 : index
      %38 = vector.load %arg7[%c0_23, %c0_24] : memref<1x64xf32, #tpu.memory_space<vmem>>, vector<1x64xf32>
      %39 = vector.broadcast %38 : vector<1x64xf32> to vector<16x64xf32>
      %40 = arith.addf %37, %39 : vector<16x64xf32>
      %41 = arith.truncf %40 : vector<16x64xf32> to vector<16x64xbf16>
      %c0_25 = arith.constant 0 : index
      %c0_26 = arith.constant 0 : index
      %42 = vector.load %arg8[%c0_25, %c0_26] : memref<16x64xbf16, #tpu.memory_space<vmem>>, vector<16x64xbf16>
      tpu.vector_store %arg8[%c0_25, %c0_26], %41 {strides = array<i32>} : memref<16x64xbf16, #tpu.memory_space<vmem>>, vector<16x64xbf16>,
    } else {
    }
    return
  }
  func.func @transform_0(%arg0: i32, %arg1: i32) -> (i32, i32) {
    %c0_i32 = arith.constant 0 : i32
    return %arg0, %arg1 : i32, i32
  }
  func.func @transform_1(%arg0: i32, %arg1: i32) -> (i32, i32) {
    %c0_i32 = arith.constant 0 : i32
    %c0_i32_0 = arith.constant 0 : i32
    return %arg1, %c0_i32 : i32, i32
  }
  func.func @transform_2(%arg0: i32, %arg1: i32) -> (i32, i32) {
    %c0_i32 = arith.constant 0 : i32
    %c0_i32_0 = arith.constant 0 : i32
    %c0_i32_1 = arith.constant 0 : i32
    return %c0_i32, %c0_i32_0 : i32, i32
  }
  func.func @transform_3(%arg0: i32, %arg1: i32) -> (i32, i32) {
    %c0_i32 = arith.constant 0 : i32
    %c0_i32_0 = arith.constant 0 : i32
    return %arg0, %c0_i32 : i32, i32
  }
  func.func @transform_4(%arg0: i32, %arg1: i32) -> (i32, i32) {
    %c0_i32 = arith.constant 0 : i32
    %c0_i32_0 = arith.constant 0 : i32
    %c0_i32_1 = arith.constant 0 : i32
    return %c0_i32, %c0_i32_0 : i32, i32
  }
  func.func @transform_5(%arg0: i32, %arg1: i32) -> (i32, i32) {
    %c0_i32 = arith.constant 0 : i32
    %c0_i32_0 = arith.constant 0 : i32
    %c0_i32_1 = arith.constant 0 : i32
    return %c0_i32, %c0_i32_0 : i32, i32
  }
  func.func @transform_6(%arg0: i32, %arg1: i32) -> (i32, i32) {
    %c0_i32 = arith.constant 0 : i32
    %c0_i32_0 = arith.constant 0 : i32
    return %arg0, %c0_i32 : i32, i32
  }
}

module attributes {stable_mosaic.version = 11 : i64} {
  func.func @_matmul_ln_kernel(%arg0: i32, %arg1: i32, %arg2: memref<16x64xbf16, #tpu.memory_space<vmem>>, %arg3: memref<64x64xbf16, #tpu.memory_space<vmem>>, %arg4: memref<1x64xf32, #tpu.memory_space<vmem>>, %arg5: memref<1x64xf32, #tpu.memory_space<vmem>>, %arg6: memref<1x64xf32, #tpu.memory_space<vmem>>, %arg7: memref<16x64xbf16, #tpu.memory_space<vmem>>, %arg8: memref<16x64xf32, #tpu.memory_space<vmem>>) attributes {dimension_semantics = [#tpu.dimension_semantics<parallel>, #tpu.dimension_semantics<arbitrary>], iteration_bounds = array<i64: 1, 1>, scalar_prefetch = 0 : i64, scratch_operands = 1 : i64, tpu.core_type = #tpu.core_type<tc>, window_params = [{transform_indices = @transform_0, window_bounds = array<i64: 16, 64>}, {transform_indices = @transform_1, window_bounds = array<i64: 64, 64>}, {pipeline_mode = #tpu.pipeline_mode<synchronous>, transform_indices = @transform_2, window_bounds = array<i64: 1, 64>}, {pipeline_mode = #tpu.pipeline_mode<synchronous>, transform_indices = @transform_3, window_bounds = array<i64: 1, 64>}, {pipeline_mode = #tpu.pipeline_mode<synchronous>, transform_indices = @transform_4, window_bounds = array<i64: 1, 64>}, {transform_indices = @transform_5, window_bounds = array<i64: 16, 64>}]} {
    %c0_i32 = arith.constant 0 : i32
    %0 = arith.cmpi eq, %arg1, %c0_i32 : i32
    %1 = arith.extui %0 : i1 to i32
    %c0_i32_0 = arith.constant 0 : i32
    %2 = arith.cmpi ne, %1, %c0_i32_0 : i32
    scf.if %2 {
      %cst_10 = arith.constant 0.000000e+00 : f32
      %12 = vector.broadcast %cst_10 : f32 to vector<16x64xf32>
      %c0_11 = arith.constant 0 : index
      %c0_12 = arith.constant 0 : index
      %13 = vector.load %arg8[%c0_11, %c0_12] : memref<16x64xf32, #tpu.memory_space<vmem>>, vector<16x64xf32>
      tpu.vector_store %arg8[%c0_11, %c0_12], %12 {strides = array<i32>} : memref<16x64xf32, #tpu.memory_space<vmem>>, vector<16x64xf32>,
    } else {
    }
    %c0 = arith.constant 0 : index
    %c0_1 = arith.constant 0 : index
    %3 = vector.load %arg8[%c0, %c0_1] : memref<16x64xf32, #tpu.memory_space<vmem>>, vector<16x64xf32>
    %c0_2 = arith.constant 0 : index
    %c0_3 = arith.constant 0 : index
    %4 = vector.load %arg2[%c0_2, %c0_3] : memref<16x64xbf16, #tpu.memory_space<vmem>>, vector<16x64xbf16>
    %c0_4 = arith.constant 0 : index
    %c0_5 = arith.constant 0 : index
    %5 = vector.load %arg3[%c0_4, %c0_5] : memref<64x64xbf16, #tpu.memory_space<vmem>>, vector<64x64xbf16>
    %cst = arith.constant dense<0.000000e+00> : vector<16x64xf32>
    %6 = tpu.matmul %4, %5, %cst {dimension_numbers = #tpu.dot_dimension_numbers<[1], [0], [0], [1], [0, 0, 1, 1], [], []>} : vector<16x64xbf16>, vector<64x64xbf16>, vector<16x64xf32> -> vector<16x64xf32>
    %7 = arith.addf %3, %6 : vector<16x64xf32>
    %c0_6 = arith.constant 0 : index
    %c0_7 = arith.constant 0 : index
    %8 = vector.load %arg8[%c0_6, %c0_7] : memref<16x64xf32, #tpu.memory_space<vmem>>, vector<16x64xf32>
    tpu.vector_store %arg8[%c0_6, %c0_7], %7 {strides = array<i32>} : memref<16x64xf32, #tpu.memory_space<vmem>>, vector<16x64xf32>,
    %c0_i32_8 = arith.constant 0 : i32
    %9 = arith.cmpi eq, %arg1, %c0_i32_8 : i32
    %10 = arith.extui %9 : i1 to i32
    %c0_i32_9 = arith.constant 0 : i32
    %11 = arith.cmpi ne, %10, %c0_i32_9 : i32
    scf.if %11 {
      %c0_10 = arith.constant 0 : index
      %c0_11 = arith.constant 0 : index
      %12 = vector.load %arg8[%c0_10, %c0_11] : memref<16x64xf32, #tpu.memory_space<vmem>>, vector<16x64xf32>
      %c0_12 = arith.constant 0 : index
      %c0_13 = arith.constant 0 : index
      %13 = vector.load %arg4[%c0_12, %c0_13] : memref<1x64xf32, #tpu.memory_space<vmem>>, vector<1x64xf32>
      %14 = vector.broadcast %13 : vector<1x64xf32> to vector<16x64xf32>
      %15 = arith.addf %12, %14 : vector<16x64xf32>
      %cst_14 = arith.constant 5.000000e-01 : f32
      %16 = vector.broadcast %cst_14 : f32 to vector<16x64xf32>
      %17 = arith.mulf %16, %15 : vector<16x64xf32>
      %cst_15 = arith.constant 4.471500e-02 : f32
      %18 = vector.broadcast %cst_15 : f32 to vector<16x64xf32>
      %19 = arith.mulf %18, %15 : vector<16x64xf32>
      %20 = arith.mulf %19, %15 : vector<16x64xf32>
      %21 = arith.mulf %20, %15 : vector<16x64xf32>
      %22 = arith.addf %15, %21 : vector<16x64xf32>
      %cst_16 = arith.constant 0.797884583 : f32
      %23 = vector.broadcast %cst_16 : f32 to vector<16x64xf32>
      %24 = arith.mulf %23, %22 : vector<16x64xf32>
      %25 = math.tanh %24 : vector<16x64xf32>
      %cst_17 = arith.constant 1.000000e+00 : f32
      %26 = vector.broadcast %cst_17 : f32 to vector<16x64xf32>
      %27 = arith.addf %26, %25 : vector<16x64xf32>
      %28 = arith.mulf %17, %27 : vector<16x64xf32>
      %cst_18 = arith.constant dense<0.000000e+00> : vector<16xf32>
      %29 = vector.multi_reduction <add>, %28, %cst_18 [1] : vector<16x64xf32> to vector<16xf32>
      %30 = vector.shape_cast %29 : vector<16xf32> to vector<16x1xf32>
      %cst_19 = arith.constant 6.400000e+01 : f32
      %31 = vector.broadcast %cst_19 : f32 to vector<16x1xf32>
      %32 = arith.divf %30, %31 : vector<16x1xf32>
      %33 = vector.broadcast %32 : vector<16x1xf32> to vector<16x64xf32>
      %34 = arith.subf %28, %33 : vector<16x64xf32>
      %35 = arith.mulf %34, %34 : vector<16x64xf32>
      %cst_20 = arith.constant dense<0.000000e+00> : vector<16xf32>
      %36 = vector.multi_reduction <add>, %35, %cst_20 [1] : vector<16x64xf32> to vector<16xf32>
      %37 = vector.shape_cast %36 : vector<16xf32> to vector<16x1xf32>
      %cst_21 = arith.constant 6.400000e+01 : f32
      %38 = vector.broadcast %cst_21 : f32 to vector<16x1xf32>
      %39 = arith.divf %37, %38 : vector<16x1xf32>
      %cst_22 = arith.constant 9.99999996E-13 : f32
      %40 = vector.broadcast %cst_22 : f32 to vector<16x1xf32>
      %41 = arith.addf %39, %40 : vector<16x1xf32>
      %42 = math.rsqrt %41 : vector<16x1xf32>
      %43 = vector.broadcast %42 : vector<16x1xf32> to vector<16x64xf32>
      %44 = arith.mulf %34, %43 : vector<16x64xf32>
      %c0_23 = arith.constant 0 : index
      %c0_24 = arith.constant 0 : index
      %45 = vector.load %arg5[%c0_23, %c0_24] : memref<1x64xf32, #tpu.memory_space<vmem>>, vector<1x64xf32>
      %46 = vector.broadcast %45 : vector<1x64xf32> to vector<16x64xf32>
      %47 = arith.mulf %44, %46 : vector<16x64xf32>
      %c0_25 = arith.constant 0 : index
      %c0_26 = arith.constant 0 : index
      %48 = vector.load %arg6[%c0_25, %c0_26] : memref<1x64xf32, #tpu.memory_space<vmem>>, vector<1x64xf32>
      %49 = vector.broadcast %48 : vector<1x64xf32> to vector<16x64xf32>
      %50 = arith.addf %47, %49 : vector<16x64xf32>
      %51 = arith.truncf %50 : vector<16x64xf32> to vector<16x64xbf16>
      %c0_27 = arith.constant 0 : index
      %c0_28 = arith.constant 0 : index
      %52 = vector.load %arg7[%c0_27, %c0_28] : memref<16x64xbf16, #tpu.memory_space<vmem>>, vector<16x64xbf16>
      tpu.vector_store %arg7[%c0_27, %c0_28], %51 {strides = array<i32>} : memref<16x64xbf16, #tpu.memory_space<vmem>>, vector<16x64xbf16>,
    } else {
    }
    return
  }
  func.func @transform_0(%arg0: i32, %arg1: i32) -> (i32, i32) {
    %c0_i32 = arith.constant 0 : i32
    return %arg0, %arg1 : i32, i32
  }
  func.func @transform_1(%arg0: i32, %arg1: i32) -> (i32, i32) {
    %c0_i32 = arith.constant 0 : i32
    %c0_i32_0 = arith.constant 0 : i32
    return %arg1, %c0_i32 : i32, i32
  }
  func.func @transform_2(%arg0: i32, %arg1: i32) -> (i32, i32) {
    %c0_i32 = arith.constant 0 : i32
    %c0_i32_0 = arith.constant 0 : i32
    %c0_i32_1 = arith.constant 0 : i32
    return %c0_i32, %c0_i32_0 : i32, i32
  }
  func.func @transform_3(%arg0: i32, %arg1: i32) -> (i32, i32) {
    %c0_i32 = arith.constant 0 : i32
    %c0_i32_0 = arith.constant 0 : i32
    %c0_i32_1 = arith.constant 0 : i32
    return %c0_i32, %c0_i32_0 : i32, i32
  }
  func.func @transform_4(%arg0: i32, %arg1: i32) -> (i32, i32) {
    %c0_i32 = arith.constant 0 : i32
    %c0_i32_0 = arith.constant 0 : i32
    %c0_i32_1 = arith.constant 0 : i32
    return %c0_i32, %c0_i32_0 : i32, i32
  }
  func.func @transform_5(%arg0: i32, %arg1: i32) -> (i32, i32) {
    %c0_i32 = arith.constant 0 : i32
    %c0_i32_0 = arith.constant 0 : i32
    return %arg0, %c0_i32 : i32, i32
  }
}

module attributes {stable_mosaic.version = 11 : i64} {
  func.func @_matmul_bias_kernel(%arg0: i32, %arg1: i32, %arg2: i32, %arg3: memref<16x64xbf16, #tpu.memory_space<vmem>>, %arg4: memref<64x256xbf16, #tpu.memory_space<vmem>>, %arg5: memref<1x256xf32, #tpu.memory_space<vmem>>, %arg6: memref<16x256xf32, #tpu.memory_space<vmem>>, %arg7: memref<16x256xf32, #tpu.memory_space<vmem>>) attributes {dimension_semantics = [#tpu.dimension_semantics<parallel>, #tpu.dimension_semantics<parallel>, #tpu.dimension_semantics<arbitrary>], iteration_bounds = array<i64: 1, 1, 1>, scalar_prefetch = 0 : i64, scratch_operands = 1 : i64, tpu.core_type = #tpu.core_type<tc>, window_params = [{transform_indices = @transform_0, window_bounds = array<i64: 16, 64>}, {transform_indices = @transform_1, window_bounds = array<i64: 64, 256>}, {transform_indices = @transform_2, window_bounds = array<i64: 1, 256>}, {transform_indices = @transform_3, window_bounds = array<i64: 16, 256>}]} {
    %c0_i32 = arith.constant 0 : i32
    %0 = arith.cmpi eq, %arg2, %c0_i32 : i32
    %1 = arith.extui %0 : i1 to i32
    %c0_i32_0 = arith.constant 0 : i32
    %2 = arith.cmpi ne, %1, %c0_i32_0 : i32
    scf.if %2 {
      %cst_10 = arith.constant 0.000000e+00 : f32
      %12 = vector.broadcast %cst_10 : f32 to vector<16x256xf32>
      %c0_11 = arith.constant 0 : index
      %c0_12 = arith.constant 0 : index
      %13 = vector.load %arg7[%c0_11, %c0_12] : memref<16x256xf32, #tpu.memory_space<vmem>>, vector<16x256xf32>
      tpu.vector_store %arg7[%c0_11, %c0_12], %12 {strides = array<i32>} : memref<16x256xf32, #tpu.memory_space<vmem>>, vector<16x256xf32>,
    } else {
    }
    %c0 = arith.constant 0 : index
    %c0_1 = arith.constant 0 : index
    %3 = vector.load %arg7[%c0, %c0_1] : memref<16x256xf32, #tpu.memory_space<vmem>>, vector<16x256xf32>
    %c0_2 = arith.constant 0 : index
    %c0_3 = arith.constant 0 : index
    %4 = vector.load %arg3[%c0_2, %c0_3] : memref<16x64xbf16, #tpu.memory_space<vmem>>, vector<16x64xbf16>
    %c0_4 = arith.constant 0 : index
    %c0_5 = arith.constant 0 : index
    %5 = vector.load %arg4[%c0_4, %c0_5] : memref<64x256xbf16, #tpu.memory_space<vmem>>, vector<64x256xbf16>
    %cst = arith.constant dense<0.000000e+00> : vector<16x256xf32>
    %6 = tpu.matmul %4, %5, %cst {dimension_numbers = #tpu.dot_dimension_numbers<[1], [0], [0], [1], [0, 0, 1, 1], [], []>} : vector<16x64xbf16>, vector<64x256xbf16>, vector<16x256xf32> -> vector<16x256xf32>
    %7 = arith.addf %3, %6 : vector<16x256xf32>
    %c0_6 = arith.constant 0 : index
    %c0_7 = arith.constant 0 : index
    %8 = vector.load %arg7[%c0_6, %c0_7] : memref<16x256xf32, #tpu.memory_space<vmem>>, vector<16x256xf32>
    tpu.vector_store %arg7[%c0_6, %c0_7], %7 {strides = array<i32>} : memref<16x256xf32, #tpu.memory_space<vmem>>, vector<16x256xf32>,
    %c0_i32_8 = arith.constant 0 : i32
    %9 = arith.cmpi eq, %arg2, %c0_i32_8 : i32
    %10 = arith.extui %9 : i1 to i32
    %c0_i32_9 = arith.constant 0 : i32
    %11 = arith.cmpi ne, %10, %c0_i32_9 : i32
    scf.if %11 {
      %c0_10 = arith.constant 0 : index
      %c0_11 = arith.constant 0 : index
      %12 = vector.load %arg7[%c0_10, %c0_11] : memref<16x256xf32, #tpu.memory_space<vmem>>, vector<16x256xf32>
      %c0_12 = arith.constant 0 : index
      %c0_13 = arith.constant 0 : index
      %13 = vector.load %arg5[%c0_12, %c0_13] : memref<1x256xf32, #tpu.memory_space<vmem>>, vector<1x256xf32>
      %14 = vector.broadcast %13 : vector<1x256xf32> to vector<16x256xf32>
      %15 = arith.addf %12, %14 : vector<16x256xf32>
      %c0_14 = arith.constant 0 : index
      %c0_15 = arith.constant 0 : index
      %16 = vector.load %arg6[%c0_14, %c0_15] : memref<16x256xf32, #tpu.memory_space<vmem>>, vector<16x256xf32>
      tpu.vector_store %arg6[%c0_14, %c0_15], %15 {strides = array<i32>} : memref<16x256xf32, #tpu.memory_space<vmem>>, vector<16x256xf32>,
    } else {
    }
    return
  }
  func.func @transform_0(%arg0: i32, %arg1: i32, %arg2: i32) -> (i32, i32) {
    %c0_i32 = arith.constant 0 : i32
    return %arg0, %arg2 : i32, i32
  }
  func.func @transform_1(%arg0: i32, %arg1: i32, %arg2: i32) -> (i32, i32) {
    %c0_i32 = arith.constant 0 : i32
    return %arg2, %arg1 : i32, i32
  }
  func.func @transform_2(%arg0: i32, %arg1: i32, %arg2: i32) -> (i32, i32) {
    %c0_i32 = arith.constant 0 : i32
    %c0_i32_0 = arith.constant 0 : i32
    return %c0_i32, %arg1 : i32, i32
  }
  func.func @transform_3(%arg0: i32, %arg1: i32, %arg2: i32) -> (i32, i32) {
    %c0_i32 = arith.constant 0 : i32
    return %arg0, %arg1 : i32, i32
  }
}

</mosaic_0001>

<llo_original>
// kernel: _lambda_.13
$region0: #{_lambda_.13}
  #allocation0 [shape = 'u32[]', space=smem, size = 0x4, offset = 0x4, fixed_abs, tag = 'smem constant byte address 0x4 - core index']
  #allocation1 [shape = 'u32[144,128]{1,0:T(1,128)}', space=vmem, size = 0x12000, scoped, tag = 'internal scratch']
  %s0 = inlined_call_operand.hbm [shape: f32[2,8,64], index: 0, kind: input, shape index: {}]
  %s1 = inlined_call_operand.hbm [shape: f32[8,64], index: 1, kind: input, shape index: {}]
  %s2 = inlined_call_operand.hbm [shape: f32[1,64], index: 2, kind: input, shape index: {}]
  %s3 = inlined_call_operand.hbm [shape: f32[1,64], index: 3, kind: input, shape index: {}]
  %s4 = inlined_call_operand.hbm [shape: f32[1,64], index: 4, kind: input, shape index: {}]
  %s5 = inlined_call_operand.hbm [shape: bf16[2,8,64], index: 5, kind: output, shape index: {}]
  %s6 = sld [smem:[#allocation0]]
  $region73: #{_lambda_.13} parent=0
    _
  %s8 = ssub.s32 1, %s6
  %s9 = scalar_select 0, %s8, %s6
  $region1: #{_lambda_.13} parent=0
    #allocation2 [shape = 'u8[8192]{0}', space=vmem, size = 0x2000, scoped, tag = 'input window, operand 0']
    #allocation3 [shape = 's32[2]{0}', space=sflag, size = 0x8, scoped, tag = 'scoped memory for _lambda_.13']
    #allocation4 [shape = 's32[2]{0}', space=sflag, size = 0x8, scoped, tag = 'scoped memory for _lambda_.13']
    #allocation5 [shape = 'u8[4096]{0}', space=vmem, size = 0x1000, scoped, tag = 'input window, operand 1, single buffered']
    #allocation6 [shape = 's32[1]{0}', space=sflag, size = 0x4, scoped, tag = 'scoped memory for _lambda_.13']
    #allocation7 [shape = 'u8[512]{0}', space=vmem, size = 0x400, scoped, tag = 'input window, operand 2, single buffered']
    #allocation8 [shape = 'u8[512]{0}', space=vmem, size = 0x400, scoped, tag = 'input window, operand 3, single buffered']
    #allocation9 [shape = 's32[1]{0}', space=sflag, size = 0x4, scoped, tag = 'scoped memory for _lambda_.13']
    #allocation10 [shape = 'u8[512]{0}', space=vmem, size = 0x400, scoped, tag = 'input window, operand 4, single buffered']
    #allocation11 [shape = 'u8[4096]{0}', space=vmem, size = 0x1000, scoped, tag = 'output window, operand 0']
    %10 = vsyncpa [#allocation3], 0
    %s11 = scalar_lea.sflag [#allocation3], 1
    %12 = vsyncpa %s11, 0
    %13 = vsyncpa [#allocation6], 0
    %14 = vsyncpa [#allocation9], 0
    %15 = vsyncpa [#allocation4], 0
    %s16 = scalar_lea.sflag [#allocation4], 1
    %17 = vsyncpa %s16, 0
    loop: start=0, step=1, limit=4
    $region2: #{_lambda_.13} parent=1 // loop_pre_header
      _
    $region3: #{_lambda_.13} parent=1 // loop_header
      %s19 = sphi 0, %s23
      %p20 = scmp.ge.s32.totalorder %s19, 4
      %s29 = sphi 0, %s31
      %s32 = sphi 0, %s29
      %s33 = sphi 0, %s32
      %s49 = sphi 0, %s33
      %s53 = sphi 0, %s53
      %s55 = sphi 0, %s53
      %s56 = sphi 0, %s55
      %s70 = sphi 0, %s56
      %s74 = sphi 0, %s74
      %s76 = sphi 0, %s74
      %s77 = sphi 0, %s76
      %s91 = sphi 0, %s77
      %s95 = sphi 0, %s95
      %s97 = sphi 0, %s95
      %s98 = sphi 0, %s97
      %s112 = sphi 0, %s98
      %s116 = sphi 0, %s116
      %s118 = sphi 0, %s116
      %s119 = sphi 0, %s118
      %s133 = sphi 0, %s119
      %s139 = sphi 0, %s141
      %s142 = sphi 0, %s139
      %s143 = sphi 0, %s142
      %s159 = sphi 0, %s143
    $region4: #{_lambda_.13} parent=1 // loop_header_branch
      %22 = sbr.rel (%p20) target = $region8
    $region5: #{_lambda_.13} parent=1 // loop_body
      %s24 = ssub.s32 %s19, 1
      %s25 = ssub.s32 %s19, 2
      %s26 = sadd.s32 %s19, 1
      %s27 = ssub.s32 %s19, %s26
      %p28 = scmp.eq.s32.totalorder %s27, 0
      %s30 = sadd.s32 %s29, 1
      %s31 = scalar_select %p28, %s29, %s30
      %p34 = pneg %p28
      %p35 = scmp.eq.s32.totalorder %s19, 1
      %p36 = por %p34, %p35
      %p37 = scmp.ne.s32.totalorder %s29, %s32
      %p38 = scmp.eq.s32.totalorder %s19, 0
      %p39 = por %p37, %p38
      %p40 = scmp.ne.s32.totalorder %s29, %s32
      %p41 = scmp.eq.s32.totalorder %s24, 1
      %p42 = por %p40, %p41
      %p43 = scmp.ne.s32.totalorder %s32, %s33
      %p44 = scmp.eq.s32.totalorder %s24, 0
      %p45 = por %p43, %p44
      %p46 = scmp.ne.s32.totalorder %s32, %s33
      %p47 = scmp.eq.s32.totalorder %s25, 1
      %p48 = por %p46, %p47
      %p50 = scmp.ne.s32.totalorder %s33, %s49
      %p51 = scmp.eq.s32.totalorder %s25, 0
      %p52 = por %p50, %p51
      %s54 = sadd.s32 %s53, 1
      %p57 = scmp.eq.s32.totalorder %s19, 1
      %p58 = scmp.ne.s32.totalorder %s53, %s55
      %p59 = scmp.eq.s32.totalorder %s19, 0
      %p60 = por %p58, %p59
      %p61 = scmp.ne.s32.totalorder %s53, %s55
      %p62 = scmp.eq.s32.totalorder %s24, 1
      %p63 = por %p61, %p62
      %p64 = scmp.ne.s32.totalorder %s55, %s56
      %p65 = scmp.eq.s32.totalorder %s24, 0
      %p66 = por %p64, %p65
      %p67 = scmp.ne.s32.totalorder %s55, %s56
      %p68 = scmp.eq.s32.totalorder %s25, 1
      %p69 = por %p67, %p68
      %p71 = scmp.ne.s32.totalorder %s56, %s70
      %p72 = scmp.eq.s32.totalorder %s25, 0
      %p73 = por %p71, %p72
      %s75 = sadd.s32 %s74, 1
      %p78 = scmp.eq.s32.totalorder %s19, 1
      %p79 = scmp.ne.s32.totalorder %s74, %s76
      %p80 = scmp.eq.s32.totalorder %s19, 0
      %p81 = por %p79, %p80
      %p82 = scmp.ne.s32.totalorder %s74, %s76
      %p83 = scmp.eq.s32.totalorder %s24, 1
      %p84 = por %p82, %p83
      %p85 = scmp.ne.s32.totalorder %s76, %s77
      %p86 = scmp.eq.s32.totalorder %s24, 0
      %p87 = por %p85, %p86
      %p88 = scmp.ne.s32.totalorder %s76, %s77
      %p89 = scmp.eq.s32.totalorder %s25, 1
      %p90 = por %p88, %p89
      %p92 = scmp.ne.s32.totalorder %s77, %s91
      %p93 = scmp.eq.s32.totalorder %s25, 0
      %p94 = por %p92, %p93
      %s96 = sadd.s32 %s95, 1
      %p99 = scmp.eq.s32.totalorder %s19, 1
      %p100 = scmp.ne.s32.totalorder %s95, %s97
      %p101 = scmp.eq.s32.totalorder %s19, 0
      %p102 = por %p100, %p101
      %p103 = scmp.ne.s32.totalorder %s95, %s97
      %p104 = scmp.eq.s32.totalorder %s24, 1
      %p105 = por %p103, %p104
      %p106 = scmp.ne.s32.totalorder %s97, %s98
      %p107 = scmp.eq.s32.totalorder %s24, 0
      %p108 = por %p106, %p107
      %p109 = scmp.ne.s32.totalorder %s97, %s98
      %p110 = scmp.eq.s32.totalorder %s25, 1
      %p111 = por %p109, %p110
      %p113 = scmp.ne.s32.totalorder %s98, %s112
      %p114 = scmp.eq.s32.totalorder %s25, 0
      %p115 = por %p113, %p114
      %s117 = sadd.s32 %s116, 1
      %p120 = scmp.eq.s32.totalorder %s19, 1
      %p121 = scmp.ne.s32.totalorder %s116, %s118
      %p122 = scmp.eq.s32.totalorder %s19, 0
      %p123 = por %p121, %p122
      %p124 = scmp.ne.s32.totalorder %s116, %s118
      %p125 = scmp.eq.s32.totalorder %s24, 1
      %p126 = por %p124, %p125
      %p127 = scmp.ne.s32.totalorder %s118, %s119
      %p128 = scmp.eq.s32.totalorder %s24, 0
      %p129 = por %p127, %p128
      %p130 = scmp.ne.s32.totalorder %s118, %s119
      %p131 = scmp.eq.s32.totalorder %s25, 1
      %p132 = por %p130, %p131
      %p134 = scmp.ne.s32.totalorder %s119, %s133
      %p135 = scmp.eq.s32.totalorder %s25, 0
      %p136 = por %p134, %p135
      %s137 = ssub.s32 %s19, %s26
      %p138 = scmp.eq.s32.totalorder %s137, 0
      %s140 = sadd.s32 %s139, 1
      %s141 = scalar_select %p138, %s139, %s140
      %p144 = pneg %p138
      %p145 = scmp.eq.s32.totalorder %s19, 1
      %p146 = por %p144, %p145
      %p147 = scmp.ne.s32.totalorder %s139, %s142
      %p148 = scmp.eq.s32.totalorder %s19, 0
      %p149 = por %p147, %p148
      %p150 = scmp.ne.s32.totalorder %s139, %s142
      %p151 = scmp.eq.s32.totalorder %s24, 1
      %p152 = por %p150, %p151
      %p153 = scmp.ne.s32.totalorder %s142, %s143
      %p154 = scmp.eq.s32.totalorder %s24, 0
      %p155 = por %p153, %p154
      %p156 = scmp.ne.s32.totalorder %s142, %s143
      %p157 = scmp.eq.s32.totalorder %s25, 1
      %p158 = por %p156, %p157
      %p160 = scmp.ne.s32.totalorder %s143, %s159
      %p161 = scmp.eq.s32.totalorder %s25, 0
      %p162 = por %p160, %p161
      %p163 = scmp.le.s32.totalorder 1, %s19
      %p164 = scmp.lt.s32.totalorder %s19, 3
      %p165 = pnand %p163, %p164
      %p166 = pneg %p165
      // Predicated region
      $region9: #{_lambda_.13} parent=5 // pred_check
        _
      $region10: #{_lambda_.13} parent=5 // pred_check_branch
        %168 = sbr.rel (%p165) target = $region12
      $region11: #{_lambda_.13} parent=5 // pred_region
        %s169 = ssub.s32 %s19, 1
        // Predicated region
        $region13: #{_lambda_.13} parent=11 // pred_check
          %p170 = pneg %p66
        $region14: #{_lambda_.13} parent=11 // pred_check_branch
          %172 = sbr.rel (%p170) target = $region16
        $region15: #{_lambda_.13} parent=11 // pred_region
          %s174 = ssub.s32 128, 128
          %175 = vsyncadd [#allocation6], %s174
          %s177 = sshll.u32 [#allocation5], 4
          %s178 = int_to_ptr.vmem [resolvable:$true] %s177
          %180 = dma.hbm_to_vmem [thread:$0]  %s1, 128, %s178, [#allocation6]
        $region16: #{_lambda_.13} parent=11 // pred_fallthru
          _
        // Predicated region
        $region17: #{_lambda_.13} parent=11 // pred_check
          %p181 = pneg %p87
        $region18: #{_lambda_.13} parent=11 // pred_check_branch
          %183 = sbr.rel (%p181) target = $region20
        $region19: #{_lambda_.13} parent=11 // pred_region
          %s185 = ssub.s32 16, 16
          %186 = vsyncadd [#allocation6], %s185
          %s188 = sshll.u32 [#allocation7], 4
          %s189 = int_to_ptr.vmem [resolvable:$true] %s188
          %191 = dma.hbm_to_vmem [thread:$0]  %s2, 16, %s189, [#allocation6]
        $region20: #{_lambda_.13} parent=11 // pred_fallthru
          _
        // Predicated region
        $region21: #{_lambda_.13} parent=11 // pred_check
          %p192 = pneg %p108
        $region22: #{_lambda_.13} parent=11 // pred_check_branch
          %194 = sbr.rel (%p192) target = $region24
        $region23: #{_lambda_.13} parent=11 // pred_region
          %s196 = ssub.s32 16, 16
          %197 = vsyncadd [#allocation9], %s196
          %s199 = sshll.u32 [#allocation8], 4
          %s200 = int_to_ptr.vmem [resolvable:$true] %s199
          %202 = dma.hbm_to_vmem [thread:$0]  %s3, 16, %s200, [#allocation9]
        $region24: #{_lambda_.13} parent=11 // pred_fallthru
          _
        // Predicated region
        $region25: #{_lambda_.13} parent=11 // pred_check
          %p203 = pneg %p129
        $region26: #{_lambda_.13} parent=11 // pred_check_branch
          %205 = sbr.rel (%p203) target = $region28
        $region27: #{_lambda_.13} parent=11 // pred_region
          %s207 = ssub.s32 16, 16
          %208 = vsyncadd [#allocation9], %s207
          %s210 = sshll.u32 [#allocation10], 4
          %s211 = int_to_ptr.vmem [resolvable:$true] %s210
          %213 = dma.hbm_to_vmem [thread:$0]  %s4, 16, %s211, [#allocation9]
        $region28: #{_lambda_.13} parent=11 // pred_fallthru
          _
      $region12: #{_lambda_.13} parent=5 // pred_fallthru
        _
      %p214 = scmp.lt.s32.totalorder %s19, 2
      // Predicated region
      $region29: #{_lambda_.13} parent=5 // pred_check
        %p215 = pneg %p214
      $region30: #{_lambda_.13} parent=5 // pred_check_branch
        %217 = sbr.rel (%p215) target = $region32
      $region31: #{_lambda_.13} parent=5 // pred_region
        // Predicated region
        $region33: #{_lambda_.13} parent=31 // pred_check
          %p218 = pneg %p39
        $region34: #{_lambda_.13} parent=31 // pred_check_branch
          %220 = sbr.rel (%p218) target = $region36
        $region35: #{_lambda_.13} parent=31 // pred_region
          %s221 = sand.u32 %s29, 1
          %s222 = scalar_lea.sflag [#allocation3], %s221
          %s223 = sand.u32 %s29, 1
          %s224 = smul.addr %s223, 8
          %s225 = scalar_lea.vmem [#allocation2], %s224
          %s227 = ssub.s32 128, 128
          %228 = vsyncadd %s222, %s227
          %s229 = smul.addr %s19, 128
          %s230 = scalar_lea.hbm %s0, %s229
          %s232 = sshll.u32 %s225, 4
          %s233 = int_to_ptr.vmem [resolvable:$true] %s232
          %235 = dma.hbm_to_vmem [thread:$0]  %s230, 128, %s233, %s222
        $region36: #{_lambda_.13} parent=31 // pred_fallthru
          _
      $region32: #{_lambda_.13} parent=5 // pred_fallthru
        _
      %p236 = scmp.le.s32.totalorder 1, %s19
      %p237 = scmp.lt.s32.totalorder %s19, 3
      %p238 = pnand %p236, %p237
      %p239 = pneg %p238
      // Predicated region
      $region37: #{_lambda_.13} parent=5 // pred_check
        _
      $region38: #{_lambda_.13} parent=5 // pred_check_branch
        %241 = sbr.rel (%p238) target = $region40
      $region39: #{_lambda_.13} parent=5 // pred_region
        %s242 = ssub.s32 %s19, 1
        %s243 = sand.u32 %s32, 1
        %s244 = scalar_lea.sflag [#allocation3], %s243
        %s245 = sand.u32 %s32, 1
        %s246 = smul.addr %s245, 8
        %s247 = scalar_lea.vmem [#allocation2], %s246
        // Predicated region
        $region41: #{_lambda_.13} parent=39 // pred_check
          %p248 = pneg %p45
        $region42: #{_lambda_.13} parent=39 // pred_check_branch
          %250 = sbr.rel (%p248) target = $region44
        $region43: #{_lambda_.13} parent=39 // pred_region
          %251 = dma.done %s244, 128
        $region44: #{_lambda_.13} parent=39 // pred_fallthru
          _
        // Predicated region
        $region45: #{_lambda_.13} parent=39 // pred_check
          %p252 = pneg %p66
        $region46: #{_lambda_.13} parent=39 // pred_check_branch
          %254 = sbr.rel (%p252) target = $region48
        $region47: #{_lambda_.13} parent=39 // pred_region
          %255 = dma.done [#allocation6], 128
        $region48: #{_lambda_.13} parent=39 // pred_fallthru
          _
        // Predicated region
        $region49: #{_lambda_.13} parent=39 // pred_check
          %p256 = pneg %p87
        $region50: #{_lambda_.13} parent=39 // pred_check_branch
          %258 = sbr.rel (%p256) target = $region52
        $region51: #{_lambda_.13} parent=39 // pred_region
          %259 = dma.done [#allocation6], 16
        $region52: #{_lambda_.13} parent=39 // pred_fallthru
          _
        // Predicated region
        $region53: #{_lambda_.13} parent=39 // pred_check
          %p260 = pneg %p108
        $region54: #{_lambda_.13} parent=39 // pred_check_branch
          %262 = sbr.rel (%p260) target = $region56
        $region55: #{_lambda_.13} parent=39 // pred_region
          %263 = dma.done [#allocation9], 16
        $region56: #{_lambda_.13} parent=39 // pred_fallthru
          _
        // Predicated region
        $region57: #{_lambda_.13} parent=39 // pred_check
          %p264 = pneg %p129
        $region58: #{_lambda_.13} parent=39 // pred_check_branch
          %266 = sbr.rel (%p264) target = $region60
        $region59: #{_lambda_.13} parent=39 // pred_region
          %267 = dma.done [#allocation9], 16
        $region60: #{_lambda_.13} parent=39 // pred_fallthru
          _
        %s268 = sand.u32 %s32, 1
        %s269 = scalar_lea.sflag [#allocation3], %s268
        %s270 = sand.u32 %s32, 1
        %s271 = smul.addr %s270, 8
        %s272 = scalar_lea.vmem [#allocation2], %s271
        %p273 = pneg %p45
        %p274 = pneg %p42
        %p275 = pneg %p66
        %p276 = pneg %p63
        %p277 = pneg %p87
        %p278 = pneg %p84
        %p279 = pneg %p108
        %p280 = pneg %p105
        %p281 = pneg %p129
        %p282 = pneg %p126
        %p283 = pneg %p155
        %p284 = pneg %p152
        %s285 = sand.u32 %s142, 1
        %s286 = scalar_lea.sflag [#allocation4], %s285
        %s287 = sand.u32 %s142, 1
        %s288 = smul.addr %s287, 4
        %s289 = scalar_lea.vmem [#allocation11], %s288
        %v290 = vld [vmem:[%s247] sm:$0xff]
        %v291 = vld [vmem:[#allocation5] sm:$0xff]
        %v292 = vadd.f32 %v290, %v291
        %v293 = vld [vmem:[#allocation7] sm:$0x1]
        %v295 = vlaneseq
        %v296 = vshrl.u32 %v295, 7
        %v297 = vsub.s32 0, %v296
        %v298 = vrot.slane %v293, %v297
        %v300 = vadd.f32 %v292, %v298
        %vm301 = vcmask 523264
        %v302 = vsel %vm301, %v300, 0.0
        %303 = vadd.xlane.f32.xlu0 %v302
        %v304 = vpop.xlane.xlu0 %303
        %v305 = vrcp.pop 64.0
        %v306 = vmul.f32 %v304, %v305
        %v307 = vsub.f32 %v300, %v306
        %v308 = vmul.f32 %v307, %v307
        %v309 = vsel %vm301, %v308, 0.0
        %310 = vadd.xlane.f32.xlu0 %v309
        %v311 = vpop.xlane.xlu0 %310
        %v312 = vmul.f32 %v311, %v305
        %v313 = vadd.f32 %v312, 1e-12
        %v314 = vrsqrt.pop %v313
        %v315 = vmul.f32 %v307, %v314
        %v316 = vld [vmem:[#allocation8] sm:$0x1]
        %v318 = vlaneseq
        %v319 = vshrl.u32 %v318, 7
        %v320 = vsub.s32 0, %v319
        %v321 = vrot.slane %v316, %v320
        %v323 = vmul.f32 %v315, %v321
        %v324 = vld [vmem:[#allocation10] sm:$0x1]
        %v326 = vlaneseq
        %v327 = vshrl.u32 %v326, 7
        %v328 = vsub.s32 0, %v327
        %v329 = vrot.slane %v324, %v328
        %v331 = vadd.f32 %v323, %v329
        %v332 = vpack.c.bf16 %v331, %v331
        %vm333 = vcmask 519168
        %334 = vst.msk [vmem:[%s289] sm:$0xf] %vm333, %v332
        %s335 = sand.u32 %s142, 1
        %s336 = scalar_lea.sflag [#allocation4], %s335
        %s337 = sand.u32 %s142, 1
        %s338 = smul.addr %s337, 4
        %s339 = scalar_lea.vmem [#allocation11], %s338
        // Predicated region
        $region61: #{_lambda_.13} parent=39 // pred_check
          %p340 = pneg %p152
        $region62: #{_lambda_.13} parent=39 // pred_check_branch
          %342 = sbr.rel (%p340) target = $region64
        $region63: #{_lambda_.13} parent=39 // pred_region
          %s344 = ssub.s32 64, 64
          %345 = vsyncadd %s336, %s344
          %s346 = smul.addr %s24, 64
          %s347 = scalar_lea.hbm %s5, %s346
          %s349 = sshll.u32 %s339, 4
          %s350 = int_to_ptr.vmem [resolvable:$true] %s349
          %352 = dma.vmem_to_hbm [thread:$0]  %s350, 64, %s347, %s336
        $region64: #{_lambda_.13} parent=39 // pred_fallthru
          _
      $region40: #{_lambda_.13} parent=5 // pred_fallthru
        _
      %p353 = scmp.le.s32.totalorder 2, %s19
      // Predicated region
      $region65: #{_lambda_.13} parent=5 // pred_check
        %p354 = pneg %p353
      $region66: #{_lambda_.13} parent=5 // pred_check_branch
        %356 = sbr.rel (%p354) target = $region68
      $region67: #{_lambda_.13} parent=5 // pred_region
        %s357 = ssub.s32 %s19, 2
        // Predicated region
        $region69: #{_lambda_.13} parent=67 // pred_check
          %p358 = pneg %p158
        $region70: #{_lambda_.13} parent=67 // pred_check_branch
          %360 = sbr.rel (%p358) target = $region72
        $region71: #{_lambda_.13} parent=67 // pred_region
          %s361 = sand.u32 %s143, 1
          %s362 = scalar_lea.sflag [#allocation4], %s361
          %s363 = sand.u32 %s143, 1
          %s364 = smul.addr %s363, 4
          %s365 = scalar_lea.vmem [#allocation11], %s364
          %366 = dma.done %s362, 64
        $region72: #{_lambda_.13} parent=67 // pred_fallthru
          _
      $region68: #{_lambda_.13} parent=5 // pred_fallthru
        _
    $region6: #{_lambda_.13} parent=1 // loop_footer
      %s23 = sadd.s32 1, %s19
    $region7: #{_lambda_.13} parent=1 // loop_footer_branch
      %18 = sbr.rel target = $region3
    $region8: #{_lambda_.13} parent=1 // loop_exit
      _
    %367 = vsyncpa [#allocation3], 1
    %s368 = scalar_lea.sflag [#allocation3], 1
    %369 = vsyncpa %s368, 1
    %370 = vsyncpa [#allocation6], 1
    %371 = vsyncpa [#allocation9], 1
    %372 = vsyncpa [#allocation4], 1
    %s373 = scalar_lea.sflag [#allocation4], 1
    %374 = vsyncpa %s373, 1

// kernel: _lambda_.16
$region0: #{_lambda_.16}
  #allocation0 [shape = 'u32[]', space=smem, size = 0x4, offset = 0x4, fixed_abs, tag = 'smem constant byte address 0x4 - core index']
  #allocation1 [shape = 'u32[144,128]{1,0:T(1,128)}', space=vmem, size = 0x12000, scoped, tag = 'internal scratch']
  #allocation2 [shape = 'f32[16,64]{1,0:T(8,128)}', space=vmem, size = 0x2000, scoped, tag = 'scratch operand']
  %s0 = inlined_call_operand.hbm [shape: bf16[16,64], index: 0, kind: input, shape index: {}]
  %s1 = inlined_call_operand.hbm [shape: bf16[64,64], index: 1, kind: input, shape index: {}]
  %s2 = inlined_call_operand.hbm [shape: f32[1,64], index: 2, kind: input, shape index: {}]
  %s3 = inlined_call_operand.hbm [shape: bf16[16,64], index: 3, kind: input, shape index: {}]
  %s4 = inlined_call_operand.hbm [shape: f32[1,64], index: 4, kind: input, shape index: {}]
  %s5 = inlined_call_operand.hbm [shape: f32[1,64], index: 5, kind: input, shape index: {}]
  %s6 = inlined_call_operand.hbm [shape: bf16[16,64], index: 6, kind: output, shape index: {}]
  %s7 = sld [smem:[#allocation0]]
  $region66: #{_lambda_.16} parent=0
    _
  %s9 = ssub.s32 1, %s7
  %s10 = scalar_select 0, %s9, %s7
  $region1: #{_lambda_.16} parent=0
    #allocation3 [shape = 'u8[4096]{0}', space=vmem, size = 0x1000, scoped, tag = 'input window, operand 0, single buffered']
    #allocation4 [shape = 's32[1]{0}', space=sflag, size = 0x4, scoped, tag = 'scoped memory for _lambda_.16']
    #allocation5 [shape = 's32[1]{0}', space=sflag, size = 0x4, scoped, tag = 'scoped memory for _lambda_.16']
    #allocation6 [shape = 'u8[16384]{0}', space=vmem, size = 0x4000, scoped, tag = 'input window, operand 1, single buffered']
    #allocation7 [shape = 's32[1]{0}', space=sflag, size = 0x4, scoped, tag = 'scoped memory for _lambda_.16']
    #allocation8 [shape = 'u8[512]{0}', space=vmem, size = 0x400, scoped, tag = 'input window, operand 2, single buffered']
    #allocation9 [shape = 'u8[4096]{0}', space=vmem, size = 0x1000, scoped, tag = 'input window, operand 3, single buffered']
    #allocation10 [shape = 's32[1]{0}', space=sflag, size = 0x4, scoped, tag = 'scoped memory for _lambda_.16']
    #allocation11 [shape = 'u8[512]{0}', space=vmem, size = 0x400, scoped, tag = 'input window, operand 4, single buffered']
    #allocation12 [shape = 'u8[512]{0}', space=vmem, size = 0x400, scoped, tag = 'input window, operand 5, single buffered']
    #allocation13 [shape = 's32[1]{0}', space=sflag, size = 0x4, scoped, tag = 'scoped memory for _lambda_.16']
    #allocation14 [shape = 'u8[4096]{0}', space=vmem, size = 0x1000, scoped, tag = 'output window, operand 0, single buffered']
    %11 = vsyncpa [#allocation4], 0
    %12 = vsyncpa [#allocation7], 0
    %13 = vsyncpa [#allocation10], 0
    %14 = vsyncpa [#allocation13], 0
    %15 = vsyncpa [#allocation5], 0
    // Predicated region
    $region2: #{_lambda_.16} parent=1 // pred_check
      _
    $region3: #{_lambda_.16} parent=1 // pred_check_branch
      %17 = sbr.rel (0) target = $region5
    $region4: #{_lambda_.16} parent=1 // pred_region
      %s19 = ssub.s32 128, 128
      %20 = vsyncadd [#allocation4], %s19
      %s21 = sshll.u32 [#allocation3], 4
      %s22 = int_to_ptr.vmem [resolvable:$true] %s21
      %27 = dma.hbm_to_vmem [thread:$0]  %s0, 128, %s22, [#allocation4], 64, 64, 4
    $region5: #{_lambda_.16} parent=1 // pred_fallthru
      _
    // Predicated region
    $region6: #{_lambda_.16} parent=1 // pred_check
      _
    $region7: #{_lambda_.16} parent=1 // pred_check_branch
      %29 = sbr.rel (0) target = $region9
    $region8: #{_lambda_.16} parent=1 // pred_region
      %s31 = ssub.s32 512, 512
      %32 = vsyncadd [#allocation7], %s31
      %s33 = sshll.u32 [#allocation6], 4
      %s34 = int_to_ptr.vmem [resolvable:$true] %s33
      %39 = dma.hbm_to_vmem [thread:$0]  %s1, 512, %s34, [#allocation7], 64, 64, 4
    $region9: #{_lambda_.16} parent=1 // pred_fallthru
      _
    // Predicated region
    $region10: #{_lambda_.16} parent=1 // pred_check
      _
    $region11: #{_lambda_.16} parent=1 // pred_check_branch
      %41 = sbr.rel (0) target = $region13
    $region12: #{_lambda_.16} parent=1 // pred_region
      %s43 = ssub.s32 16, 16
      %44 = vsyncadd [#allocation7], %s43
      %s46 = sshll.u32 [#allocation8], 4
      %s47 = int_to_ptr.vmem [resolvable:$true] %s46
      %49 = dma.hbm_to_vmem [thread:$0]  %s2, 16, %s47, [#allocation7]
    $region13: #{_lambda_.16} parent=1 // pred_fallthru
      _
    // Predicated region
    $region14: #{_lambda_.16} parent=1 // pred_check
      _
    $region15: #{_lambda_.16} parent=1 // pred_check_branch
      %51 = sbr.rel (0) target = $region17
    $region16: #{_lambda_.16} parent=1 // pred_region
      %s53 = ssub.s32 128, 128
      %54 = vsyncadd [#allocation10], %s53
      %s55 = sshll.u32 [#allocation9], 4
      %s56 = int_to_ptr.vmem [resolvable:$true] %s55
      %61 = dma.hbm_to_vmem [thread:$0]  %s3, 128, %s56, [#allocation10], 64, 64, 4
    $region17: #{_lambda_.16} parent=1 // pred_fallthru
      _
    // Predicated region
    $region18: #{_lambda_.16} parent=1 // pred_check
      _
    $region19: #{_lambda_.16} parent=1 // pred_check_branch
      %63 = sbr.rel (0) target = $region21
    $region20: #{_lambda_.16} parent=1 // pred_region
      %s65 = ssub.s32 16, 16
      %66 = vsyncadd [#allocation10], %s65
      %s68 = sshll.u32 [#allocation11], 4
      %s69 = int_to_ptr.vmem [resolvable:$true] %s68
      %71 = dma.hbm_to_vmem [thread:$0]  %s4, 16, %s69, [#allocation10]
    $region21: #{_lambda_.16} parent=1 // pred_fallthru
      _
    // Predicated region
    $region22: #{_lambda_.16} parent=1 // pred_check
      _
    $region23: #{_lambda_.16} parent=1 // pred_check_branch
      %73 = sbr.rel (0) target = $region25
    $region24: #{_lambda_.16} parent=1 // pred_region
      %s75 = ssub.s32 16, 16
      %76 = vsyncadd [#allocation13], %s75
      %s78 = sshll.u32 [#allocation12], 4
      %s79 = int_to_ptr.vmem [resolvable:$true] %s78
      %81 = dma.hbm_to_vmem [thread:$0]  %s5, 16, %s79, [#allocation13]
    $region25: #{_lambda_.16} parent=1 // pred_fallthru
      _
    // Predicated region
    $region26: #{_lambda_.16} parent=1 // pred_check
      _
    $region27: #{_lambda_.16} parent=1 // pred_check_branch
      %83 = sbr.rel (0) target = $region29
    $region28: #{_lambda_.16} parent=1 // pred_region
      %84 = dma.done [#allocation4], 128
    $region29: #{_lambda_.16} parent=1 // pred_fallthru
      _
    // Predicated region
    $region30: #{_lambda_.16} parent=1 // pred_check
      _
    $region31: #{_lambda_.16} parent=1 // pred_check_branch
      %86 = sbr.rel (0) target = $region33
    $region32: #{_lambda_.16} parent=1 // pred_region
      %87 = dma.done [#allocation7], 512
    $region33: #{_lambda_.16} parent=1 // pred_fallthru
      _
    // Predicated region
    $region34: #{_lambda_.16} parent=1 // pred_check
      _
    $region35: #{_lambda_.16} parent=1 // pred_check_branch
      %89 = sbr.rel (0) target = $region37
    $region36: #{_lambda_.16} parent=1 // pred_region
      %90 = dma.done [#allocation7], 16
    $region37: #{_lambda_.16} parent=1 // pred_fallthru
      _
    // Predicated region
    $region38: #{_lambda_.16} parent=1 // pred_check
      _
    $region39: #{_lambda_.16} parent=1 // pred_check_branch
      %92 = sbr.rel (0) target = $region41
    $region40: #{_lambda_.16} parent=1 // pred_region
      %93 = dma.done [#allocation10], 128
    $region41: #{_lambda_.16} parent=1 // pred_fallthru
      _
    // Predicated region
    $region42: #{_lambda_.16} parent=1 // pred_check
      _
    $region43: #{_lambda_.16} parent=1 // pred_check_branch
      %95 = sbr.rel (0) target = $region45
    $region44: #{_lambda_.16} parent=1 // pred_region
      %96 = dma.done [#allocation10], 16
    $region45: #{_lambda_.16} parent=1 // pred_fallthru
      _
    // Predicated region
    $region46: #{_lambda_.16} parent=1 // pred_check
      _
    $region47: #{_lambda_.16} parent=1 // pred_check_branch
      %98 = sbr.rel (0) target = $region49
    $region48: #{_lambda_.16} parent=1 // pred_region
      %99 = dma.done [#allocation13], 16
    $region49: #{_lambda_.16} parent=1 // pred_fallthru
      _
    %p101 = scmp.eq.s32.totalorder 0, 0
    // Predicated region
    $region50: #{_lambda_.16} parent=1 // pred_check
      %p102 = pneg %p101
    $region51: #{_lambda_.16} parent=1 // pred_check_branch
      %104 = sbr.rel (%p102) target = $region53
    $region52: #{_lambda_.16} parent=1 // pred_region
      %vm105 = vcmask 523264
      %106 = vst.msk [vmem:[#allocation2] sm:$0xff] %vm105, 0.0
      %107 = vst.msk [vmem:[#allocation2 + $0x8] sm:$0xff] %vm105, 0.0
    $region53: #{_lambda_.16} parent=1 // pred_fallthru
      _
    %v108 = vld [vmem:[#allocation2] sm:$0xff]
    %v109 = vld [vmem:[#allocation2 + $0x8] sm:$0xff]
    %v110 = vld [vmem:[#allocation3] sm:$0xf]
    %v111 = vld [vmem:[#allocation3 + $0x4] sm:$0xf]
    %v112 = vld [vmem:[#allocation6] sm:$0xf]
    %v113 = vld [vmem:[#allocation6 + $0x4] sm:$0xf]
    %v114 = vld [vmem:[#allocation6 + $0x8] sm:$0xf]
    %v115 = vld [vmem:[#allocation6 + $0xc] sm:$0xf]
    %v116 = vld [vmem:[#allocation6 + $0x10] sm:$0xf]
    %v117 = vld [vmem:[#allocation6 + $0x14] sm:$0xf]
    %v118 = vld [vmem:[#allocation6 + $0x18] sm:$0xf]
    %v119 = vld [vmem:[#allocation6 + $0x1c] sm:$0xf]
    %v122 = vunpack.c.l.b16 %v110
    %v123 = vunpack.c.l.b16 %v111
    %v124 = vpack.c.b16 %v123, %v122
    %v133 = vunpack.c.l.b16 %v112
    %v134 = vunpack.c.l.b16 %v113
    %v135 = vunpack.c.l.b16 %v114
    %v136 = vunpack.c.l.b16 %v115
    %v137 = vunpack.c.l.b16 %v116
    %v138 = vunpack.c.l.b16 %v117
    %v139 = vunpack.c.l.b16 %v118
    %v140 = vunpack.c.l.b16 %v119
    %v141 = vpack.c.b16 %v134, %v133
    %v142 = vpack.c.b16 %v136, %v135
    %v143 = vpack.c.b16 %v138, %v137
    %v144 = vpack.c.b16 %v140, %v139
    %vm149 = vcmask 523264
    %v151 = vsel %vm149, %v124, 0
    %153 = vmatprep.subr.bf16.mxu0 0
    %154 = vmatpush1.bf16.msra.mxu0 %v141
    %155 = vmatprep.subr.bf16.mxu0 0
    %156 = vmatpush1.bf16.msra.mxu0 %v142
    %157 = vmatprep.subr.bf16.mxu0 0
    %158 = vmatpush1.bf16.msra.mxu0 %v143
    %159 = vmatprep.subr.bf16.mxu0 0
    %160 = vmatpush1.bf16.msra.mxu0 %v144
    %161 = vmatprep.subr.bf16.mxu0 0
    %162 = vmatpush1.bf16.msra.mxu0 0
    %163 = vmatprep.subr.bf16.mxu0 0
    %164 = vmatpush1.bf16.msra.mxu0 0
    %165 = vmatprep.subr.bf16.mxu0 0
    %166 = vmatpush1.bf16.msra.mxu0 0
    %167 = vmatprep.subr.bf16.mxu0 0
    %168 = vmatpush1.bf16.msra.mxu0 0
    %169 = vmatprep.subr.bf16.mxu0 0
    %170 = vmatpush1.bf16.msra.mxu0 0
    %171 = vmatprep.subr.bf16.mxu0 0
    %172 = vmatpush1.bf16.msra.mxu0 0
    %173 = vmatprep.subr.bf16.mxu0 0
    %174 = vmatpush1.bf16.msra.mxu0 0
    %175 = vmatprep.subr.bf16.mxu0 0
    %176 = vmatpush1.bf16.msra.mxu0 0
    %177 = vmatprep.subr.bf16.mxu0 0
    %178 = vmatpush1.bf16.msra.mxu0 0
    %179 = vmatprep.subr.bf16.mxu0 0
    %180 = vmatpush1.bf16.msra.mxu0 0
    %181 = vmatprep.subr.bf16.mxu0 0
    %182 = vmatpush1.bf16.msra.mxu0 0
    %183 = vmatprep.subr.bf16.mxu0 0
    %184 = vmatpush1.bf16.msra.mxu0 0
    %185 = vmatprep.mubr.bf16.mxu0 0
    %186 = vmatmul.mubr.bf16.gmra.mrb[0].mxu0 %v151
    %v187 = vpop.f32.mrb[0].mxu0
    %v188 = vadd.f32 0.0, %v187
    %v189 = vpop.f32.mrb[0].mxu0
    %v190 = vpop.f32.mrb[0].mxu0
    %v191 = vadd.f32 0.0, %v190
    %v192 = vpop.f32.mrb[0].mxu0
    %193 = vdwg.mxu0
    %v194 = vadd.f32 %v108, %v188
    %v195 = vadd.f32 %v109, %v191
    %196 = vst.msk [vmem:[#allocation2] sm:$0xff] %vm149, %v194
    %197 = vst.msk [vmem:[#allocation2 + $0x8] sm:$0xff] %vm149, %v195
    // Predicated region
    $region54: #{_lambda_.16} parent=1 // pred_check
      %p198 = pneg %p101
    $region55: #{_lambda_.16} parent=1 // pred_check_branch
      %200 = sbr.rel (%p198) target = $region57
    $region56: #{_lambda_.16} parent=1 // pred_region
      %v201 = vld [vmem:[#allocation2] sm:$0xff]
      %v202 = vld [vmem:[#allocation2 + $0x8] sm:$0xff]
      %v203 = vld [vmem:[#allocation8] sm:$0x1]
      %v205 = vlaneseq
      %v206 = vshrl.u32 %v205, 7
      %v207 = vsub.s32 0, %v206
      %v208 = vrot.slane %v203, %v207
      %v210 = vadd.f32 %v201, %v208
      %v211 = vadd.f32 %v202, %v208
      %v212 = vld [vmem:[#allocation9] sm:$0xf]
      %v213 = vld [vmem:[#allocation9 + $0x4] sm:$0xf]
      %v214 = vunpack.c.l.bf16 %v212
      %v215 = vunpack.c.l.bf16 %v213
      %v216 = vadd.f32 %v210, %v214
      %v217 = vadd.f32 %v211, %v215
      %v218 = vsel %vm149, %v216, 0.0
      %219 = vadd.xlane.f32.xlu0 %v218
      %v220 = vpop.xlane.xlu0 %219
      %v221 = vsel %vm149, %v217, 0.0
      %222 = vadd.xlane.f32.xlu0 %v221
      %v223 = vpop.xlane.xlu0 %222
      %v224 = vrcp.pop 64.0
      %v225 = vmul.f32 %v220, %v224
      %v226 = vmul.f32 %v223, %v224
      %v227 = vsub.f32 %v216, %v225
      %v228 = vsub.f32 %v217, %v226
      %v229 = vmul.f32 %v227, %v227
      %v230 = vmul.f32 %v228, %v228
      %v231 = vsel %vm149, %v229, 0.0
      %232 = vadd.xlane.f32.xlu0 %v231
      %v233 = vpop.xlane.xlu0 %232
      %v234 = vsel %vm149, %v230, 0.0
      %235 = vadd.xlane.f32.xlu0 %v234
      %v236 = vpop.xlane.xlu0 %235
      %v237 = vmul.f32 %v233, %v224
      %v238 = vmul.f32 %v236, %v224
      %v239 = vadd.f32 %v237, 1e-12
      %v240 = vadd.f32 %v238, 1e-12
      %v241 = vrsqrt.pop %v239
      %v242 = vrsqrt.pop %v240
      %v243 = vmul.f32 %v227, %v241
      %v244 = vmul.f32 %v228, %v242
      %v245 = vld [vmem:[#allocation11] sm:$0x1]
      %v247 = vlaneseq
      %v248 = vshrl.u32 %v247, 7
      %v249 = vsub.s32 0, %v248
      %v250 = vrot.slane %v245, %v249
      %v252 = vmul.f32 %v243, %v250
      %v253 = vmul.f32 %v244, %v250
      %v254 = vld [vmem:[#allocation12] sm:$0x1]
      %v256 = vlaneseq
      %v257 = vshrl.u32 %v256, 7
      %v258 = vsub.s32 0, %v257
      %v259 = vrot.slane %v254, %v258
      %v261 = vadd.f32 %v252, %v259
      %v262 = vadd.f32 %v253, %v259
      %v263 = vpack.c.bf16 %v262, %v261
      %v265 = vunpack.c.l.b16 %v263
      %v266 = vunpack.c.h.b16 %v263
      %v267 = vpack.c.b16 %v265, %v265
      %v268 = vpack.c.b16 %v266, %v266
      %vm271 = vcmask 519168
      %272 = vst.msk [vmem:[#allocation14] sm:$0xf] %vm271, %v267
      %273 = vst.msk [vmem:[#allocation14 + $0x4] sm:$0xf] %vm271, %v268
    $region57: #{_lambda_.16} parent=1 // pred_fallthru
      _
    // Predicated region
    $region58: #{_lambda_.16} parent=1 // pred_check
      _
    $region59: #{_lambda_.16} parent=1 // pred_check_branch
      %275 = sbr.rel (0) target = $region61
    $region60: #{_lambda_.16} parent=1 // pred_region
      %s277 = ssub.s32 128, 128
      %278 = vsyncadd [#allocation5], %s277
      %s279 = sshll.u32 [#allocation14], 4
      %s280 = int_to_ptr.vmem [resolvable:$true] %s279
      %285 = dma.vmem_to_hbm [thread:$0]  %s280, 128, %s6, [#allocation5], 64, 64, 4
    $region61: #{_lambda_.16} parent=1 // pred_fallthru
      _
    // Predicated region
    $region62: #{_lambda_.16} parent=1 // pred_check
      _
    $region63: #{_lambda_.16} parent=1 // pred_check_branch
      %287 = sbr.rel (0) target = $region65
    $region64: #{_lambda_.16} parent=1 // pred_region
      %288 = dma.done [#allocation5], 128
    $region65: #{_lambda_.16} parent=1 // pred_fallthru
      _
    %289 = vsyncpa [#allocation4], 1
    %290 = vsyncpa [#allocation7], 1
    %291 = vsyncpa [#allocation10], 1
    %292 = vsyncpa [#allocation13], 1
    %293 = vsyncpa [#allocation5], 1

// kernel: _lambda_.14
$region0: #{_lambda_.14}
  #allocation0 [shape = 'u32[]', space=smem, size = 0x4, offset = 0x4, fixed_abs, tag = 'smem constant byte address 0x4 - core index']
  #allocation1 [shape = 'u32[144,128]{1,0:T(1,128)}', space=vmem, size = 0x12000, scoped, tag = 'internal scratch']
  #allocation2 [shape = 'f32[16,64]{1,0:T(8,128)}', space=vmem, size = 0x2000, scoped, tag = 'scratch operand']
  %s0 = inlined_call_operand.hbm [shape: bf16[16,64], index: 0, kind: input, shape index: {}]
  %s1 = inlined_call_operand.hbm [shape: bf16[3,64,64], index: 1, kind: input, shape index: {}]
  %s2 = inlined_call_operand.hbm [shape: f32[3,1,64], index: 2, kind: input, shape index: {}]
  %s3 = inlined_call_operand.hbm [shape: bf16[3,16,64], index: 3, kind: output, shape index: {}]
  %s4 = sld [smem:[#allocation0]]
  $region65: #{_lambda_.14} parent=0
    _
  %s6 = ssub.s32 1, %s4
  %s7 = scalar_select 0, %s6, %s4
  $region1: #{_lambda_.14} parent=0
    #allocation3 [shape = 'u8[4096]{0}', space=vmem, size = 0x1000, scoped, tag = 'input window, operand 0, single buffered']
    #allocation4 [shape = 's32[2]{0}', space=sflag, size = 0x8, scoped, tag = 'scoped memory for _lambda_.14']
    #allocation5 [shape = 's32[2]{0}', space=sflag, size = 0x8, scoped, tag = 'scoped memory for _lambda_.14']
    #allocation6 [shape = 'u8[32768]{0}', space=vmem, size = 0x8000, scoped, tag = 'input window, operand 1']
    #allocation7 [shape = 's32[2]{0}', space=sflag, size = 0x8, scoped, tag = 'scoped memory for _lambda_.14']
    #allocation8 [shape = 'u8[1024]{0}', space=vmem, size = 0x400, scoped, tag = 'input window, operand 2']
    #allocation9 [shape = 'u8[8192]{0}', space=vmem, size = 0x2000, scoped, tag = 'output window, operand 0']
    %8 = vsyncpa [#allocation4], 0
    %9 = vsyncpa [#allocation7], 0
    %s10 = scalar_lea.sflag [#allocation7], 1
    %11 = vsyncpa %s10, 0
    %12 = vsyncpa [#allocation5], 0
    %s13 = scalar_lea.sflag [#allocation5], 1
    %14 = vsyncpa %s13, 0
    loop: start=0, step=1, limit=5
    $region2: #{_lambda_.14} parent=1 // loop_pre_header
      _
    $region3: #{_lambda_.14} parent=1 // loop_header
      %s16 = sphi 0, %s20
      %p17 = scmp.ge.s32.totalorder %s16, 5
      %s23 = sphi 0, %s42
      %s24 = sphi 0, %s38
      %s25 = sphi 0, %s34
      %s26 = sphi 0, %s23
      %s27 = sphi 0, %s24
      %s28 = sphi 0, %s25
      %s29 = sphi 0, %s26
      %s30 = sphi 0, %s27
      %s31 = sphi 0, %s28
      %s47 = sphi 0, %s49
      %s50 = sphi 0, %s47
      %s51 = sphi 0, %s50
      %s67 = sphi 0, %s51
      %s75 = sphi 0, %s77
      %s78 = sphi 0, %s75
      %s79 = sphi 0, %s78
      %s95 = sphi 0, %s79
      %s101 = sphi 0, %s103
      %s104 = sphi 0, %s101
      %s105 = sphi 0, %s104
      %s121 = sphi 0, %s105
      %s129 = sphi 0, %s131
      %s132 = sphi 0, %s129
      %s133 = sphi 0, %s132
      %s149 = sphi 0, %s133
    $region4: #{_lambda_.14} parent=1 // loop_header_branch
      %19 = sbr.rel (%p17) target = $region8
    $region5: #{_lambda_.14} parent=1 // loop_body
      %s21 = ssub.s32 %s16, 1
      %s22 = ssub.s32 %s16, 2
      %s32 = sadd.s32 1, %s25
      %p33 = scmp.ge.s32.totalorder %s32, 1
      %s34 = scalar_select %p33, 0, %s32
      %s35 = sadd.s32 1, %s24
      %s36 = scalar_select %p33, %s35, %s24
      %p37 = scmp.ge.s32.totalorder %s36, 1
      %s38 = scalar_select %p37, 0, %s36
      %s39 = sadd.s32 1, %s23
      %s40 = scalar_select %p37, %s39, %s23
      %p41 = scmp.ge.s32.totalorder %s40, 3
      %s42 = scalar_select %p41, 0, %s40
      %s43 = ssub.s32 %s24, %s38
      %s44 = ssub.s32 %s25, %s34
      %s45 = sor.u32 %s43, %s44
      %p46 = scmp.eq.s32.totalorder %s45, 0
      %s48 = sadd.s32 %s47, 1
      %s49 = scalar_select %p46, %s47, %s48
      %p52 = pneg %p46
      %p53 = scmp.eq.s32.totalorder %s16, 2
      %p54 = por %p52, %p53
      %p55 = scmp.ne.s32.totalorder %s47, %s50
      %p56 = scmp.eq.s32.totalorder %s16, 0
      %p57 = por %p55, %p56
      %p58 = scmp.ne.s32.totalorder %s47, %s50
      %p59 = scmp.eq.s32.totalorder %s21, 2
      %p60 = por %p58, %p59
      %p61 = scmp.ne.s32.totalorder %s50, %s51
      %p62 = scmp.eq.s32.totalorder %s21, 0
      %p63 = por %p61, %p62
      %p64 = scmp.ne.s32.totalorder %s50, %s51
      %p65 = scmp.eq.s32.totalorder %s22, 2
      %p66 = por %p64, %p65
      %p68 = scmp.ne.s32.totalorder %s51, %s67
      %p69 = scmp.eq.s32.totalorder %s22, 0
      %p70 = por %p68, %p69
      %s71 = ssub.s32 %s23, %s42
      %s72 = ssub.s32 %s25, %s34
      %s73 = sor.u32 %s71, %s72
      %p74 = scmp.eq.s32.totalorder %s73, 0
      %s76 = sadd.s32 %s75, 1
      %s77 = scalar_select %p74, %s75, %s76
      %p80 = pneg %p74
      %p81 = scmp.eq.s32.totalorder %s16, 2
      %p82 = por %p80, %p81
      %p83 = scmp.ne.s32.totalorder %s75, %s78
      %p84 = scmp.eq.s32.totalorder %s16, 0
      %p85 = por %p83, %p84
      %p86 = scmp.ne.s32.totalorder %s75, %s78
      %p87 = scmp.eq.s32.totalorder %s21, 2
      %p88 = por %p86, %p87
      %p89 = scmp.ne.s32.totalorder %s78, %s79
      %p90 = scmp.eq.s32.totalorder %s21, 0
      %p91 = por %p89, %p90
      %p92 = scmp.ne.s32.totalorder %s78, %s79
      %p93 = scmp.eq.s32.totalorder %s22, 2
      %p94 = por %p92, %p93
      %p96 = scmp.ne.s32.totalorder %s79, %s95
      %p97 = scmp.eq.s32.totalorder %s22, 0
      %p98 = por %p96, %p97
      %s99 = ssub.s32 %s23, %s42
      %p100 = scmp.eq.s32.totalorder %s99, 0
      %s102 = sadd.s32 %s101, 1
      %s103 = scalar_select %p100, %s101, %s102
      %p106 = pneg %p100
      %p107 = scmp.eq.s32.totalorder %s16, 2
      %p108 = por %p106, %p107
      %p109 = scmp.ne.s32.totalorder %s101, %s104
      %p110 = scmp.eq.s32.totalorder %s16, 0
      %p111 = por %p109, %p110
      %p112 = scmp.ne.s32.totalorder %s101, %s104
      %p113 = scmp.eq.s32.totalorder %s21, 2
      %p114 = por %p112, %p113
      %p115 = scmp.ne.s32.totalorder %s104, %s105
      %p116 = scmp.eq.s32.totalorder %s21, 0
      %p117 = por %p115, %p116
      %p118 = scmp.ne.s32.totalorder %s104, %s105
      %p119 = scmp.eq.s32.totalorder %s22, 2
      %p120 = por %p118, %p119
      %p122 = scmp.ne.s32.totalorder %s105, %s121
      %p123 = scmp.eq.s32.totalorder %s22, 0
      %p124 = por %p122, %p123
      %s125 = ssub.s32 %s23, %s42
      %s126 = ssub.s32 %s24, %s38
      %s127 = sor.u32 %s125, %s126
      %p128 = scmp.eq.s32.totalorder %s127, 0
      %s130 = sadd.s32 %s129, 1
      %s131 = scalar_select %p128, %s129, %s130
      %p134 = pneg %p128
      %p135 = scmp.eq.s32.totalorder %s16, 2
      %p136 = por %p134, %p135
      %p137 = scmp.ne.s32.totalorder %s129, %s132
      %p138 = scmp.eq.s32.totalorder %s16, 0
      %p139 = por %p137, %p138
      %p140 = scmp.ne.s32.totalorder %s129, %s132
      %p141 = scmp.eq.s32.totalorder %s21, 2
      %p142 = por %p140, %p141
      %p143 = scmp.ne.s32.totalorder %s132, %s133
      %p144 = scmp.eq.s32.totalorder %s21, 0
      %p145 = por %p143, %p144
      %p146 = scmp.ne.s32.totalorder %s132, %s133
      %p147 = scmp.eq.s32.totalorder %s22, 2
      %p148 = por %p146, %p147
      %p150 = scmp.ne.s32.totalorder %s133, %s149
      %p151 = scmp.eq.s32.totalorder %s22, 0
      %p152 = por %p150, %p151
      %p153 = scmp.le.s32.totalorder 1, %s16
      %p154 = scmp.lt.s32.totalorder %s16, 4
      %p155 = pnand %p153, %p154
      %p156 = pneg %p155
      // Predicated region
      $region9: #{_lambda_.14} parent=5 // pred_check
        _
      $region10: #{_lambda_.14} parent=5 // pred_check_branch
        %158 = sbr.rel (%p155) target = $region12
      $region11: #{_lambda_.14} parent=5 // pred_region
        %s159 = ssub.s32 %s16, 1
        // Predicated region
        $region13: #{_lambda_.14} parent=11 // pred_check
          %p160 = pneg %p63
        $region14: #{_lambda_.14} parent=11 // pred_check_branch
          %162 = sbr.rel (%p160) target = $region16
        $region15: #{_lambda_.14} parent=11 // pred_region
          %s163 = smul.u32 2, %s27
          %s165 = ssub.s32 128, 128
          %166 = vsyncadd [#allocation4], %s165
          %s167 = sadd.s32 %s28, %s163
          %s168 = smul.addr %s167, 64
          %s169 = scalar_lea.hbm %s0, %s168
          %s170 = sshll.u32 [#allocation3], 4
          %s171 = int_to_ptr.vmem [resolvable:$true] %s170
          %176 = dma.hbm_to_vmem [thread:$0]  %s169, 128, %s171, [#allocation4], 64, 64, 4
        $region16: #{_lambda_.14} parent=11 // pred_fallthru
          _
      $region12: #{_lambda_.14} parent=5 // pred_fallthru
        _
      %p177 = scmp.lt.s32.totalorder %s16, 3
      // Predicated region
      $region17: #{_lambda_.14} parent=5 // pred_check
        %p178 = pneg %p177
      $region18: #{_lambda_.14} parent=5 // pred_check_branch
        %180 = sbr.rel (%p178) target = $region20
      $region19: #{_lambda_.14} parent=5 // pred_region
        // Predicated region
        $region21: #{_lambda_.14} parent=19 // pred_check
          %p181 = pneg %p85
        $region22: #{_lambda_.14} parent=19 // pred_check_branch
          %183 = sbr.rel (%p181) target = $region24
        $region23: #{_lambda_.14} parent=19 // pred_region
          %s184 = sand.u32 %s16, 1
          %s185 = scalar_lea.sflag [#allocation7], %s184
          %s186 = sand.u32 %s75, 1
          %s187 = smul.addr %s186, 32
          %s188 = scalar_lea.vmem [#allocation6], %s187
          %s189 = smul.u32 8, %s25
          %s191 = ssub.s32 512, 512
          %192 = vsyncadd %s185, %s191
          %s193 = smul.addr %s23, 8
          %s194 = sadd.s32 %s189, %s193
          %s195 = smul.addr %s194, 64
          %s196 = scalar_lea.hbm %s1, %s195
          %s197 = sshll.u32 %s188, 4
          %s198 = int_to_ptr.vmem [resolvable:$true] %s197
          %203 = dma.hbm_to_vmem [thread:$0]  %s196, 512, %s198, %s185, 64, 64, 4
        $region24: #{_lambda_.14} parent=19 // pred_fallthru
          _
        // Predicated region
        $region25: #{_lambda_.14} parent=19 // pred_check
          %p204 = pneg %p111
        $region26: #{_lambda_.14} parent=19 // pred_check_branch
          %206 = sbr.rel (%p204) target = $region28
        $region27: #{_lambda_.14} parent=19 // pred_region
          %s207 = sand.u32 %s16, 1
          %s208 = scalar_lea.sflag [#allocation7], %s207
          %s209 = sand.u32 %s101, 1
          %s210 = scalar_lea.vmem [#allocation8], %s209
          %s212 = ssub.s32 16, 16
          %213 = vsyncadd %s208, %s212
          %s214 = smul.addr %s23, 16
          %s215 = scalar_lea.hbm %s2, %s214
          %s217 = sshll.u32 %s210, 4
          %s218 = int_to_ptr.vmem [resolvable:$true] %s217
          %220 = dma.hbm_to_vmem [thread:$0]  %s215, 16, %s218, %s208
        $region28: #{_lambda_.14} parent=19 // pred_fallthru
          _
      $region20: #{_lambda_.14} parent=5 // pred_fallthru
        _
      %p221 = scmp.le.s32.totalorder 1, %s16
      %p222 = scmp.lt.s32.totalorder %s16, 4
      %p223 = pnand %p221, %p222
      %p224 = pneg %p223
      // Predicated region
      $region29: #{_lambda_.14} parent=5 // pred_check
        _
      $region30: #{_lambda_.14} parent=5 // pred_check_branch
        %226 = sbr.rel (%p223) target = $region32
      $region31: #{_lambda_.14} parent=5 // pred_region
        %s227 = ssub.s32 %s16, 1
        // Predicated region
        $region33: #{_lambda_.14} parent=31 // pred_check
          %p228 = pneg %p63
        $region34: #{_lambda_.14} parent=31 // pred_check_branch
          %230 = sbr.rel (%p228) target = $region36
        $region35: #{_lambda_.14} parent=31 // pred_region
          %231 = dma.done [#allocation4], 128
        $region36: #{_lambda_.14} parent=31 // pred_fallthru
          _
        %s232 = sand.u32 %s21, 1
        %s233 = scalar_lea.sflag [#allocation7], %s232
        %s234 = sand.u32 %s78, 1
        %s235 = smul.addr %s234, 32
        %s236 = scalar_lea.vmem [#allocation6], %s235
        // Predicated region
        $region37: #{_lambda_.14} parent=31 // pred_check
          %p237 = pneg %p91
        $region38: #{_lambda_.14} parent=31 // pred_check_branch
          %239 = sbr.rel (%p237) target = $region40
        $region39: #{_lambda_.14} parent=31 // pred_region
          %240 = dma.done %s233, 512
        $region40: #{_lambda_.14} parent=31 // pred_fallthru
          _
        %s241 = sand.u32 %s21, 1
        %s242 = scalar_lea.sflag [#allocation7], %s241
        %s243 = sand.u32 %s104, 1
        %s244 = scalar_lea.vmem [#allocation8], %s243
        // Predicated region
        $region41: #{_lambda_.14} parent=31 // pred_check
          %p245 = pneg %p117
        $region42: #{_lambda_.14} parent=31 // pred_check_branch
          %247 = sbr.rel (%p245) target = $region44
        $region43: #{_lambda_.14} parent=31 // pred_region
          %248 = dma.done %s242, 16
        $region44: #{_lambda_.14} parent=31 // pred_fallthru
          _
        %p249 = pneg %p63
        %p250 = pneg %p60
        %s251 = sand.u32 %s21, 1
        %s252 = scalar_lea.sflag [#allocation7], %s251
        %s253 = sand.u32 %s78, 1
        %s254 = smul.addr %s253, 32
        %s255 = scalar_lea.vmem [#allocation6], %s254
        %p256 = pneg %p91
        %p257 = pneg %p88
        %s258 = sand.u32 %s21, 1
        %s259 = scalar_lea.sflag [#allocation7], %s258
        %s260 = sand.u32 %s104, 1
        %s261 = scalar_lea.vmem [#allocation8], %s260
        %p262 = pneg %p117
        %p263 = pneg %p114
        %p264 = pneg %p145
        %p265 = pneg %p142
        %s266 = sand.u32 %s132, 1
        %s267 = scalar_lea.sflag [#allocation5], %s266
        %s268 = sand.u32 %s132, 1
        %s269 = smul.addr %s268, 8
        %s270 = scalar_lea.vmem [#allocation9], %s269
        %s271 = smul.u32 2, %s27
        %s272 = smul.u32 8, %s28
        %s273 = smul.u32 2, %s27
        %p275 = scmp.eq.s32.totalorder %s28, 0
        // Predicated region
        $region45: #{_lambda_.14} parent=31 // pred_check
          %p276 = pneg %p275
        $region46: #{_lambda_.14} parent=31 // pred_check_branch
          %278 = sbr.rel (%p276) target = $region48
        $region47: #{_lambda_.14} parent=31 // pred_region
          %vm279 = vcmask 523264
          %280 = vst.msk [vmem:[#allocation2] sm:$0xff] %vm279, 0.0
          %281 = vst.msk [vmem:[#allocation2 + $0x8] sm:$0xff] %vm279, 0.0
        $region48: #{_lambda_.14} parent=31 // pred_fallthru
          _
        %v282 = vld [vmem:[#allocation2] sm:$0xff]
        %v283 = vld [vmem:[#allocation2 + $0x8] sm:$0xff]
        %v284 = vld [vmem:[#allocation3] sm:$0xf]
        %v285 = vld [vmem:[#allocation3 + $0x4] sm:$0xf]
        %v286 = vld [vmem:[%s236] sm:$0xf]
        %v287 = vld [vmem:[%s236 + $0x4] sm:$0xf]
        %v288 = vld [vmem:[%s236 + $0x8] sm:$0xf]
        %v289 = vld [vmem:[%s236 + $0xc] sm:$0xf]
        %v290 = vld [vmem:[%s236 + $0x10] sm:$0xf]
        %v291 = vld [vmem:[%s236 + $0x14] sm:$0xf]
        %v292 = vld [vmem:[%s236 + $0x18] sm:$0xf]
        %v293 = vld [vmem:[%s236 + $0x1c] sm:$0xf]
        %v296 = vunpack.c.l.b16 %v284
        %v297 = vunpack.c.l.b16 %v285
        %v298 = vpack.c.b16 %v297, %v296
        %v307 = vunpack.c.l.b16 %v286
        %v308 = vunpack.c.l.b16 %v287
        %v309 = vunpack.c.l.b16 %v288
        %v310 = vunpack.c.l.b16 %v289
        %v311 = vunpack.c.l.b16 %v290
        %v312 = vunpack.c.l.b16 %v291
        %v313 = vunpack.c.l.b16 %v292
        %v314 = vunpack.c.l.b16 %v293
        %v315 = vpack.c.b16 %v308, %v307
        %v316 = vpack.c.b16 %v310, %v309
        %v317 = vpack.c.b16 %v312, %v311
        %v318 = vpack.c.b16 %v314, %v313
        %vm323 = vcmask 523264
        %v325 = vsel %vm323, %v298, 0
        %327 = vmatprep.subr.bf16.mxu0 0
        %328 = vmatpush1.bf16.msra.mxu0 %v315
        %329 = vmatprep.subr.bf16.mxu0 0
        %330 = vmatpush1.bf16.msra.mxu0 %v316
        %331 = vmatprep.subr.bf16.mxu0 0
        %332 = vmatpush1.bf16.msra.mxu0 %v317
        %333 = vmatprep.subr.bf16.mxu0 0
        %334 = vmatpush1.bf16.msra.mxu0 %v318
        %335 = vmatprep.subr.bf16.mxu0 0
        %336 = vmatpush1.bf16.msra.mxu0 0
        %337 = vmatprep.subr.bf16.mxu0 0
        %338 = vmatpush1.bf16.msra.mxu0 0
        %339 = vmatprep.subr.bf16.mxu0 0
        %340 = vmatpush1.bf16.msra.mxu0 0
        %341 = vmatprep.subr.bf16.mxu0 0
        %342 = vmatpush1.bf16.msra.mxu0 0
        %343 = vmatprep.subr.bf16.mxu0 0
        %344 = vmatpush1.bf16.msra.mxu0 0
        %345 = vmatprep.subr.bf16.mxu0 0
        %346 = vmatpush1.bf16.msra.mxu0 0
        %347 = vmatprep.subr.bf16.mxu0 0
        %348 = vmatpush1.bf16.msra.mxu0 0
        %349 = vmatprep.subr.bf16.mxu0 0
        %350 = vmatpush1.bf16.msra.mxu0 0
        %351 = vmatprep.subr.bf16.mxu0 0
        %352 = vmatpush1.bf16.msra.mxu0 0
        %353 = vmatprep.subr.bf16.mxu0 0
        %354 = vmatpush1.bf16.msra.mxu0 0
        %355 = vmatprep.subr.bf16.mxu0 0
        %356 = vmatpush1.bf16.msra.mxu0 0
        %357 = vmatprep.subr.bf16.mxu0 0
        %358 = vmatpush1.bf16.msra.mxu0 0
        %359 = vmatprep.mubr.bf16.mxu0 0
        %360 = vmatmul.mubr.bf16.gmra.mrb[0].mxu0 %v325
        %v361 = vpop.f32.mrb[0].mxu0
        %v362 = vadd.f32 0.0, %v361
        %v363 = vpop.f32.mrb[0].mxu0
        %v364 = vpop.f32.mrb[0].mxu0
        %v365 = vadd.f32 0.0, %v364
        %v366 = vpop.f32.mrb[0].mxu0
        %367 = vdwg.mxu0
        %v368 = vadd.f32 %v282, %v362
        %v369 = vadd.f32 %v283, %v365
        %370 = vst.msk [vmem:[#allocation2] sm:$0xff] %vm323, %v368
        %371 = vst.msk [vmem:[#allocation2 + $0x8] sm:$0xff] %vm323, %v369
        // Predicated region
        $region49: #{_lambda_.14} parent=31 // pred_check
          %p372 = pneg %p275
        $region50: #{_lambda_.14} parent=31 // pred_check_branch
          %374 = sbr.rel (%p372) target = $region52
        $region51: #{_lambda_.14} parent=31 // pred_region
          %v375 = vld [vmem:[#allocation2] sm:$0xff]
          %v376 = vld [vmem:[#allocation2 + $0x8] sm:$0xff]
          %v377 = vld [vmem:[%s244] sm:$0x1]
          %v379 = vlaneseq
          %v380 = vshrl.u32 %v379, 7
          %v381 = vsub.s32 0, %v380
          %v382 = vrot.slane %v377, %v381
          %v384 = vadd.f32 %v375, %v382
          %v385 = vadd.f32 %v376, %v382
          %v386 = vpack.c.bf16 %v385, %v384
          %v388 = vunpack.c.l.b16 %v386
          %v389 = vunpack.c.h.b16 %v386
          %v390 = vpack.c.b16 %v388, %v388
          %v391 = vpack.c.b16 %v389, %v389
          %vm394 = vcmask 519168
          %395 = vst.msk [vmem:[%s270] sm:$0xf] %vm394, %v390
          %396 = vst.msk [vmem:[%s270 + $0x4] sm:$0xf] %vm394, %v391
        $region52: #{_lambda_.14} parent=31 // pred_fallthru
          _
        %s397 = sand.u32 %s132, 1
        %s398 = scalar_lea.sflag [#allocation5], %s397
        %s399 = sand.u32 %s132, 1
        %s400 = smul.addr %s399, 8
        %s401 = scalar_lea.vmem [#allocation9], %s400
        // Predicated region
        $region53: #{_lambda_.14} parent=31 // pred_check
          %p402 = pneg %p142
        $region54: #{_lambda_.14} parent=31 // pred_check_branch
          %404 = sbr.rel (%p402) target = $region56
        $region55: #{_lambda_.14} parent=31 // pred_region
          %s405 = smul.u32 2, %s27
          %s407 = ssub.s32 128, 128
          %408 = vsyncadd %s398, %s407
          %s409 = smul.addr %s26, 2
          %s410 = sadd.s32 %s405, %s409
          %s411 = smul.addr %s410, 64
          %s412 = scalar_lea.hbm %s3, %s411
          %s413 = sshll.u32 %s401, 4
          %s414 = int_to_ptr.vmem [resolvable:$true] %s413
          %419 = dma.vmem_to_hbm [thread:$0]  %s414, 128, %s412, %s398, 64, 64, 4
        $region56: #{_lambda_.14} parent=31 // pred_fallthru
          _
      $region32: #{_lambda_.14} parent=5 // pred_fallthru
        _
      %p420 = scmp.le.s32.totalorder 2, %s16
      // Predicated region
      $region57: #{_lambda_.14} parent=5 // pred_check
        %p421 = pneg %p420
      $region58: #{_lambda_.14} parent=5 // pred_check_branch
        %423 = sbr.rel (%p421) target = $region60
      $region59: #{_lambda_.14} parent=5 // pred_region
        %s424 = ssub.s32 %s16, 2
        // Predicated region
        $region61: #{_lambda_.14} parent=59 // pred_check
          %p425 = pneg %p148
        $region62: #{_lambda_.14} parent=59 // pred_check_branch
          %427 = sbr.rel (%p425) target = $region64
        $region63: #{_lambda_.14} parent=59 // pred_region
          %s428 = sand.u32 %s133, 1
          %s429 = scalar_lea.sflag [#allocation5], %s428
          %s430 = sand.u32 %s133, 1
          %s431 = smul.addr %s430, 8
          %s432 = scalar_lea.vmem [#allocation9], %s431
          %433 = dma.done %s429, 128
        $region64: #{_lambda_.14} parent=59 // pred_fallthru
          _
      $region60: #{_lambda_.14} parent=5 // pred_fallthru
        _
    $region6: #{_lambda_.14} parent=1 // loop_footer
      %s20 = sadd.s32 1, %s16
    $region7: #{_lambda_.14} parent=1 // loop_footer_branch
      %15 = sbr.rel target = $region3
    $region8: #{_lambda_.14} parent=1 // loop_exit
      _
    %434 = vsyncpa [#allocation4], 1
    %s435 = scalar_lea.sflag [#allocation4], 1
    %436 = vsyncpa %s435, 1
    %437 = vsyncpa [#allocation7], 1
    %s438 = scalar_lea.sflag [#allocation7], 1
    %439 = vsyncpa %s438, 1
    %440 = vsyncpa [#allocation5], 1
    %s441 = scalar_lea.sflag [#allocation5], 1
    %442 = vsyncpa %s441, 1

// kernel: _lambda_.15
$region0: #{_lambda_.15}
  #allocation0 [shape = 'u32[]', space=smem, size = 0x4, offset = 0x4, fixed_abs, tag = 'smem constant byte address 0x4 - core index']
  #allocation1 [shape = 'u32[144,128]{1,0:T(1,128)}', space=vmem, size = 0x12000, scoped, tag = 'internal scratch']
  %s0 = inlined_call_operand.hbm [shape: bf16[3,2,8,64], index: 0, kind: input, shape index: {}, may-alias: {0,1,2}]
  %s1 = inlined_call_operand.hbm [shape: bf16[3,2,8,64], index: 1, kind: input, shape index: {}, may-alias: {0,1,2}]
  %s2 = inlined_call_operand.hbm [shape: bf16[3,2,8,64], index: 2, kind: input, shape index: {}, may-alias: {0,1,2}]
  %s3 = inlined_call_operand.hbm [shape: f32[2,1,8], index: 3, kind: input, shape index: {}]
  %s4 = inlined_call_operand.hbm [shape: bf16[2,8,64], index: 4, kind: output, shape index: {}]
  %s5 = sld [smem:[#allocation0]]
  $region65: #{_lambda_.15} parent=0
    _
  %s7 = ssub.s32 1, %s5
  %s8 = scalar_select 0, %s7, %s5
  $region1: #{_lambda_.15} parent=0
    #allocation2 [shape = 'u8[4096]{0}', space=vmem, size = 0x1000, scoped, tag = 'input window, operand 0']
    #allocation3 [shape = 's32[2]{0}', space=sflag, size = 0x8, scoped, tag = 'scoped memory for _lambda_.15']
    #allocation4 [shape = 's32[2]{0}', space=sflag, size = 0x8, scoped, tag = 'scoped memory for _lambda_.15']
    #allocation5 [shape = 'u8[4096]{0}', space=vmem, size = 0x1000, scoped, tag = 'input window, operand 1']
    #allocation6 [shape = 's32[2]{0}', space=sflag, size = 0x8, scoped, tag = 'scoped memory for _lambda_.15']
    #allocation7 [shape = 'u8[4096]{0}', space=vmem, size = 0x1000, scoped, tag = 'input window, operand 2']
    #allocation8 [shape = 'u8[1024]{0}', space=vmem, size = 0x400, scoped, tag = 'input window, operand 3']
    #allocation9 [shape = 's32[2]{0}', space=sflag, size = 0x8, scoped, tag = 'scoped memory for _lambda_.15']
    #allocation10 [shape = 'u8[4096]{0}', space=vmem, size = 0x1000, scoped, tag = 'output window, operand 0']
    %9 = vsyncpa [#allocation3], 0
    %s10 = scalar_lea.sflag [#allocation3], 1
    %11 = vsyncpa %s10, 0
    %12 = vsyncpa [#allocation6], 0
    %s13 = scalar_lea.sflag [#allocation6], 1
    %14 = vsyncpa %s13, 0
    %15 = vsyncpa [#allocation9], 0
    %s16 = scalar_lea.sflag [#allocation9], 1
    %17 = vsyncpa %s16, 0
    %18 = vsyncpa [#allocation4], 0
    %s19 = scalar_lea.sflag [#allocation4], 1
    %20 = vsyncpa %s19, 0
    loop: start=0, step=1, limit=4
    $region2: #{_lambda_.15} parent=1 // loop_pre_header
      _
    $region3: #{_lambda_.15} parent=1 // loop_header
      %s22 = sphi 0, %s26
      %p23 = scmp.ge.s32.totalorder %s22, 4
      %s29 = sphi 0, %s41
      %s30 = sphi 0, %s37
      %s31 = sphi 0, %s29
      %s32 = sphi 0, %s30
      %s33 = sphi 0, %s31
      %s34 = sphi 0, %s32
      %s46 = sphi 0, %s48
      %s49 = sphi 0, %s46
      %s50 = sphi 0, %s49
      %s66 = sphi 0, %s50
      %s74 = sphi 0, %s76
      %s77 = sphi 0, %s74
      %s78 = sphi 0, %s77
      %s94 = sphi 0, %s78
      %s102 = sphi 0, %s104
      %s105 = sphi 0, %s102
      %s106 = sphi 0, %s105
      %s122 = sphi 0, %s106
      %s128 = sphi 0, %s130
      %s131 = sphi 0, %s128
      %s132 = sphi 0, %s131
      %s148 = sphi 0, %s132
      %s156 = sphi 0, %s158
      %s159 = sphi 0, %s156
      %s160 = sphi 0, %s159
      %s176 = sphi 0, %s160
    $region4: #{_lambda_.15} parent=1 // loop_header_branch
      %25 = sbr.rel (%p23) target = $region8
    $region5: #{_lambda_.15} parent=1 // loop_body
      %s27 = ssub.s32 %s22, 1
      %s28 = ssub.s32 %s22, 2
      %s35 = sadd.s32 1, %s30
      %p36 = scmp.ge.s32.totalorder %s35, 1
      %s37 = scalar_select %p36, 0, %s35
      %s38 = sadd.s32 1, %s29
      %s39 = scalar_select %p36, %s38, %s29
      %p40 = scmp.ge.s32.totalorder %s39, 2
      %s41 = scalar_select %p40, 0, %s39
      %s42 = ssub.s32 %s29, %s41
      %s43 = ssub.s32 %s30, %s37
      %s44 = sor.u32 %s42, %s43
      %p45 = scmp.eq.s32.totalorder %s44, 0
      %s47 = sadd.s32 %s46, 1
      %s48 = scalar_select %p45, %s46, %s47
      %p51 = pneg %p45
      %p52 = scmp.eq.s32.totalorder %s22, 1
      %p53 = por %p51, %p52
      %p54 = scmp.ne.s32.totalorder %s46, %s49
      %p55 = scmp.eq.s32.totalorder %s22, 0
      %p56 = por %p54, %p55
      %p57 = scmp.ne.s32.totalorder %s46, %s49
      %p58 = scmp.eq.s32.totalorder %s27, 1
      %p59 = por %p57, %p58
      %p60 = scmp.ne.s32.totalorder %s49, %s50
      %p61 = scmp.eq.s32.totalorder %s27, 0
      %p62 = por %p60, %p61
      %p63 = scmp.ne.s32.totalorder %s49, %s50
      %p64 = scmp.eq.s32.totalorder %s28, 1
      %p65 = por %p63, %p64
      %p67 = scmp.ne.s32.totalorder %s50, %s66
      %p68 = scmp.eq.s32.totalorder %s28, 0
      %p69 = por %p67, %p68
      %s70 = ssub.s32 %s29, %s41
      %s71 = ssub.s32 %s30, %s37
      %s72 = sor.u32 %s70, %s71
      %p73 = scmp.eq.s32.totalorder %s72, 0
      %s75 = sadd.s32 %s74, 1
      %s76 = scalar_select %p73, %s74, %s75
      %p79 = pneg %p73
      %p80 = scmp.eq.s32.totalorder %s22, 1
      %p81 = por %p79, %p80
      %p82 = scmp.ne.s32.totalorder %s74, %s77
      %p83 = scmp.eq.s32.totalorder %s22, 0
      %p84 = por %p82, %p83
      %p85 = scmp.ne.s32.totalorder %s74, %s77
      %p86 = scmp.eq.s32.totalorder %s27, 1
      %p87 = por %p85, %p86
      %p88 = scmp.ne.s32.totalorder %s77, %s78
      %p89 = scmp.eq.s32.totalorder %s27, 0
      %p90 = por %p88, %p89
      %p91 = scmp.ne.s32.totalorder %s77, %s78
      %p92 = scmp.eq.s32.totalorder %s28, 1
      %p93 = por %p91, %p92
      %p95 = scmp.ne.s32.totalorder %s78, %s94
      %p96 = scmp.eq.s32.totalorder %s28, 0
      %p97 = por %p95, %p96
      %s98 = ssub.s32 %s29, %s41
      %s99 = ssub.s32 %s30, %s37
      %s100 = sor.u32 %s98, %s99
      %p101 = scmp.eq.s32.totalorder %s100, 0
      %s103 = sadd.s32 %s102, 1
      %s104 = scalar_select %p101, %s102, %s103
      %p107 = pneg %p101
      %p108 = scmp.eq.s32.totalorder %s22, 1
      %p109 = por %p107, %p108
      %p110 = scmp.ne.s32.totalorder %s102, %s105
      %p111 = scmp.eq.s32.totalorder %s22, 0
      %p112 = por %p110, %p111
      %p113 = scmp.ne.s32.totalorder %s102, %s105
      %p114 = scmp.eq.s32.totalorder %s27, 1
      %p115 = por %p113, %p114
      %p116 = scmp.ne.s32.totalorder %s105, %s106
      %p117 = scmp.eq.s32.totalorder %s27, 0
      %p118 = por %p116, %p117
      %p119 = scmp.ne.s32.totalorder %s105, %s106
      %p120 = scmp.eq.s32.totalorder %s28, 1
      %p121 = por %p119, %p120
      %p123 = scmp.ne.s32.totalorder %s106, %s122
      %p124 = scmp.eq.s32.totalorder %s28, 0
      %p125 = por %p123, %p124
      %s126 = ssub.s32 %s29, %s41
      %p127 = scmp.eq.s32.totalorder %s126, 0
      %s129 = sadd.s32 %s128, 1
      %s130 = scalar_select %p127, %s128, %s129
      %p133 = pneg %p127
      %p134 = scmp.eq.s32.totalorder %s22, 1
      %p135 = por %p133, %p134
      %p136 = scmp.ne.s32.totalorder %s128, %s131
      %p137 = scmp.eq.s32.totalorder %s22, 0
      %p138 = por %p136, %p137
      %p139 = scmp.ne.s32.totalorder %s128, %s131
      %p140 = scmp.eq.s32.totalorder %s27, 1
      %p141 = por %p139, %p140
      %p142 = scmp.ne.s32.totalorder %s131, %s132
      %p143 = scmp.eq.s32.totalorder %s27, 0
      %p144 = por %p142, %p143
      %p145 = scmp.ne.s32.totalorder %s131, %s132
      %p146 = scmp.eq.s32.totalorder %s28, 1
      %p147 = por %p145, %p146
      %p149 = scmp.ne.s32.totalorder %s132, %s148
      %p150 = scmp.eq.s32.totalorder %s28, 0
      %p151 = por %p149, %p150
      %s152 = ssub.s32 %s29, %s41
      %s153 = ssub.s32 %s30, %s37
      %s154 = sor.u32 %s152, %s153
      %p155 = scmp.eq.s32.totalorder %s154, 0
      %s157 = sadd.s32 %s156, 1
      %s158 = scalar_select %p155, %s156, %s157
      %p161 = pneg %p155
      %p162 = scmp.eq.s32.totalorder %s22, 1
      %p163 = por %p161, %p162
      %p164 = scmp.ne.s32.totalorder %s156, %s159
      %p165 = scmp.eq.s32.totalorder %s22, 0
      %p166 = por %p164, %p165
      %p167 = scmp.ne.s32.totalorder %s156, %s159
      %p168 = scmp.eq.s32.totalorder %s27, 1
      %p169 = por %p167, %p168
      %p170 = scmp.ne.s32.totalorder %s159, %s160
      %p171 = scmp.eq.s32.totalorder %s27, 0
      %p172 = por %p170, %p171
      %p173 = scmp.ne.s32.totalorder %s159, %s160
      %p174 = scmp.eq.s32.totalorder %s28, 1
      %p175 = por %p173, %p174
      %p177 = scmp.ne.s32.totalorder %s160, %s176
      %p178 = scmp.eq.s32.totalorder %s28, 0
      %p179 = por %p177, %p178
      %p180 = scmp.le.s32.totalorder 1, %s22
      %p181 = scmp.lt.s32.totalorder %s22, 3
      %p182 = pnand %p180, %p181
      %p183 = pneg %p182
      // Predicated region
      $region9: #{_lambda_.15} parent=5 // pred_check
        _
      $region10: #{_lambda_.15} parent=5 // pred_check_branch
        %185 = sbr.rel (%p182) target = $region12
      $region11: #{_lambda_.15} parent=5 // pred_region
        %s186 = ssub.s32 %s22, 1
      $region12: #{_lambda_.15} parent=5 // pred_fallthru
        _
      %p187 = scmp.lt.s32.totalorder %s22, 2
      // Predicated region
      $region13: #{_lambda_.15} parent=5 // pred_check
        %p188 = pneg %p187
      $region14: #{_lambda_.15} parent=5 // pred_check_branch
        %190 = sbr.rel (%p188) target = $region16
      $region15: #{_lambda_.15} parent=5 // pred_region
        // Predicated region
        $region17: #{_lambda_.15} parent=15 // pred_check
          %p191 = pneg %p56
        $region18: #{_lambda_.15} parent=15 // pred_check_branch
          %193 = sbr.rel (%p191) target = $region20
        $region19: #{_lambda_.15} parent=15 // pred_region
          %s194 = sand.u32 %s46, 1
          %s195 = scalar_lea.sflag [#allocation3], %s194
          %s196 = sand.u32 %s46, 1
          %s197 = smul.addr %s196, 4
          %s198 = scalar_lea.vmem [#allocation2], %s197
          %s200 = ssub.s32 64, 64
          %201 = vsyncadd %s195, %s200
          %s202 = sadd.s32 %s30, %s29
          %s203 = smul.addr %s202, 64
          %s204 = scalar_lea.hbm %s0, %s203
          %s206 = sshll.u32 %s198, 4
          %s207 = int_to_ptr.vmem [resolvable:$true] %s206
          %209 = dma.hbm_to_vmem [thread:$0]  %s204, 64, %s207, %s195
        $region20: #{_lambda_.15} parent=15 // pred_fallthru
          _
        // Predicated region
        $region21: #{_lambda_.15} parent=15 // pred_check
          %p210 = pneg %p84
        $region22: #{_lambda_.15} parent=15 // pred_check_branch
          %212 = sbr.rel (%p210) target = $region24
        $region23: #{_lambda_.15} parent=15 // pred_region
          %s213 = sand.u32 %s22, 1
          %s214 = scalar_lea.sflag [#allocation6], %s213
          %s215 = sand.u32 %s74, 1
          %s216 = smul.addr %s215, 4
          %s217 = scalar_lea.vmem [#allocation5], %s216
          %s219 = ssub.s32 64, 64
          %220 = vsyncadd %s214, %s219
          %s221 = sadd.s32 %s30, %s29
          %s222 = sadd.s32 %s221, 2
          %s223 = smul.addr %s222, 64
          %s224 = scalar_lea.hbm %s1, %s223
          %s226 = sshll.u32 %s217, 4
          %s227 = int_to_ptr.vmem [resolvable:$true] %s226
          %229 = dma.hbm_to_vmem [thread:$0]  %s224, 64, %s227, %s214
        $region24: #{_lambda_.15} parent=15 // pred_fallthru
          _
        // Predicated region
        $region25: #{_lambda_.15} parent=15 // pred_check
          %p230 = pneg %p112
        $region26: #{_lambda_.15} parent=15 // pred_check_branch
          %232 = sbr.rel (%p230) target = $region28
        $region27: #{_lambda_.15} parent=15 // pred_region
          %s233 = sand.u32 %s22, 1
          %s234 = scalar_lea.sflag [#allocation6], %s233
          %s235 = sand.u32 %s102, 1
          %s236 = smul.addr %s235, 4
          %s237 = scalar_lea.vmem [#allocation7], %s236
          %s239 = ssub.s32 64, 64
          %240 = vsyncadd %s234, %s239
          %s241 = sadd.s32 %s30, %s29
          %s242 = sadd.s32 %s241, 4
          %s243 = smul.addr %s242, 64
          %s244 = scalar_lea.hbm %s2, %s243
          %s246 = sshll.u32 %s237, 4
          %s247 = int_to_ptr.vmem [resolvable:$true] %s246
          %249 = dma.hbm_to_vmem [thread:$0]  %s244, 64, %s247, %s234
        $region28: #{_lambda_.15} parent=15 // pred_fallthru
          _
        // Predicated region
        $region29: #{_lambda_.15} parent=15 // pred_check
          %p250 = pneg %p138
        $region30: #{_lambda_.15} parent=15 // pred_check_branch
          %252 = sbr.rel (%p250) target = $region32
        $region31: #{_lambda_.15} parent=15 // pred_region
          %s253 = sand.u32 %s128, 1
          %s254 = scalar_lea.sflag [#allocation9], %s253
          %s255 = sand.u32 %s128, 1
          %s256 = scalar_lea.vmem [#allocation8], %s255
          %s258 = ssub.s32 16, 16
          %259 = vsyncadd %s254, %s258
          %s260 = smul.addr %s29, 16
          %s261 = scalar_lea.hbm %s3, %s260
          %s263 = sshll.u32 %s256, 4
          %s264 = int_to_ptr.vmem [resolvable:$true] %s263
          %266 = dma.hbm_to_vmem [thread:$0]  %s261, 16, %s264, %s254
        $region32: #{_lambda_.15} parent=15 // pred_fallthru
          _
      $region16: #{_lambda_.15} parent=5 // pred_fallthru
        _
      %p267 = scmp.le.s32.totalorder 1, %s22
      %p268 = scmp.lt.s32.totalorder %s22, 3
      %p269 = pnand %p267, %p268
      %p270 = pneg %p269
      // Predicated region
      $region33: #{_lambda_.15} parent=5 // pred_check
        _
      $region34: #{_lambda_.15} parent=5 // pred_check_branch
        %272 = sbr.rel (%p269) target = $region36
      $region35: #{_lambda_.15} parent=5 // pred_region
        %s273 = ssub.s32 %s22, 1
        %s274 = sand.u32 %s49, 1
        %s275 = scalar_lea.sflag [#allocation3], %s274
        %s276 = sand.u32 %s49, 1
        %s277 = smul.addr %s276, 4
        %s278 = scalar_lea.vmem [#allocation2], %s277
        // Predicated region
        $region37: #{_lambda_.15} parent=35 // pred_check
          %p279 = pneg %p62
        $region38: #{_lambda_.15} parent=35 // pred_check_branch
          %281 = sbr.rel (%p279) target = $region40
        $region39: #{_lambda_.15} parent=35 // pred_region
          %282 = dma.done %s275, 64
        $region40: #{_lambda_.15} parent=35 // pred_fallthru
          _
        %s283 = sand.u32 %s27, 1
        %s284 = scalar_lea.sflag [#allocation6], %s283
        %s285 = sand.u32 %s77, 1
        %s286 = smul.addr %s285, 4
        %s287 = scalar_lea.vmem [#allocation5], %s286
        // Predicated region
        $region41: #{_lambda_.15} parent=35 // pred_check
          %p288 = pneg %p90
        $region42: #{_lambda_.15} parent=35 // pred_check_branch
          %290 = sbr.rel (%p288) target = $region44
        $region43: #{_lambda_.15} parent=35 // pred_region
          %291 = dma.done %s284, 64
        $region44: #{_lambda_.15} parent=35 // pred_fallthru
          _
        %s292 = sand.u32 %s27, 1
        %s293 = scalar_lea.sflag [#allocation6], %s292
        %s294 = sand.u32 %s105, 1
        %s295 = smul.addr %s294, 4
        %s296 = scalar_lea.vmem [#allocation7], %s295
        // Predicated region
        $region45: #{_lambda_.15} parent=35 // pred_check
          %p297 = pneg %p118
        $region46: #{_lambda_.15} parent=35 // pred_check_branch
          %299 = sbr.rel (%p297) target = $region48
        $region47: #{_lambda_.15} parent=35 // pred_region
          %300 = dma.done %s293, 64
        $region48: #{_lambda_.15} parent=35 // pred_fallthru
          _
        %s301 = sand.u32 %s131, 1
        %s302 = scalar_lea.sflag [#allocation9], %s301
        %s303 = sand.u32 %s131, 1
        %s304 = scalar_lea.vmem [#allocation8], %s303
        // Predicated region
        $region49: #{_lambda_.15} parent=35 // pred_check
          %p305 = pneg %p144
        $region50: #{_lambda_.15} parent=35 // pred_check_branch
          %307 = sbr.rel (%p305) target = $region52
        $region51: #{_lambda_.15} parent=35 // pred_region
          %308 = dma.done %s302, 16
        $region52: #{_lambda_.15} parent=35 // pred_fallthru
          _
        %s309 = sand.u32 %s49, 1
        %s310 = scalar_lea.sflag [#allocation3], %s309
        %s311 = sand.u32 %s49, 1
        %s312 = smul.addr %s311, 4
        %s313 = scalar_lea.vmem [#allocation2], %s312
        %p314 = pneg %p62
        %p315 = pneg %p59
        %s316 = sand.u32 %s27, 1
        %s317 = scalar_lea.sflag [#allocation6], %s316
        %s318 = sand.u32 %s77, 1
        %s319 = smul.addr %s318, 4
        %s320 = scalar_lea.vmem [#allocation5], %s319
        %p321 = pneg %p90
        %p322 = pneg %p87
        %s323 = sand.u32 %s27, 1
        %s324 = scalar_lea.sflag [#allocation6], %s323
        %s325 = sand.u32 %s105, 1
        %s326 = smul.addr %s325, 4
        %s327 = scalar_lea.vmem [#allocation7], %s326
        %p328 = pneg %p118
        %p329 = pneg %p115
        %s330 = sand.u32 %s131, 1
        %s331 = scalar_lea.sflag [#allocation9], %s330
        %s332 = sand.u32 %s131, 1
        %s333 = scalar_lea.vmem [#allocation8], %s332
        %p334 = pneg %p144
        %p335 = pneg %p141
        %p336 = pneg %p172
        %p337 = pneg %p169
        %s338 = sand.u32 %s159, 1
        %s339 = scalar_lea.sflag [#allocation4], %s338
        %s340 = sand.u32 %s159, 1
        %s341 = smul.addr %s340, 4
        %s342 = scalar_lea.vmem [#allocation10], %s341
        %v344 = vld [vmem:[%s278] sm:$0xf]
        %v345 = vld [vmem:[%s287] sm:$0xf]
        %v346 = vld [vmem:[%s296] sm:$0xf]
        %v347 = vld [vmem:[%s304] sm:$0x1]
        %vm348 = vcmask 130048
        %v350 = vsel %vm348, %v344, 0
        %v353 = vsel %vm348, %v345, 0
        %355 = vmatprep.subr.bf16.mxu0 0
        %356 = vmatpush1.bf16.xpose.msra.mxu0 %v353
        %357 = vmatprep.subr.bf16.mxu0 0
        %358 = vmatpush1.bf16.xpose.msra.mxu0 0
        %359 = vmatprep.subr.bf16.mxu0 0
        %360 = vmatpush1.bf16.xpose.msra.mxu0 0
        %361 = vmatprep.subr.bf16.mxu0 0
        %362 = vmatpush1.bf16.xpose.msra.mxu0 0
        %363 = vmatprep.subr.bf16.mxu0 0
        %364 = vmatpush1.bf16.xpose.msra.mxu0 0
        %365 = vmatprep.subr.bf16.mxu0 0
        %366 = vmatpush1.bf16.xpose.msra.mxu0 0
        %367 = vmatprep.subr.bf16.mxu0 0
        %368 = vmatpush1.bf16.xpose.msra.mxu0 0
        %369 = vmatprep.subr.bf16.mxu0 0
        %370 = vmatpush1.bf16.xpose.msra.mxu0 0
        %371 = vmatprep.subr.bf16.mxu0 0
        %372 = vmatpush1.bf16.xpose.msra.mxu0 0
        %373 = vmatprep.subr.bf16.mxu0 0
        %374 = vmatpush1.bf16.xpose.msra.mxu0 0
        %375 = vmatprep.subr.bf16.mxu0 0
        %376 = vmatpush1.bf16.xpose.msra.mxu0 0
        %377 = vmatprep.subr.bf16.mxu0 0
        %378 = vmatpush1.bf16.xpose.msra.mxu0 0
        %379 = vmatprep.subr.bf16.mxu0 0
        %380 = vmatpush1.bf16.xpose.msra.mxu0 0
        %381 = vmatprep.subr.bf16.mxu0 0
        %382 = vmatpush1.bf16.xpose.msra.mxu0 0
        %383 = vmatprep.subr.bf16.mxu0 0
        %384 = vmatpush1.bf16.xpose.msra.mxu0 0
        %385 = vmatprep.subr.bf16.mxu0 0
        %386 = vmatpush1.bf16.xpose.msra.mxu0 0
        %387 = vmatprep.mubr.bf16.mxu0 0
        %388 = vmatmul.mubr.bf16.gmra.mrb[0].mxu0 %v350
        %v389 = vpop.f32.mrb[0].mxu0
        %v390 = vadd.f32 0.0, %v389
        %v391 = vpop.f32.mrb[0].mxu0
        %v392 = vpop.f32.mrb[0].mxu0
        %v393 = vpop.f32.mrb[0].mxu0
        %394 = vdwg.mxu0
        %v395 = vmul.f32 %v390, 0.25
        %v397 = vlaneseq
        %v398 = vshrl.u32 %v397, 7
        %v399 = vsub.s32 0, %v398
        %v400 = vrot.slane %v347, %v399
        %v402 = vadd.f32 %v395, %v400
        %vm403 = vcmask 64512
        %v404 = vsel %vm403, %v402, -inf
        %405 = vmax.xlane.f32.xlu0 %v404
        %v406 = vpop.xlane.xlu0 %405
        %v407 = vsub.f32 %v402, %v406
        %v408 = vmul.f32 %v407, 1.442695
        %v409 = vpow.pop %v408
        %v410 = vsel %vm403, %v409, 0.0
        %411 = vadd.xlane.f32.xlu0 %v410
        %v412 = vpop.xlane.xlu0 %411
        %v413 = vrcp.pop %v412
        %v414 = vmul.f32 %v409, %v413
        %v415 = vpack.c.bf16 %v414, %v414
        %v417 = vsel %vm403, %v415, 0
        %vm419 = vcmask 1043456
        %v421 = vsel %vm419, %v346, 0
        %423 = vmatprep.subr.bf16.mxu0 0
        %424 = vmatpush1.bf16.msra.mxu0 %v421
        %425 = vmatprep.subr.bf16.mxu0 0
        %426 = vmatpush1.bf16.msra.mxu0 0
        %427 = vmatprep.subr.bf16.mxu0 0
        %428 = vmatpush1.bf16.msra.mxu0 0
        %429 = vmatprep.subr.bf16.mxu0 0
        %430 = vmatpush1.bf16.msra.mxu0 0
        %431 = vmatprep.subr.bf16.mxu0 0
        %432 = vmatpush1.bf16.msra.mxu0 0
        %433 = vmatprep.subr.bf16.mxu0 0
        %434 = vmatpush1.bf16.msra.mxu0 0
        %435 = vmatprep.subr.bf16.mxu0 0
        %436 = vmatpush1.bf16.msra.mxu0 0
        %437 = vmatprep.subr.bf16.mxu0 0
        %438 = vmatpush1.bf16.msra.mxu0 0
        %439 = vmatprep.subr.bf16.mxu0 0
        %440 = vmatpush1.bf16.msra.mxu0 0
        %441 = vmatprep.subr.bf16.mxu0 0
        %442 = vmatpush1.bf16.msra.mxu0 0
        %443 = vmatprep.subr.bf16.mxu0 0
        %444 = vmatpush1.bf16.msra.mxu0 0
        %445 = vmatprep.subr.bf16.mxu0 0
        %446 = vmatpush1.bf16.msra.mxu0 0
        %447 = vmatprep.subr.bf16.mxu0 0
        %448 = vmatpush1.bf16.msra.mxu0 0
        %449 = vmatprep.subr.bf16.mxu0 0
        %450 = vmatpush1.bf16.msra.mxu0 0
        %451 = vmatprep.subr.bf16.mxu0 0
        %452 = vmatpush1.bf16.msra.mxu0 0
        %453 = vmatprep.subr.bf16.mxu0 0
        %454 = vmatpush1.bf16.msra.mxu0 0
        %455 = vmatprep.mubr.bf16.mxu0 0
        %456 = vmatmul.mubr.bf16.gmra.mrb[0].mxu0 %v417
        %v457 = vpop.f32.mrb[0].mxu0
        %v458 = vadd.f32 0.0, %v457
        %v459 = vpop.f32.mrb[0].mxu0
        %v460 = vpop.f32.mrb[0].mxu0
        %v461 = vpop.f32.mrb[0].mxu0
        %462 = vdwg.mxu0
        %v464 = vunpack.c.l.b16 %v344
        %v465 = vpack.c.b16 %v464, %v464
        %466 = vrot.lane.b32.xlu0 %v465, 112
        %v467 = vpop.permute.xlu0 %466
        %v469 = vunpack.c.l.b16 %v345
        %v470 = vpack.c.b16 %v469, %v469
        %471 = vrot.lane.b32.xlu0 %v470, 112
        %v472 = vpop.permute.xlu0 %471
        %v474 = vsel %vm348, %v467, 0
        %v477 = vsel %vm348, %v472, 0
        %479 = vmatprep.subr.bf16.mxu0 0
        %480 = vmatpush1.bf16.xpose.msra.mxu0 %v477
        %481 = vmatprep.subr.bf16.mxu0 0
        %482 = vmatpush1.bf16.xpose.msra.mxu0 0
        %483 = vmatprep.subr.bf16.mxu0 0
        %484 = vmatpush1.bf16.xpose.msra.mxu0 0
        %485 = vmatprep.subr.bf16.mxu0 0
        %486 = vmatpush1.bf16.xpose.msra.mxu0 0
        %487 = vmatprep.subr.bf16.mxu0 0
        %488 = vmatpush1.bf16.xpose.msra.mxu0 0
        %489 = vmatprep.subr.bf16.mxu0 0
        %490 = vmatpush1.bf16.xpose.msra.mxu0 0
        %491 = vmatprep.subr.bf16.mxu0 0
        %492 = vmatpush1.bf16.xpose.msra.mxu0 0
        %493 = vmatprep.subr.bf16.mxu0 0
        %494 = vmatpush1.bf16.xpose.msra.mxu0 0
        %495 = vmatprep.subr.bf16.mxu0 0
        %496 = vmatpush1.bf16.xpose.msra.mxu0 0
        %497 = vmatprep.subr.bf16.mxu0 0
        %498 = vmatpush1.bf16.xpose.msra.mxu0 0
        %499 = vmatprep.subr.bf16.mxu0 0
        %500 = vmatpush1.bf16.xpose.msra.mxu0 0
        %501 = vmatprep.subr.bf16.mxu0 0
        %502 = vmatpush1.bf16.xpose.msra.mxu0 0
        %503 = vmatprep.subr.bf16.mxu0 0
        %504 = vmatpush1.bf16.xpose.msra.mxu0 0
        %505 = vmatprep.subr.bf16.mxu0 0
        %506 = vmatpush1.bf16.xpose.msra.mxu0 0
        %507 = vmatprep.subr.bf16.mxu0 0
        %508 = vmatpush1.bf16.xpose.msra.mxu0 0
        %509 = vmatprep.subr.bf16.mxu0 0
        %510 = vmatpush1.bf16.xpose.msra.mxu0 0
        %511 = vmatprep.mubr.bf16.mxu0 0
        %512 = vmatmul.mubr.bf16.gmra.mrb[0].mxu0 %v474
        %v513 = vpop.f32.mrb[0].mxu0
        %v514 = vadd.f32 0.0, %v513
        %v515 = vpop.f32.mrb[0].mxu0
        %v516 = vpop.f32.mrb[0].mxu0
        %v517 = vpop.f32.mrb[0].mxu0
        %518 = vdwg.mxu0
        %v519 = vmul.f32 %v514, 0.25
        %v520 = vadd.f32 %v519, %v400
        %v521 = vsel %vm403, %v520, -inf
        %522 = vmax.xlane.f32.xlu0 %v521
        %v523 = vpop.xlane.xlu0 %522
        %v524 = vsub.f32 %v520, %v523
        %v525 = vmul.f32 %v524, 1.442695
        %v526 = vpow.pop %v525
        %v527 = vsel %vm403, %v526, 0.0
        %528 = vadd.xlane.f32.xlu0 %v527
        %v529 = vpop.xlane.xlu0 %528
        %v530 = vrcp.pop %v529
        %v531 = vmul.f32 %v526, %v530
        %v532 = vpack.c.bf16 %v531, %v531
        %v534 = vunpack.c.l.b16 %v346
        %v535 = vpack.c.b16 %v534, %v534
        %536 = vrot.lane.b32.xlu0 %v535, 112
        %v537 = vpop.permute.xlu0 %536
        %v539 = vsel %vm403, %v532, 0
        %v542 = vsel %vm419, %v537, 0
        %544 = vmatprep.subr.bf16.mxu0 0
        %545 = vmatpush1.bf16.msra.mxu0 %v542
        %546 = vmatprep.subr.bf16.mxu0 0
        %547 = vmatpush1.bf16.msra.mxu0 0
        %548 = vmatprep.subr.bf16.mxu0 0
        %549 = vmatpush1.bf16.msra.mxu0 0
        %550 = vmatprep.subr.bf16.mxu0 0
        %551 = vmatpush1.bf16.msra.mxu0 0
        %552 = vmatprep.subr.bf16.mxu0 0
        %553 = vmatpush1.bf16.msra.mxu0 0
        %554 = vmatprep.subr.bf16.mxu0 0
        %555 = vmatpush1.bf16.msra.mxu0 0
        %556 = vmatprep.subr.bf16.mxu0 0
        %557 = vmatpush1.bf16.msra.mxu0 0
        %558 = vmatprep.subr.bf16.mxu0 0
        %559 = vmatpush1.bf16.msra.mxu0 0
        %560 = vmatprep.subr.bf16.mxu0 0
        %561 = vmatpush1.bf16.msra.mxu0 0
        %562 = vmatprep.subr.bf16.mxu0 0
        %563 = vmatpush1.bf16.msra.mxu0 0
        %564 = vmatprep.subr.bf16.mxu0 0
        %565 = vmatpush1.bf16.msra.mxu0 0
        %566 = vmatprep.subr.bf16.mxu0 0
        %567 = vmatpush1.bf16.msra.mxu0 0
        %568 = vmatprep.subr.bf16.mxu0 0
        %569 = vmatpush1.bf16.msra.mxu0 0
        %570 = vmatprep.subr.bf16.mxu0 0
        %571 = vmatpush1.bf16.msra.mxu0 0
        %572 = vmatprep.subr.bf16.mxu0 0
        %573 = vmatpush1.bf16.msra.mxu0 0
        %574 = vmatprep.subr.bf16.mxu0 0
        %575 = vmatpush1.bf16.msra.mxu0 0
        %576 = vmatprep.mubr.bf16.mxu0 0
        %577 = vmatmul.mubr.bf16.gmra.mrb[0].mxu0 %v539
        %v578 = vpop.f32.mrb[0].mxu0
        %v579 = vadd.f32 0.0, %v578
        %v580 = vpop.f32.mrb[0].mxu0
        %v581 = vpop.f32.mrb[0].mxu0
        %v582 = vpop.f32.mrb[0].mxu0
        %583 = vdwg.mxu0
        %584 = vrot.lane.b32.xlu0 %v465, 96
        %v585 = vpop.permute.xlu0 %584
        %586 = vrot.lane.b32.xlu0 %v470, 96
        %v587 = vpop.permute.xlu0 %586
        %v589 = vsel %vm348, %v585, 0
        %v592 = vsel %vm348, %v587, 0
        %594 = vmatprep.subr.bf16.mxu0 0
        %595 = vmatpush1.bf16.xpose.msra.mxu0 %v592
        %596 = vmatprep.subr.bf16.mxu0 0
        %597 = vmatpush1.bf16.xpose.msra.mxu0 0
        %598 = vmatprep.subr.bf16.mxu0 0
        %599 = vmatpush1.bf16.xpose.msra.mxu0 0
        %600 = vmatprep.subr.bf16.mxu0 0
        %601 = vmatpush1.bf16.xpose.msra.mxu0 0
        %602 = vmatprep.subr.bf16.mxu0 0
        %603 = vmatpush1.bf16.xpose.msra.mxu0 0
        %604 = vmatprep.subr.bf16.mxu0 0
        %605 = vmatpush1.bf16.xpose.msra.mxu0 0
        %606 = vmatprep.subr.bf16.mxu0 0
        %607 = vmatpush1.bf16.xpose.msra.mxu0 0
        %608 = vmatprep.subr.bf16.mxu0 0
        %609 = vmatpush1.bf16.xpose.msra.mxu0 0
        %610 = vmatprep.subr.bf16.mxu0 0
        %611 = vmatpush1.bf16.xpose.msra.mxu0 0
        %612 = vmatprep.subr.bf16.mxu0 0
        %613 = vmatpush1.bf16.xpose.msra.mxu0 0
        %614 = vmatprep.subr.bf16.mxu0 0
        %615 = vmatpush1.bf16.xpose.msra.mxu0 0
        %616 = vmatprep.subr.bf16.mxu0 0
        %617 = vmatpush1.bf16.xpose.msra.mxu0 0
        %618 = vmatprep.subr.bf16.mxu0 0
        %619 = vmatpush1.bf16.xpose.msra.mxu0 0
        %620 = vmatprep.subr.bf16.mxu0 0
        %621 = vmatpush1.bf16.xpose.msra.mxu0 0
        %622 = vmatprep.subr.bf16.mxu0 0
        %623 = vmatpush1.bf16.xpose.msra.mxu0 0
        %624 = vmatprep.subr.bf16.mxu0 0
        %625 = vmatpush1.bf16.xpose.msra.mxu0 0
        %626 = vmatprep.mubr.bf16.mxu0 0
        %627 = vmatmul.mubr.bf16.gmra.mrb[0].mxu0 %v589
        %v628 = vpop.f32.mrb[0].mxu0
        %v629 = vadd.f32 0.0, %v628
        %v630 = vpop.f32.mrb[0].mxu0
        %v631 = vpop.f32.mrb[0].mxu0
        %v632 = vpop.f32.mrb[0].mxu0
        %633 = vdwg.mxu0
        %v634 = vmul.f32 %v629, 0.25
        %v635 = vadd.f32 %v634, %v400
        %v636 = vsel %vm403, %v635, -inf
        %637 = vmax.xlane.f32.xlu0 %v636
        %v638 = vpop.xlane.xlu0 %637
        %v639 = vsub.f32 %v635, %v638
        %v640 = vmul.f32 %v639, 1.442695
        %v641 = vpow.pop %v640
        %v642 = vsel %vm403, %v641, 0.0
        %643 = vadd.xlane.f32.xlu0 %v642
        %v644 = vpop.xlane.xlu0 %643
        %v645 = vrcp.pop %v644
        %v646 = vmul.f32 %v641, %v645
        %v647 = vpack.c.bf16 %v646, %v646
        %648 = vrot.lane.b32.xlu0 %v535, 96
        %v649 = vpop.permute.xlu0 %648
        %v651 = vsel %vm403, %v647, 0
        %v654 = vsel %vm419, %v649, 0
        %656 = vmatprep.subr.bf16.mxu0 0
        %657 = vmatpush1.bf16.msra.mxu0 %v654
        %658 = vmatprep.subr.bf16.mxu0 0
        %659 = vmatpush1.bf16.msra.mxu0 0
        %660 = vmatprep.subr.bf16.mxu0 0
        %661 = vmatpush1.bf16.msra.mxu0 0
        %662 = vmatprep.subr.bf16.mxu0 0
        %663 = vmatpush1.bf16.msra.mxu0 0
        %664 = vmatprep.subr.bf16.mxu0 0
        %665 = vmatpush1.bf16.msra.mxu0 0
        %666 = vmatprep.subr.bf16.mxu0 0
        %667 = vmatpush1.bf16.msra.mxu0 0
        %668 = vmatprep.subr.bf16.mxu0 0
        %669 = vmatpush1.bf16.msra.mxu0 0
        %670 = vmatprep.subr.bf16.mxu0 0
        %671 = vmatpush1.bf16.msra.mxu0 0
        %672 = vmatprep.subr.bf16.mxu0 0
        %673 = vmatpush1.bf16.msra.mxu0 0
        %674 = vmatprep.subr.bf16.mxu0 0
        %675 = vmatpush1.bf16.msra.mxu0 0
        %676 = vmatprep.subr.bf16.mxu0 0
        %677 = vmatpush1.bf16.msra.mxu0 0
        %678 = vmatprep.subr.bf16.mxu0 0
        %679 = vmatpush1.bf16.msra.mxu0 0
        %680 = vmatprep.subr.bf16.mxu0 0
        %681 = vmatpush1.bf16.msra.mxu0 0
        %682 = vmatprep.subr.bf16.mxu0 0
        %683 = vmatpush1.bf16.msra.mxu0 0
        %684 = vmatprep.subr.bf16.mxu0 0
        %685 = vmatpush1.bf16.msra.mxu0 0
        %686 = vmatprep.subr.bf16.mxu0 0
        %687 = vmatpush1.bf16.msra.mxu0 0
        %688 = vmatprep.mubr.bf16.mxu0 0
        %689 = vmatmul.mubr.bf16.gmra.mrb[0].mxu0 %v651
        %v690 = vpop.f32.mrb[0].mxu0
        %v691 = vadd.f32 0.0, %v690
        %v692 = vpop.f32.mrb[0].mxu0
        %v693 = vpop.f32.mrb[0].mxu0
        %v694 = vpop.f32.mrb[0].mxu0
        %695 = vdwg.mxu0
        %696 = vrot.lane.b32.xlu0 %v465, 80
        %v697 = vpop.permute.xlu0 %696
        %698 = vrot.lane.b32.xlu0 %v470, 80
        %v699 = vpop.permute.xlu0 %698
        %v701 = vsel %vm348, %v697, 0
        %v704 = vsel %vm348, %v699, 0
        %706 = vmatprep.subr.bf16.mxu0 0
        %707 = vmatpush1.bf16.xpose.msra.mxu0 %v704
        %708 = vmatprep.subr.bf16.mxu0 0
        %709 = vmatpush1.bf16.xpose.msra.mxu0 0
        %710 = vmatprep.subr.bf16.mxu0 0
        %711 = vmatpush1.bf16.xpose.msra.mxu0 0
        %712 = vmatprep.subr.bf16.mxu0 0
        %713 = vmatpush1.bf16.xpose.msra.mxu0 0
        %714 = vmatprep.subr.bf16.mxu0 0
        %715 = vmatpush1.bf16.xpose.msra.mxu0 0
        %716 = vmatprep.subr.bf16.mxu0 0
        %717 = vmatpush1.bf16.xpose.msra.mxu0 0
        %718 = vmatprep.subr.bf16.mxu0 0
        %719 = vmatpush1.bf16.xpose.msra.mxu0 0
        %720 = vmatprep.subr.bf16.mxu0 0
        %721 = vmatpush1.bf16.xpose.msra.mxu0 0
        %722 = vmatprep.subr.bf16.mxu0 0
        %723 = vmatpush1.bf16.xpose.msra.mxu0 0
        %724 = vmatprep.subr.bf16.mxu0 0
        %725 = vmatpush1.bf16.xpose.msra.mxu0 0
        %726 = vmatprep.subr.bf16.mxu0 0
        %727 = vmatpush1.bf16.xpose.msra.mxu0 0
        %728 = vmatprep.subr.bf16.mxu0 0
        %729 = vmatpush1.bf16.xpose.msra.mxu0 0
        %730 = vmatprep.subr.bf16.mxu0 0
        %731 = vmatpush1.bf16.xpose.msra.mxu0 0
        %732 = vmatprep.subr.bf16.mxu0 0
        %733 = vmatpush1.bf16.xpose.msra.mxu0 0
        %734 = vmatprep.subr.bf16.mxu0 0
        %735 = vmatpush1.bf16.xpose.msra.mxu0 0
        %736 = vmatprep.subr.bf16.mxu0 0
        %737 = vmatpush1.bf16.xpose.msra.mxu0 0
        %738 = vmatprep.mubr.bf16.mxu0 0
        %739 = vmatmul.mubr.bf16.gmra.mrb[0].mxu0 %v701
        %v740 = vpop.f32.mrb[0].mxu0
        %v741 = vadd.f32 0.0, %v740
        %v742 = vpop.f32.mrb[0].mxu0
        %v743 = vpop.f32.mrb[0].mxu0
        %v744 = vpop.f32.mrb[0].mxu0
        %745 = vdwg.mxu0
        %v746 = vmul.f32 %v741, 0.25
        %v747 = vadd.f32 %v746, %v400
        %v748 = vsel %vm403, %v747, -inf
        %749 = vmax.xlane.f32.xlu0 %v748
        %v750 = vpop.xlane.xlu0 %749
        %v751 = vsub.f32 %v747, %v750
        %v752 = vmul.f32 %v751, 1.442695
        %v753 = vpow.pop %v752
        %v754 = vsel %vm403, %v753, 0.0
        %755 = vadd.xlane.f32.xlu0 %v754
        %v756 = vpop.xlane.xlu0 %755
        %v757 = vrcp.pop %v756
        %v758 = vmul.f32 %v753, %v757
        %v759 = vpack.c.bf16 %v758, %v758
        %760 = vrot.lane.b32.xlu0 %v535, 80
        %v761 = vpop.permute.xlu0 %760
        %v763 = vsel %vm403, %v759, 0
        %v766 = vsel %vm419, %v761, 0
        %768 = vmatprep.subr.bf16.mxu0 0
        %769 = vmatpush1.bf16.msra.mxu0 %v766
        %770 = vmatprep.subr.bf16.mxu0 0
        %771 = vmatpush1.bf16.msra.mxu0 0
        %772 = vmatprep.subr.bf16.mxu0 0
        %773 = vmatpush1.bf16.msra.mxu0 0
        %774 = vmatprep.subr.bf16.mxu0 0
        %775 = vmatpush1.bf16.msra.mxu0 0
        %776 = vmatprep.subr.bf16.mxu0 0
        %777 = vmatpush1.bf16.msra.mxu0 0
        %778 = vmatprep.subr.bf16.mxu0 0
        %779 = vmatpush1.bf16.msra.mxu0 0
        %780 = vmatprep.subr.bf16.mxu0 0
        %781 = vmatpush1.bf16.msra.mxu0 0
        %782 = vmatprep.subr.bf16.mxu0 0
        %783 = vmatpush1.bf16.msra.mxu0 0
        %784 = vmatprep.subr.bf16.mxu0 0
        %785 = vmatpush1.bf16.msra.mxu0 0
        %786 = vmatprep.subr.bf16.mxu0 0
        %787 = vmatpush1.bf16.msra.mxu0 0
        %788 = vmatprep.subr.bf16.mxu0 0
        %789 = vmatpush1.bf16.msra.mxu0 0
        %790 = vmatprep.subr.bf16.mxu0 0
        %791 = vmatpush1.bf16.msra.mxu0 0
        %792 = vmatprep.subr.bf16.mxu0 0
        %793 = vmatpush1.bf16.msra.mxu0 0
        %794 = vmatprep.subr.bf16.mxu0 0
        %795 = vmatpush1.bf16.msra.mxu0 0
        %796 = vmatprep.subr.bf16.mxu0 0
        %797 = vmatpush1.bf16.msra.mxu0 0
        %798 = vmatprep.subr.bf16.mxu0 0
        %799 = vmatpush1.bf16.msra.mxu0 0
        %800 = vmatprep.mubr.bf16.mxu0 0
        %801 = vmatmul.mubr.bf16.gmra.mrb[0].mxu0 %v763
        %v802 = vpop.f32.mrb[0].mxu0
        %v803 = vadd.f32 0.0, %v802
        %v804 = vpop.f32.mrb[0].mxu0
        %v805 = vpop.f32.mrb[0].mxu0
        %v806 = vpop.f32.mrb[0].mxu0
        %807 = vdwg.mxu0
        %809 = vrot.lane.b32.xlu0 %v579, 16
        %v810 = vpop.permute.xlu0 %809
        %813 = vrot.lane.b32.xlu0 %v691, 32
        %v814 = vpop.permute.xlu0 %813
        %817 = vrot.lane.b32.xlu0 %v803, 48
        %v818 = vpop.permute.xlu0 %817
        %v820 = vsel %vm348, %v458, %v810
        %vm821 = vcmask 261120
        %v822 = vsel %vm821, %v820, %v814
        %vm823 = vcmask 392192
        %v824 = vsel %vm823, %v822, %v818
        %v825 = vpack.c.bf16 %v824, %v824
        %vm826 = vcmask 519168
        %827 = vst.msk [vmem:[%s342] sm:$0xf] %vm826, %v825
        %s828 = sand.u32 %s159, 1
        %s829 = scalar_lea.sflag [#allocation4], %s828
        %s830 = sand.u32 %s159, 1
        %s831 = smul.addr %s830, 4
        %s832 = scalar_lea.vmem [#allocation10], %s831
        // Predicated region
        $region53: #{_lambda_.15} parent=35 // pred_check
          %p833 = pneg %p169
        $region54: #{_lambda_.15} parent=35 // pred_check_branch
          %835 = sbr.rel (%p833) target = $region56
        $region55: #{_lambda_.15} parent=35 // pred_region
          %s837 = ssub.s32 64, 64
          %838 = vsyncadd %s829, %s837
          %s839 = sadd.s32 %s32, %s31
          %s840 = smul.addr %s839, 64
          %s841 = scalar_lea.hbm %s4, %s840
          %s843 = sshll.u32 %s832, 4
          %s844 = int_to_ptr.vmem [resolvable:$true] %s843
          %846 = dma.vmem_to_hbm [thread:$0]  %s844, 64, %s841, %s829
        $region56: #{_lambda_.15} parent=35 // pred_fallthru
          _
      $region36: #{_lambda_.15} parent=5 // pred_fallthru
        _
      %p847 = scmp.le.s32.totalorder 2, %s22
      // Predicated region
      $region57: #{_lambda_.15} parent=5 // pred_check
        %p848 = pneg %p847
      $region58: #{_lambda_.15} parent=5 // pred_check_branch
        %850 = sbr.rel (%p848) target = $region60
      $region59: #{_lambda_.15} parent=5 // pred_region
        %s851 = ssub.s32 %s22, 2
        // Predicated region
        $region61: #{_lambda_.15} parent=59 // pred_check
          %p852 = pneg %p175
        $region62: #{_lambda_.15} parent=59 // pred_check_branch
          %854 = sbr.rel (%p852) target = $region64
        $region63: #{_lambda_.15} parent=59 // pred_region
          %s855 = sand.u32 %s160, 1
          %s856 = scalar_lea.sflag [#allocation4], %s855
          %s857 = sand.u32 %s160, 1
          %s858 = smul.addr %s857, 4
          %s859 = scalar_lea.vmem [#allocation10], %s858
          %860 = dma.done %s856, 64
        $region64: #{_lambda_.15} parent=59 // pred_fallthru
          _
      $region60: #{_lambda_.15} parent=5 // pred_fallthru
        _
    $region6: #{_lambda_.15} parent=1 // loop_footer
      %s26 = sadd.s32 1, %s22
    $region7: #{_lambda_.15} parent=1 // loop_footer_branch
      %21 = sbr.rel target = $region3
    $region8: #{_lambda_.15} parent=1 // loop_exit
      _
    %861 = vsyncpa [#allocation3], 1
    %s862 = scalar_lea.sflag [#allocation3], 1
    %863 = vsyncpa %s862, 1
    %864 = vsyncpa [#allocation6], 1
    %s865 = scalar_lea.sflag [#allocation6], 1
    %866 = vsyncpa %s865, 1
    %867 = vsyncpa [#allocation9], 1
    %s868 = scalar_lea.sflag [#allocation9], 1
    %869 = vsyncpa %s868, 1
    %870 = vsyncpa [#allocation4], 1
    %s871 = scalar_lea.sflag [#allocation4], 1
    %872 = vsyncpa %s871, 1

// kernel: _lambda_.17
$region0: #{_lambda_.17}
  #allocation0 [shape = 'u32[]', space=smem, size = 0x4, offset = 0x4, fixed_abs, tag = 'smem constant byte address 0x4 - core index']
  #allocation1 [shape = 'u32[144,128]{1,0:T(1,128)}', space=vmem, size = 0x12000, scoped, tag = 'internal scratch']
  #allocation2 [shape = 'f32[16,256]{1,0:T(8,128)}', space=vmem, size = 0x4000, scoped, tag = 'scratch operand']
  %s0 = inlined_call_operand.hbm [shape: bf16[16,64], index: 0, kind: input, shape index: {}]
  %s1 = inlined_call_operand.hbm [shape: bf16[64,256], index: 1, kind: input, shape index: {}]
  %s2 = inlined_call_operand.hbm [shape: f32[1,256], index: 2, kind: input, shape index: {}]
  %s3 = inlined_call_operand.hbm [shape: bf16[16,256], index: 3, kind: output, shape index: {}]
  %s4 = sld [smem:[#allocation0]]
  $region42: #{_lambda_.17} parent=0
    _
  %s6 = ssub.s32 1, %s4
  %s7 = scalar_select 0, %s6, %s4
  $region1: #{_lambda_.17} parent=0
    #allocation3 [shape = 'u8[4096]{0}', space=vmem, size = 0x1000, scoped, tag = 'input window, operand 0, single buffered']
    #allocation4 [shape = 's32[1]{0}', space=sflag, size = 0x4, scoped, tag = 'scoped memory for _lambda_.17']
    #allocation5 [shape = 's32[1]{0}', space=sflag, size = 0x4, scoped, tag = 'scoped memory for _lambda_.17']
    #allocation6 [shape = 'u8[32768]{0}', space=vmem, size = 0x8000, scoped, tag = 'input window, operand 1, single buffered']
    #allocation7 [shape = 's32[1]{0}', space=sflag, size = 0x4, scoped, tag = 'scoped memory for _lambda_.17']
    #allocation8 [shape = 'u8[1024]{0}', space=vmem, size = 0x400, scoped, tag = 'input window, operand 2, single buffered']
    #allocation9 [shape = 'u8[8192]{0}', space=vmem, size = 0x2000, scoped, tag = 'output window, operand 0, single buffered']
    %8 = vsyncpa [#allocation4], 0
    %9 = vsyncpa [#allocation7], 0
    %10 = vsyncpa [#allocation5], 0
    // Predicated region
    $region2: #{_lambda_.17} parent=1 // pred_check
      _
    $region3: #{_lambda_.17} parent=1 // pred_check_branch
      %12 = sbr.rel (0) target = $region5
    $region4: #{_lambda_.17} parent=1 // pred_region
      %s14 = ssub.s32 128, 128
      %15 = vsyncadd [#allocation4], %s14
      %s16 = sshll.u32 [#allocation3], 4
      %s17 = int_to_ptr.vmem [resolvable:$true] %s16
      %22 = dma.hbm_to_vmem [thread:$0]  %s0, 128, %s17, [#allocation4], 64, 64, 4
    $region5: #{_lambda_.17} parent=1 // pred_fallthru
      _
    // Predicated region
    $region6: #{_lambda_.17} parent=1 // pred_check
      _
    $region7: #{_lambda_.17} parent=1 // pred_check_branch
      %24 = sbr.rel (0) target = $region9
    $region8: #{_lambda_.17} parent=1 // pred_region
      %s26 = ssub.s32 1024, 1024
      %27 = vsyncadd [#allocation7], %s26
      %s28 = sshll.u32 [#allocation6], 4
      %s29 = int_to_ptr.vmem [resolvable:$true] %s28
      %34 = dma.hbm_to_vmem [thread:$0]  %s1, 1024, %s29, [#allocation7], 128, 128, 8
    $region9: #{_lambda_.17} parent=1 // pred_fallthru
      _
    // Predicated region
    $region10: #{_lambda_.17} parent=1 // pred_check
      _
    $region11: #{_lambda_.17} parent=1 // pred_check_branch
      %36 = sbr.rel (0) target = $region13
    $region12: #{_lambda_.17} parent=1 // pred_region
      %s38 = ssub.s32 32, 32
      %39 = vsyncadd [#allocation7], %s38
      %s41 = sshll.u32 [#allocation8], 4
      %s42 = int_to_ptr.vmem [resolvable:$true] %s41
      %44 = dma.hbm_to_vmem [thread:$0]  %s2, 32, %s42, [#allocation7]
    $region13: #{_lambda_.17} parent=1 // pred_fallthru
      _
    // Predicated region
    $region14: #{_lambda_.17} parent=1 // pred_check
      _
    $region15: #{_lambda_.17} parent=1 // pred_check_branch
      %46 = sbr.rel (0) target = $region17
    $region16: #{_lambda_.17} parent=1 // pred_region
      %47 = dma.done [#allocation4], 128
    $region17: #{_lambda_.17} parent=1 // pred_fallthru
      _
    // Predicated region
    $region18: #{_lambda_.17} parent=1 // pred_check
      _
    $region19: #{_lambda_.17} parent=1 // pred_check_branch
      %49 = sbr.rel (0) target = $region21
    $region20: #{_lambda_.17} parent=1 // pred_region
      %50 = dma.done [#allocation7], 1024
    $region21: #{_lambda_.17} parent=1 // pred_fallthru
      _
    // Predicated region
    $region22: #{_lambda_.17} parent=1 // pred_check
      _
    $region23: #{_lambda_.17} parent=1 // pred_check_branch
      %52 = sbr.rel (0) target = $region25
    $region24: #{_lambda_.17} parent=1 // pred_region
      %53 = dma.done [#allocation7], 32
    $region25: #{_lambda_.17} parent=1 // pred_fallthru
      _
    %p55 = scmp.eq.s32.totalorder 0, 0
    // Predicated region
    $region26: #{_lambda_.17} parent=1 // pred_check
      %p56 = pneg %p55
    $region27: #{_lambda_.17} parent=1 // pred_check_branch
      %58 = sbr.rel (%p56) target = $region29
    $region28: #{_lambda_.17} parent=1 // pred_region
      %59 = vst [vmem:[#allocation2] sm:$0xff] 0.0
      %60 = vst [vmem:[#allocation2 + $0x8] sm:$0xff] 0.0
      %61 = vst [vmem:[#allocation2 + $0x10] sm:$0xff] 0.0
      %62 = vst [vmem:[#allocation2 + $0x18] sm:$0xff] 0.0
    $region29: #{_lambda_.17} parent=1 // pred_fallthru
      _
    %v63 = vld [vmem:[#allocation2] sm:$0xff]
    %v64 = vld [vmem:[#allocation2 + $0x8] sm:$0xff]
    %v65 = vld [vmem:[#allocation2 + $0x10] sm:$0xff]
    %v66 = vld [vmem:[#allocation2 + $0x18] sm:$0xff]
    %v67 = vld [vmem:[#allocation3] sm:$0xf]
    %v68 = vld [vmem:[#allocation3 + $0x4] sm:$0xf]
    %v69 = vld [vmem:[#allocation6] sm:$0xff]
    %v70 = vld [vmem:[#allocation6 + $0x8] sm:$0xff]
    %v71 = vld [vmem:[#allocation6 + $0x10] sm:$0xff]
    %v72 = vld [vmem:[#allocation6 + $0x18] sm:$0xff]
    %v73 = vld [vmem:[#allocation6 + $0x20] sm:$0xff]
    %v74 = vld [vmem:[#allocation6 + $0x28] sm:$0xff]
    %v75 = vld [vmem:[#allocation6 + $0x30] sm:$0xff]
    %v76 = vld [vmem:[#allocation6 + $0x38] sm:$0xff]
    %v79 = vunpack.c.l.b16 %v67
    %v80 = vunpack.c.l.b16 %v68
    %v81 = vpack.c.b16 %v80, %v79
    %v90 = vunpack.c.l.b16 %v69
    %v91 = vunpack.c.h.b16 %v69
    %v92 = vunpack.c.l.b16 %v70
    %v93 = vunpack.c.h.b16 %v70
    %v94 = vunpack.c.l.b16 %v71
    %v95 = vunpack.c.h.b16 %v71
    %v96 = vunpack.c.l.b16 %v72
    %v97 = vunpack.c.h.b16 %v72
    %v98 = vunpack.c.l.b16 %v73
    %v99 = vunpack.c.h.b16 %v73
    %v100 = vunpack.c.l.b16 %v74
    %v101 = vunpack.c.h.b16 %v74
    %v102 = vunpack.c.l.b16 %v75
    %v103 = vunpack.c.h.b16 %v75
    %v104 = vunpack.c.l.b16 %v76
    %v105 = vunpack.c.h.b16 %v76
    %v106 = vpack.c.b16 %v92, %v90
    %v107 = vpack.c.b16 %v93, %v91
    %v108 = vpack.c.b16 %v96, %v94
    %v109 = vpack.c.b16 %v97, %v95
    %v110 = vpack.c.b16 %v100, %v98
    %v111 = vpack.c.b16 %v101, %v99
    %v112 = vpack.c.b16 %v104, %v102
    %v113 = vpack.c.b16 %v105, %v103
    %vm122 = vcmask 523264
    %v124 = vsel %vm122, %v81, 0
    %126 = vmatprep.subr.bf16.mxu0 %v107
    %127 = vmatpush1.bf16.msra.mxu0 %v106
    %128 = vmatprep.subr.bf16.mxu0 %v109
    %129 = vmatpush1.bf16.msra.mxu0 %v108
    %130 = vmatprep.subr.bf16.mxu0 %v111
    %131 = vmatpush1.bf16.msra.mxu0 %v110
    %132 = vmatprep.subr.bf16.mxu0 %v113
    %133 = vmatpush1.bf16.msra.mxu0 %v112
    %134 = vmatprep.subr.bf16.mxu0 0
    %135 = vmatpush1.bf16.msra.mxu0 0
    %136 = vmatprep.subr.bf16.mxu0 0
    %137 = vmatpush1.bf16.msra.mxu0 0
    %138 = vmatprep.subr.bf16.mxu0 0
    %139 = vmatpush1.bf16.msra.mxu0 0
    %140 = vmatprep.subr.bf16.mxu0 0
    %141 = vmatpush1.bf16.msra.mxu0 0
    %142 = vmatprep.subr.bf16.mxu0 0
    %143 = vmatpush1.bf16.msra.mxu0 0
    %144 = vmatprep.subr.bf16.mxu0 0
    %145 = vmatpush1.bf16.msra.mxu0 0
    %146 = vmatprep.subr.bf16.mxu0 0
    %147 = vmatpush1.bf16.msra.mxu0 0
    %148 = vmatprep.subr.bf16.mxu0 0
    %149 = vmatpush1.bf16.msra.mxu0 0
    %150 = vmatprep.subr.bf16.mxu0 0
    %151 = vmatpush1.bf16.msra.mxu0 0
    %152 = vmatprep.subr.bf16.mxu0 0
    %153 = vmatpush1.bf16.msra.mxu0 0
    %154 = vmatprep.subr.bf16.mxu0 0
    %155 = vmatpush1.bf16.msra.mxu0 0
    %156 = vmatprep.subr.bf16.mxu0 0
    %157 = vmatpush1.bf16.msra.mxu0 0
    %158 = vmatprep.mubr.bf16.mxu0 0
    %159 = vmatmul.mubr.bf16.gmra.mrb[0].mxu0 %v124
    %v160 = vpop.f32.mrb[0].mxu0
    %v161 = vadd.f32 0.0, %v160
    %v162 = vpop.f32.mrb[0].mxu0
    %v163 = vadd.f32 0.0, %v162
    %v164 = vpop.f32.mrb[0].mxu0
    %v165 = vadd.f32 0.0, %v164
    %v166 = vpop.f32.mrb[0].mxu0
    %v167 = vadd.f32 0.0, %v166
    %168 = vdwg.mxu0
    %v169 = vadd.f32 %v63, %v161
    %v170 = vadd.f32 %v64, %v163
    %v171 = vadd.f32 %v65, %v165
    %v172 = vadd.f32 %v66, %v167
    %173 = vst [vmem:[#allocation2] sm:$0xff] %v169
    %174 = vst [vmem:[#allocation2 + $0x8] sm:$0xff] %v170
    %175 = vst [vmem:[#allocation2 + $0x10] sm:$0xff] %v171
    %176 = vst [vmem:[#allocation2 + $0x18] sm:$0xff] %v172
    // Predicated region
    $region30: #{_lambda_.17} parent=1 // pred_check
      %p177 = pneg %p55
    $region31: #{_lambda_.17} parent=1 // pred_check_branch
      %179 = sbr.rel (%p177) target = $region33
    $region32: #{_lambda_.17} parent=1 // pred_region
      %v180 = vld [vmem:[#allocation2] sm:$0xff]
      %v181 = vld [vmem:[#allocation2 + $0x8] sm:$0xff]
      %v182 = vld [vmem:[#allocation2 + $0x10] sm:$0xff]
      %v183 = vld [vmem:[#allocation2 + $0x18] sm:$0xff]
      %v184 = vld [vmem:[#allocation8] sm:$0x3]
      %v186 = vlaneseq
      %v187 = vshrl.u32 %v186, 7
      %v188 = vsub.s32 0, %v187
      %v189 = vrot.slane %v184, %v188
      %v190 = vlaneseq
      %v191 = vshrl.u32 %v190, 7
      %v192 = vsub.s32 1, %v191
      %v193 = vrot.slane %v184, %v192
      %v196 = vadd.f32 %v180, %v189
      %v197 = vadd.f32 %v181, %v193
      %v198 = vadd.f32 %v182, %v189
      %v199 = vadd.f32 %v183, %v193
      %v200 = vmul.f32 %v196, 0.5
      %v201 = vmul.f32 %v197, 0.5
      %v202 = vmul.f32 %v198, 0.5
      %v203 = vmul.f32 %v199, 0.5
      %v204 = vmul.f32 %v196, 0.044715
      %v205 = vmul.f32 %v197, 0.044715
      %v206 = vmul.f32 %v198, 0.044715
      %v207 = vmul.f32 %v199, 0.044715
      %v208 = vmul.f32 %v204, %v196
      %v209 = vmul.f32 %v205, %v197
      %v210 = vmul.f32 %v206, %v198
      %v211 = vmul.f32 %v207, %v199
      %v212 = vmul.f32 %v208, %v196
      %v213 = vmul.f32 %v209, %v197
      %v214 = vmul.f32 %v210, %v198
      %v215 = vmul.f32 %v211, %v199
      %v216 = vadd.f32 %v196, %v212
      %v217 = vadd.f32 %v197, %v213
      %v218 = vadd.f32 %v198, %v214
      %v219 = vadd.f32 %v199, %v215
      %v220 = vmul.f32 %v216, 0.7978846
      %v221 = vmul.f32 %v217, 0.7978846
      %v222 = vmul.f32 %v218, 0.7978846
      %v223 = vmul.f32 %v219, 0.7978846
      %v224 = vtanh.pop %v220
      %v225 = vtanh.pop %v221
      %v226 = vtanh.pop %v222
      %v227 = vtanh.pop %v223
      %v228 = vadd.f32 %v224, 1.0
      %v229 = vadd.f32 %v225, 1.0
      %v230 = vadd.f32 %v226, 1.0
      %v231 = vadd.f32 %v227, 1.0
      %v232 = vmul.f32 %v200, %v228
      %v233 = vmul.f32 %v201, %v229
      %v234 = vmul.f32 %v202, %v230
      %v235 = vmul.f32 %v203, %v231
      %v236 = vpack.c.bf16 %v234, %v232
      %v237 = vpack.c.bf16 %v235, %v233
      %v240 = vunpack.c.l.b16 %v236
      %v241 = vunpack.c.l.b16 %v237
      %v242 = vunpack.c.h.b16 %v236
      %v243 = vunpack.c.h.b16 %v237
      %v244 = vpack.c.b16 %v241, %v240
      %v245 = vpack.c.b16 %v243, %v242
      %248 = vst [vmem:[#allocation9] sm:$0xff] %v244
      %249 = vst [vmem:[#allocation9 + $0x8] sm:$0xff] %v245
    $region33: #{_lambda_.17} parent=1 // pred_fallthru
      _
    // Predicated region
    $region34: #{_lambda_.17} parent=1 // pred_check
      _
    $region35: #{_lambda_.17} parent=1 // pred_check_branch
      %251 = sbr.rel (0) target = $region37
    $region36: #{_lambda_.17} parent=1 // pred_region
      %s253 = ssub.s32 256, 256
      %254 = vsyncadd [#allocation5], %s253
      %s255 = sshll.u32 [#allocation9], 4
      %s256 = int_to_ptr.vmem [resolvable:$true] %s255
      %261 = dma.vmem_to_hbm [thread:$0]  %s256, 256, %s3, [#allocation5], 128, 128, 8
    $region37: #{_lambda_.17} parent=1 // pred_fallthru
      _
    // Predicated region
    $region38: #{_lambda_.17} parent=1 // pred_check
      _
    $region39: #{_lambda_.17} parent=1 // pred_check_branch
      %263 = sbr.rel (0) target = $region41
    $region40: #{_lambda_.17} parent=1 // pred_region
      %264 = dma.done [#allocation5], 256
    $region41: #{_lambda_.17} parent=1 // pred_fallthru
      _
    %265 = vsyncpa [#allocation4], 1
    %266 = vsyncpa [#allocation7], 1
    %267 = vsyncpa [#allocation5], 1

// kernel: _lambda_.24
$region0: #{_lambda_.24}
  #allocation0 [shape = 'u32[]', space=smem, size = 0x4, offset = 0x4, fixed_abs, tag = 'smem constant byte address 0x4 - core index']
  #allocation1 [shape = 'u32[144,128]{1,0:T(1,128)}', space=vmem, size = 0x12000, scoped, tag = 'internal scratch']
  #allocation2 [shape = 'f32[16,64]{1,0:T(8,128)}', space=vmem, size = 0x2000, scoped, tag = 'scratch operand']
  %s0 = inlined_call_operand.hbm [shape: bf16[16,64], index: 0, kind: input, shape index: {}]
  %s1 = inlined_call_operand.hbm [shape: bf16[64,64], index: 1, kind: input, shape index: {}]
  %s2 = inlined_call_operand.hbm [shape: f32[1,64], index: 2, kind: input, shape index: {}]
  %s3 = inlined_call_operand.hbm [shape: f32[1,64], index: 3, kind: input, shape index: {}]
  %s4 = inlined_call_operand.hbm [shape: f32[1,64], index: 4, kind: input, shape index: {}]
  %s5 = inlined_call_operand.hbm [shape: bf16[16,64], index: 5, kind: output, shape index: {}]
  %s6 = sld [smem:[#allocation0]]
  $region58: #{_lambda_.24} parent=0
    _
  %s8 = ssub.s32 1, %s6
  %s9 = scalar_select 0, %s8, %s6
  $region1: #{_lambda_.24} parent=0
    #allocation3 [shape = 'u8[4096]{0}', space=vmem, size = 0x1000, scoped, tag = 'input window, operand 0, single buffered']
    #allocation4 [shape = 's32[1]{0}', space=sflag, size = 0x4, scoped, tag = 'scoped memory for _lambda_.24']
    #allocation5 [shape = 's32[1]{0}', space=sflag, size = 0x4, scoped, tag = 'scoped memory for _lambda_.24']
    #allocation6 [shape = 'u8[16384]{0}', space=vmem, size = 0x4000, scoped, tag = 'input window, operand 1, single buffered']
    #allocation7 [shape = 's32[1]{0}', space=sflag, size = 0x4, scoped, tag = 'scoped memory for _lambda_.24']
    #allocation8 [shape = 'u8[512]{0}', space=vmem, size = 0x400, scoped, tag = 'input window, operand 2, single buffered']
    #allocation9 [shape = 'u8[512]{0}', space=vmem, size = 0x400, scoped, tag = 'input window, operand 3, single buffered']
    #allocation10 [shape = 's32[1]{0}', space=sflag, size = 0x4, scoped, tag = 'scoped memory for _lambda_.24']
    #allocation11 [shape = 'u8[512]{0}', space=vmem, size = 0x400, scoped, tag = 'input window, operand 4, single buffered']
    #allocation12 [shape = 'u8[4096]{0}', space=vmem, size = 0x1000, scoped, tag = 'output window, operand 0, single buffered']
    %10 = vsyncpa [#allocation4], 0
    %11 = vsyncpa [#allocation7], 0
    %12 = vsyncpa [#allocation10], 0
    %13 = vsyncpa [#allocation5], 0
    // Predicated region
    $region2: #{_lambda_.24} parent=1 // pred_check
      _
    $region3: #{_lambda_.24} parent=1 // pred_check_branch
      %15 = sbr.rel (0) target = $region5
    $region4: #{_lambda_.24} parent=1 // pred_region
      %s17 = ssub.s32 128, 128
      %18 = vsyncadd [#allocation4], %s17
      %s19 = sshll.u32 [#allocation3], 4
      %s20 = int_to_ptr.vmem [resolvable:$true] %s19
      %25 = dma.hbm_to_vmem [thread:$0]  %s0, 128, %s20, [#allocation4], 64, 64, 4
    $region5: #{_lambda_.24} parent=1 // pred_fallthru
      _
    // Predicated region
    $region6: #{_lambda_.24} parent=1 // pred_check
      _
    $region7: #{_lambda_.24} parent=1 // pred_check_branch
      %27 = sbr.rel (0) target = $region9
    $region8: #{_lambda_.24} parent=1 // pred_region
      %s29 = ssub.s32 512, 512
      %30 = vsyncadd [#allocation7], %s29
      %s31 = sshll.u32 [#allocation6], 4
      %s32 = int_to_ptr.vmem [resolvable:$true] %s31
      %37 = dma.hbm_to_vmem [thread:$0]  %s1, 512, %s32, [#allocation7], 64, 64, 4
    $region9: #{_lambda_.24} parent=1 // pred_fallthru
      _
    // Predicated region
    $region10: #{_lambda_.24} parent=1 // pred_check
      _
    $region11: #{_lambda_.24} parent=1 // pred_check_branch
      %39 = sbr.rel (0) target = $region13
    $region12: #{_lambda_.24} parent=1 // pred_region
      %s41 = ssub.s32 16, 16
      %42 = vsyncadd [#allocation7], %s41
      %s44 = sshll.u32 [#allocation8], 4
      %s45 = int_to_ptr.vmem [resolvable:$true] %s44
      %47 = dma.hbm_to_vmem [thread:$0]  %s2, 16, %s45, [#allocation7]
    $region13: #{_lambda_.24} parent=1 // pred_fallthru
      _
    // Predicated region
    $region14: #{_lambda_.24} parent=1 // pred_check
      _
    $region15: #{_lambda_.24} parent=1 // pred_check_branch
      %49 = sbr.rel (0) target = $region17
    $region16: #{_lambda_.24} parent=1 // pred_region
      %s51 = ssub.s32 16, 16
      %52 = vsyncadd [#allocation10], %s51
      %s54 = sshll.u32 [#allocation9], 4
      %s55 = int_to_ptr.vmem [resolvable:$true] %s54
      %57 = dma.hbm_to_vmem [thread:$0]  %s3, 16, %s55, [#allocation10]
    $region17: #{_lambda_.24} parent=1 // pred_fallthru
      _
    // Predicated region
    $region18: #{_lambda_.24} parent=1 // pred_check
      _
    $region19: #{_lambda_.24} parent=1 // pred_check_branch
      %59 = sbr.rel (0) target = $region21
    $region20: #{_lambda_.24} parent=1 // pred_region
      %s61 = ssub.s32 16, 16
      %62 = vsyncadd [#allocation10], %s61
      %s64 = sshll.u32 [#allocation11], 4
      %s65 = int_to_ptr.vmem [resolvable:$true] %s64
      %67 = dma.hbm_to_vmem [thread:$0]  %s4, 16, %s65, [#allocation10]
    $region21: #{_lambda_.24} parent=1 // pred_fallthru
      _
    // Predicated region
    $region22: #{_lambda_.24} parent=1 // pred_check
      _
    $region23: #{_lambda_.24} parent=1 // pred_check_branch
      %69 = sbr.rel (0) target = $region25
    $region24: #{_lambda_.24} parent=1 // pred_region
      %70 = dma.done [#allocation4], 128
    $region25: #{_lambda_.24} parent=1 // pred_fallthru
      _
    // Predicated region
    $region26: #{_lambda_.24} parent=1 // pred_check
      _
    $region27: #{_lambda_.24} parent=1 // pred_check_branch
      %72 = sbr.rel (0) target = $region29
    $region28: #{_lambda_.24} parent=1 // pred_region
      %73 = dma.done [#allocation7], 512
    $region29: #{_lambda_.24} parent=1 // pred_fallthru
      _
    // Predicated region
    $region30: #{_lambda_.24} parent=1 // pred_check
      _
    $region31: #{_lambda_.24} parent=1 // pred_check_branch
      %75 = sbr.rel (0) target = $region33
    $region32: #{_lambda_.24} parent=1 // pred_region
      %76 = dma.done [#allocation7], 16
    $region33: #{_lambda_.24} parent=1 // pred_fallthru
      _
    // Predicated region
    $region34: #{_lambda_.24} parent=1 // pred_check
      _
    $region35: #{_lambda_.24} parent=1 // pred_check_branch
      %78 = sbr.rel (0) target = $region37
    $region36: #{_lambda_.24} parent=1 // pred_region
      %79 = dma.done [#allocation10], 16
    $region37: #{_lambda_.24} parent=1 // pred_fallthru
      _
    // Predicated region
    $region38: #{_lambda_.24} parent=1 // pred_check
      _
    $region39: #{_lambda_.24} parent=1 // pred_check_branch
      %81 = sbr.rel (0) target = $region41
    $region40: #{_lambda_.24} parent=1 // pred_region
      %82 = dma.done [#allocation10], 16
    $region41: #{_lambda_.24} parent=1 // pred_fallthru
      _
    %p84 = scmp.eq.s32.totalorder 0, 0
    // Predicated region
    $region42: #{_lambda_.24} parent=1 // pred_check
      %p85 = pneg %p84
    $region43: #{_lambda_.24} parent=1 // pred_check_branch
      %87 = sbr.rel (%p85) target = $region45
    $region44: #{_lambda_.24} parent=1 // pred_region
      %vm88 = vcmask 523264
      %89 = vst.msk [vmem:[#allocation2] sm:$0xff] %vm88, 0.0
      %90 = vst.msk [vmem:[#allocation2 + $0x8] sm:$0xff] %vm88, 0.0
    $region45: #{_lambda_.24} parent=1 // pred_fallthru
      _
    %v91 = vld [vmem:[#allocation2] sm:$0xff]
    %v92 = vld [vmem:[#allocation2 + $0x8] sm:$0xff]
    %v93 = vld [vmem:[#allocation3] sm:$0xf]
    %v94 = vld [vmem:[#allocation3 + $0x4] sm:$0xf]
    %v95 = vld [vmem:[#allocation6] sm:$0xf]
    %v96 = vld [vmem:[#allocation6 + $0x4] sm:$0xf]
    %v97 = vld [vmem:[#allocation6 + $0x8] sm:$0xf]
    %v98 = vld [vmem:[#allocation6 + $0xc] sm:$0xf]
    %v99 = vld [vmem:[#allocation6 + $0x10] sm:$0xf]
    %v100 = vld [vmem:[#allocation6 + $0x14] sm:$0xf]
    %v101 = vld [vmem:[#allocation6 + $0x18] sm:$0xf]
    %v102 = vld [vmem:[#allocation6 + $0x1c] sm:$0xf]
    %v105 = vunpack.c.l.b16 %v93
    %v106 = vunpack.c.l.b16 %v94
    %v107 = vpack.c.b16 %v106, %v105
    %v116 = vunpack.c.l.b16 %v95
    %v117 = vunpack.c.l.b16 %v96
    %v118 = vunpack.c.l.b16 %v97
    %v119 = vunpack.c.l.b16 %v98
    %v120 = vunpack.c.l.b16 %v99
    %v121 = vunpack.c.l.b16 %v100
    %v122 = vunpack.c.l.b16 %v101
    %v123 = vunpack.c.l.b16 %v102
    %v124 = vpack.c.b16 %v117, %v116
    %v125 = vpack.c.b16 %v119, %v118
    %v126 = vpack.c.b16 %v121, %v120
    %v127 = vpack.c.b16 %v123, %v122
    %vm132 = vcmask 523264
    %v134 = vsel %vm132, %v107, 0
    %136 = vmatprep.subr.bf16.mxu0 0
    %137 = vmatpush1.bf16.msra.mxu0 %v124
    %138 = vmatprep.subr.bf16.mxu0 0
    %139 = vmatpush1.bf16.msra.mxu0 %v125
    %140 = vmatprep.subr.bf16.mxu0 0
    %141 = vmatpush1.bf16.msra.mxu0 %v126
    %142 = vmatprep.subr.bf16.mxu0 0
    %143 = vmatpush1.bf16.msra.mxu0 %v127
    %144 = vmatprep.subr.bf16.mxu0 0
    %145 = vmatpush1.bf16.msra.mxu0 0
    %146 = vmatprep.subr.bf16.mxu0 0
    %147 = vmatpush1.bf16.msra.mxu0 0
    %148 = vmatprep.subr.bf16.mxu0 0
    %149 = vmatpush1.bf16.msra.mxu0 0
    %150 = vmatprep.subr.bf16.mxu0 0
    %151 = vmatpush1.bf16.msra.mxu0 0
    %152 = vmatprep.subr.bf16.mxu0 0
    %153 = vmatpush1.bf16.msra.mxu0 0
    %154 = vmatprep.subr.bf16.mxu0 0
    %155 = vmatpush1.bf16.msra.mxu0 0
    %156 = vmatprep.subr.bf16.mxu0 0
    %157 = vmatpush1.bf16.msra.mxu0 0
    %158 = vmatprep.subr.bf16.mxu0 0
    %159 = vmatpush1.bf16.msra.mxu0 0
    %160 = vmatprep.subr.bf16.mxu0 0
    %161 = vmatpush1.bf16.msra.mxu0 0
    %162 = vmatprep.subr.bf16.mxu0 0
    %163 = vmatpush1.bf16.msra.mxu0 0
    %164 = vmatprep.subr.bf16.mxu0 0
    %165 = vmatpush1.bf16.msra.mxu0 0
    %166 = vmatprep.subr.bf16.mxu0 0
    %167 = vmatpush1.bf16.msra.mxu0 0
    %168 = vmatprep.mubr.bf16.mxu0 0
    %169 = vmatmul.mubr.bf16.gmra.mrb[0].mxu0 %v134
    %v170 = vpop.f32.mrb[0].mxu0
    %v171 = vadd.f32 0.0, %v170
    %v172 = vpop.f32.mrb[0].mxu0
    %v173 = vpop.f32.mrb[0].mxu0
    %v174 = vadd.f32 0.0, %v173
    %v175 = vpop.f32.mrb[0].mxu0
    %176 = vdwg.mxu0
    %v177 = vadd.f32 %v91, %v171
    %v178 = vadd.f32 %v92, %v174
    %179 = vst.msk [vmem:[#allocation2] sm:$0xff] %vm132, %v177
    %180 = vst.msk [vmem:[#allocation2 + $0x8] sm:$0xff] %vm132, %v178
    // Predicated region
    $region46: #{_lambda_.24} parent=1 // pred_check
      %p181 = pneg %p84
    $region47: #{_lambda_.24} parent=1 // pred_check_branch
      %183 = sbr.rel (%p181) target = $region49
    $region48: #{_lambda_.24} parent=1 // pred_region
      %v184 = vld [vmem:[#allocation2] sm:$0xff]
      %v185 = vld [vmem:[#allocation2 + $0x8] sm:$0xff]
      %v186 = vld [vmem:[#allocation8] sm:$0x1]
      %v188 = vlaneseq
      %v189 = vshrl.u32 %v188, 7
      %v190 = vsub.s32 0, %v189
      %v191 = vrot.slane %v186, %v190
      %v193 = vadd.f32 %v184, %v191
      %v194 = vadd.f32 %v185, %v191
      %v195 = vmul.f32 %v193, 0.5
      %v196 = vmul.f32 %v194, 0.5
      %v197 = vmul.f32 %v193, 0.044715
      %v198 = vmul.f32 %v194, 0.044715
      %v199 = vmul.f32 %v197, %v193
      %v200 = vmul.f32 %v198, %v194
      %v201 = vmul.f32 %v199, %v193
      %v202 = vmul.f32 %v200, %v194
      %v203 = vadd.f32 %v193, %v201
      %v204 = vadd.f32 %v194, %v202
      %v205 = vmul.f32 %v203, 0.7978846
      %v206 = vmul.f32 %v204, 0.7978846
      %v207 = vtanh.pop %v205
      %v208 = vtanh.pop %v206
      %v209 = vadd.f32 %v207, 1.0
      %v210 = vadd.f32 %v208, 1.0
      %v211 = vmul.f32 %v195, %v209
      %v212 = vmul.f32 %v196, %v210
      %v213 = vsel %vm132, %v211, 0.0
      %214 = vadd.xlane.f32.xlu0 %v213
      %v215 = vpop.xlane.xlu0 %214
      %v216 = vsel %vm132, %v212, 0.0
      %217 = vadd.xlane.f32.xlu0 %v216
      %v218 = vpop.xlane.xlu0 %217
      %v219 = vrcp.pop 64.0
      %v220 = vmul.f32 %v215, %v219
      %v221 = vmul.f32 %v218, %v219
      %v222 = vsub.f32 %v211, %v220
      %v223 = vsub.f32 %v212, %v221
      %v224 = vmul.f32 %v222, %v222
      %v225 = vmul.f32 %v223, %v223
      %v226 = vsel %vm132, %v224, 0.0
      %227 = vadd.xlane.f32.xlu0 %v226
      %v228 = vpop.xlane.xlu0 %227
      %v229 = vsel %vm132, %v225, 0.0
      %230 = vadd.xlane.f32.xlu0 %v229
      %v231 = vpop.xlane.xlu0 %230
      %v232 = vmul.f32 %v228, %v219
      %v233 = vmul.f32 %v231, %v219
      %v234 = vadd.f32 %v232, 1e-12
      %v235 = vadd.f32 %v233, 1e-12
      %v236 = vrsqrt.pop %v234
      %v237 = vrsqrt.pop %v235
      %v238 = vmul.f32 %v222, %v236
      %v239 = vmul.f32 %v223, %v237
      %v240 = vld [vmem:[#allocation9] sm:$0x1]
      %v242 = vlaneseq
      %v243 = vshrl.u32 %v242, 7
      %v244 = vsub.s32 0, %v243
      %v245 = vrot.slane %v240, %v244
      %v247 = vmul.f32 %v238, %v245
      %v248 = vmul.f32 %v239, %v245
      %v249 = vld [vmem:[#allocation11] sm:$0x1]
      %v251 = vlaneseq
      %v252 = vshrl.u32 %v251, 7
      %v253 = vsub.s32 0, %v252
      %v254 = vrot.slane %v249, %v253
      %v256 = vadd.f32 %v247, %v254
      %v257 = vadd.f32 %v248, %v254
      %v258 = vpack.c.bf16 %v257, %v256
      %v260 = vunpack.c.l.b16 %v258
      %v261 = vunpack.c.h.b16 %v258
      %v262 = vpack.c.b16 %v260, %v260
      %v263 = vpack.c.b16 %v261, %v261
      %vm266 = vcmask 519168
      %267 = vst.msk [vmem:[#allocation12] sm:$0xf] %vm266, %v262
      %268 = vst.msk [vmem:[#allocation12 + $0x4] sm:$0xf] %vm266, %v263
    $region49: #{_lambda_.24} parent=1 // pred_fallthru
      _
    // Predicated region
    $region50: #{_lambda_.24} parent=1 // pred_check
      _
    $region51: #{_lambda_.24} parent=1 // pred_check_branch
      %270 = sbr.rel (0) target = $region53
    $region52: #{_lambda_.24} parent=1 // pred_region
      %s272 = ssub.s32 128, 128
      %273 = vsyncadd [#allocation5], %s272
      %s274 = sshll.u32 [#allocation12], 4
      %s275 = int_to_ptr.vmem [resolvable:$true] %s274
      %280 = dma.vmem_to_hbm [thread:$0]  %s275, 128, %s5, [#allocation5], 64, 64, 4
    $region53: #{_lambda_.24} parent=1 // pred_fallthru
      _
    // Predicated region
    $region54: #{_lambda_.24} parent=1 // pred_check
      _
    $region55: #{_lambda_.24} parent=1 // pred_check_branch
      %282 = sbr.rel (0) target = $region57
    $region56: #{_lambda_.24} parent=1 // pred_region
      %283 = dma.done [#allocation5], 128
    $region57: #{_lambda_.24} parent=1 // pred_fallthru
      _
    %284 = vsyncpa [#allocation4], 1
    %285 = vsyncpa [#allocation7], 1
    %286 = vsyncpa [#allocation10], 1
    %287 = vsyncpa [#allocation5], 1

// kernel: _lambda_.25
$region0: #{_lambda_.25}
  #allocation0 [shape = 'u32[]', space=smem, size = 0x4, offset = 0x4, fixed_abs, tag = 'smem constant byte address 0x4 - core index']
  #allocation1 [shape = 'u32[144,128]{1,0:T(1,128)}', space=vmem, size = 0x12000, scoped, tag = 'internal scratch']
  #allocation2 [shape = 'f32[16,256]{1,0:T(8,128)}', space=vmem, size = 0x4000, scoped, tag = 'scratch operand']
  %s0 = inlined_call_operand.hbm [shape: bf16[16,64], index: 0, kind: input, shape index: {}]
  %s1 = inlined_call_operand.hbm [shape: bf16[64,256], index: 1, kind: input, shape index: {}]
  %s2 = inlined_call_operand.hbm [shape: f32[1,256], index: 2, kind: input, shape index: {}]
  %s3 = inlined_call_operand.hbm [shape: f32[16,256], index: 3, kind: output, shape index: {}]
  %s4 = sld [smem:[#allocation0]]
  $region42: #{_lambda_.25} parent=0
    _
  %s6 = ssub.s32 1, %s4
  %s7 = scalar_select 0, %s6, %s4
  $region1: #{_lambda_.25} parent=0
    #allocation3 [shape = 'u8[4096]{0}', space=vmem, size = 0x1000, scoped, tag = 'input window, operand 0, single buffered']
    #allocation4 [shape = 's32[1]{0}', space=sflag, size = 0x4, scoped, tag = 'scoped memory for _lambda_.25']
    #allocation5 [shape = 's32[1]{0}', space=sflag, size = 0x4, scoped, tag = 'scoped memory for _lambda_.25']
    #allocation6 [shape = 'u8[32768]{0}', space=vmem, size = 0x8000, scoped, tag = 'input window, operand 1, single buffered']
    #allocation7 [shape = 's32[1]{0}', space=sflag, size = 0x4, scoped, tag = 'scoped memory for _lambda_.25']
    #allocation8 [shape = 'u8[1024]{0}', space=vmem, size = 0x400, scoped, tag = 'input window, operand 2, single buffered']
    #allocation9 [shape = 'u8[16384]{0}', space=vmem, size = 0x4000, scoped, tag = 'output window, operand 0, single buffered']
    %8 = vsyncpa [#allocation4], 0
    %9 = vsyncpa [#allocation7], 0
    %10 = vsyncpa [#allocation5], 0
    // Predicated region
    $region2: #{_lambda_.25} parent=1 // pred_check
      _
    $region3: #{_lambda_.25} parent=1 // pred_check_branch
      %12 = sbr.rel (0) target = $region5
    $region4: #{_lambda_.25} parent=1 // pred_region
      %s14 = ssub.s32 128, 128
      %15 = vsyncadd [#allocation4], %s14
      %s16 = sshll.u32 [#allocation3], 4
      %s17 = int_to_ptr.vmem [resolvable:$true] %s16
      %22 = dma.hbm_to_vmem [thread:$0]  %s0, 128, %s17, [#allocation4], 64, 64, 4
    $region5: #{_lambda_.25} parent=1 // pred_fallthru
      _
    // Predicated region
    $region6: #{_lambda_.25} parent=1 // pred_check
      _
    $region7: #{_lambda_.25} parent=1 // pred_check_branch
      %24 = sbr.rel (0) target = $region9
    $region8: #{_lambda_.25} parent=1 // pred_region
      %s26 = ssub.s32 1024, 1024
      %27 = vsyncadd [#allocation7], %s26
      %s28 = sshll.u32 [#allocation6], 4
      %s29 = int_to_ptr.vmem [resolvable:$true] %s28
      %34 = dma.hbm_to_vmem [thread:$0]  %s1, 1024, %s29, [#allocation7], 128, 128, 8
    $region9: #{_lambda_.25} parent=1 // pred_fallthru
      _
    // Predicated region
    $region10: #{_lambda_.25} parent=1 // pred_check
      _
    $region11: #{_lambda_.25} parent=1 // pred_check_branch
      %36 = sbr.rel (0) target = $region13
    $region12: #{_lambda_.25} parent=1 // pred_region
      %s38 = ssub.s32 32, 32
      %39 = vsyncadd [#allocation7], %s38
      %s41 = sshll.u32 [#allocation8], 4
      %s42 = int_to_ptr.vmem [resolvable:$true] %s41
      %44 = dma.hbm_to_vmem [thread:$0]  %s2, 32, %s42, [#allocation7]
    $region13: #{_lambda_.25} parent=1 // pred_fallthru
      _
    // Predicated region
    $region14: #{_lambda_.25} parent=1 // pred_check
      _
    $region15: #{_lambda_.25} parent=1 // pred_check_branch
      %46 = sbr.rel (0) target = $region17
    $region16: #{_lambda_.25} parent=1 // pred_region
      %47 = dma.done [#allocation4], 128
    $region17: #{_lambda_.25} parent=1 // pred_fallthru
      _
    // Predicated region
    $region18: #{_lambda_.25} parent=1 // pred_check
      _
    $region19: #{_lambda_.25} parent=1 // pred_check_branch
      %49 = sbr.rel (0) target = $region21
    $region20: #{_lambda_.25} parent=1 // pred_region
      %50 = dma.done [#allocation7], 1024
    $region21: #{_lambda_.25} parent=1 // pred_fallthru
      _
    // Predicated region
    $region22: #{_lambda_.25} parent=1 // pred_check
      _
    $region23: #{_lambda_.25} parent=1 // pred_check_branch
      %52 = sbr.rel (0) target = $region25
    $region24: #{_lambda_.25} parent=1 // pred_region
      %53 = dma.done [#allocation7], 32
    $region25: #{_lambda_.25} parent=1 // pred_fallthru
      _
    %p55 = scmp.eq.s32.totalorder 0, 0
    // Predicated region
    $region26: #{_lambda_.25} parent=1 // pred_check
      %p56 = pneg %p55
    $region27: #{_lambda_.25} parent=1 // pred_check_branch
      %58 = sbr.rel (%p56) target = $region29
    $region28: #{_lambda_.25} parent=1 // pred_region
      %59 = vst [vmem:[#allocation2] sm:$0xff] 0.0
      %60 = vst [vmem:[#allocation2 + $0x8] sm:$0xff] 0.0
      %61 = vst [vmem:[#allocation2 + $0x10] sm:$0xff] 0.0
      %62 = vst [vmem:[#allocation2 + $0x18] sm:$0xff] 0.0
    $region29: #{_lambda_.25} parent=1 // pred_fallthru
      _
    %v63 = vld [vmem:[#allocation2] sm:$0xff]
    %v64 = vld [vmem:[#allocation2 + $0x8] sm:$0xff]
    %v65 = vld [vmem:[#allocation2 + $0x10] sm:$0xff]
    %v66 = vld [vmem:[#allocation2 + $0x18] sm:$0xff]
    %v67 = vld [vmem:[#allocation3] sm:$0xf]
    %v68 = vld [vmem:[#allocation3 + $0x4] sm:$0xf]
    %v69 = vld [vmem:[#allocation6] sm:$0xff]
    %v70 = vld [vmem:[#allocation6 + $0x8] sm:$0xff]
    %v71 = vld [vmem:[#allocation6 + $0x10] sm:$0xff]
    %v72 = vld [vmem:[#allocation6 + $0x18] sm:$0xff]
    %v73 = vld [vmem:[#allocation6 + $0x20] sm:$0xff]
    %v74 = vld [vmem:[#allocation6 + $0x28] sm:$0xff]
    %v75 = vld [vmem:[#allocation6 + $0x30] sm:$0xff]
    %v76 = vld [vmem:[#allocation6 + $0x38] sm:$0xff]
    %v79 = vunpack.c.l.b16 %v67
    %v80 = vunpack.c.l.b16 %v68
    %v81 = vpack.c.b16 %v80, %v79
    %v90 = vunpack.c.l.b16 %v69
    %v91 = vunpack.c.h.b16 %v69
    %v92 = vunpack.c.l.b16 %v70
    %v93 = vunpack.c.h.b16 %v70
    %v94 = vunpack.c.l.b16 %v71
    %v95 = vunpack.c.h.b16 %v71
    %v96 = vunpack.c.l.b16 %v72
    %v97 = vunpack.c.h.b16 %v72
    %v98 = vunpack.c.l.b16 %v73
    %v99 = vunpack.c.h.b16 %v73
    %v100 = vunpack.c.l.b16 %v74
    %v101 = vunpack.c.h.b16 %v74
    %v102 = vunpack.c.l.b16 %v75
    %v103 = vunpack.c.h.b16 %v75
    %v104 = vunpack.c.l.b16 %v76
    %v105 = vunpack.c.h.b16 %v76
    %v106 = vpack.c.b16 %v92, %v90
    %v107 = vpack.c.b16 %v93, %v91
    %v108 = vpack.c.b16 %v96, %v94
    %v109 = vpack.c.b16 %v97, %v95
    %v110 = vpack.c.b16 %v100, %v98
    %v111 = vpack.c.b16 %v101, %v99
    %v112 = vpack.c.b16 %v104, %v102
    %v113 = vpack.c.b16 %v105, %v103
    %vm122 = vcmask 523264
    %v124 = vsel %vm122, %v81, 0
    %126 = vmatprep.subr.bf16.mxu0 %v107
    %127 = vmatpush1.bf16.msra.mxu0 %v106
    %128 = vmatprep.subr.bf16.mxu0 %v109
    %129 = vmatpush1.bf16.msra.mxu0 %v108
    %130 = vmatprep.subr.bf16.mxu0 %v111
    %131 = vmatpush1.bf16.msra.mxu0 %v110
    %132 = vmatprep.subr.bf16.mxu0 %v113
    %133 = vmatpush1.bf16.msra.mxu0 %v112
    %134 = vmatprep.subr.bf16.mxu0 0
    %135 = vmatpush1.bf16.msra.mxu0 0
    %136 = vmatprep.subr.bf16.mxu0 0
    %137 = vmatpush1.bf16.msra.mxu0 0
    %138 = vmatprep.subr.bf16.mxu0 0
    %139 = vmatpush1.bf16.msra.mxu0 0
    %140 = vmatprep.subr.bf16.mxu0 0
    %141 = vmatpush1.bf16.msra.mxu0 0
    %142 = vmatprep.subr.bf16.mxu0 0
    %143 = vmatpush1.bf16.msra.mxu0 0
    %144 = vmatprep.subr.bf16.mxu0 0
    %145 = vmatpush1.bf16.msra.mxu0 0
    %146 = vmatprep.subr.bf16.mxu0 0
    %147 = vmatpush1.bf16.msra.mxu0 0
    %148 = vmatprep.subr.bf16.mxu0 0
    %149 = vmatpush1.bf16.msra.mxu0 0
    %150 = vmatprep.subr.bf16.mxu0 0
    %151 = vmatpush1.bf16.msra.mxu0 0
    %152 = vmatprep.subr.bf16.mxu0 0
    %153 = vmatpush1.bf16.msra.mxu0 0
    %154 = vmatprep.subr.bf16.mxu0 0
    %155 = vmatpush1.bf16.msra.mxu0 0
    %156 = vmatprep.subr.bf16.mxu0 0
    %157 = vmatpush1.bf16.msra.mxu0 0
    %158 = vmatprep.mubr.bf16.mxu0 0
    %159 = vmatmul.mubr.bf16.gmra.mrb[0].mxu0 %v124
    %v160 = vpop.f32.mrb[0].mxu0
    %v161 = vadd.f32 0.0, %v160
    %v162 = vpop.f32.mrb[0].mxu0
    %v163 = vadd.f32 0.0, %v162
    %v164 = vpop.f32.mrb[0].mxu0
    %v165 = vadd.f32 0.0, %v164
    %v166 = vpop.f32.mrb[0].mxu0
    %v167 = vadd.f32 0.0, %v166
    %168 = vdwg.mxu0
    %v169 = vadd.f32 %v63, %v161
    %v170 = vadd.f32 %v64, %v163
    %v171 = vadd.f32 %v65, %v165
    %v172 = vadd.f32 %v66, %v167
    %173 = vst [vmem:[#allocation2] sm:$0xff] %v169
    %174 = vst [vmem:[#allocation2 + $0x8] sm:$0xff] %v170
    %175 = vst [vmem:[#allocation2 + $0x10] sm:$0xff] %v171
    %176 = vst [vmem:[#allocation2 + $0x18] sm:$0xff] %v172
    // Predicated region
    $region30: #{_lambda_.25} parent=1 // pred_check
      %p177 = pneg %p55
    $region31: #{_lambda_.25} parent=1 // pred_check_branch
      %179 = sbr.rel (%p177) target = $region33
    $region32: #{_lambda_.25} parent=1 // pred_region
      %v180 = vld [vmem:[#allocation2] sm:$0xff]
      %v181 = vld [vmem:[#allocation2 + $0x8] sm:$0xff]
      %v182 = vld [vmem:[#allocation2 + $0x10] sm:$0xff]
      %v183 = vld [vmem:[#allocation2 + $0x18] sm:$0xff]
      %v184 = vld [vmem:[#allocation8] sm:$0x3]
      %v186 = vlaneseq
      %v187 = vshrl.u32 %v186, 7
      %v188 = vsub.s32 0, %v187
      %v189 = vrot.slane %v184, %v188
      %v190 = vlaneseq
      %v191 = vshrl.u32 %v190, 7
      %v192 = vsub.s32 1, %v191
      %v193 = vrot.slane %v184, %v192
      %v196 = vadd.f32 %v180, %v189
      %v197 = vadd.f32 %v181, %v193
      %v198 = vadd.f32 %v182, %v189
      %v199 = vadd.f32 %v183, %v193
      %200 = vst [vmem:[#allocation9] sm:$0xff] %v196
      %201 = vst [vmem:[#allocation9 + $0x8] sm:$0xff] %v197
      %202 = vst [vmem:[#allocation9 + $0x10] sm:$0xff] %v198
      %203 = vst [vmem:[#allocation9 + $0x18] sm:$0xff] %v199
    $region33: #{_lambda_.25} parent=1 // pred_fallthru
      _
    // Predicated region
    $region34: #{_lambda_.25} parent=1 // pred_check
      _
    $region35: #{_lambda_.25} parent=1 // pred_check_branch
      %205 = sbr.rel (0) target = $region37
    $region36: #{_lambda_.25} parent=1 // pred_region
      %s207 = ssub.s32 512, 512
      %208 = vsyncadd [#allocation5], %s207
      %s209 = sshll.u32 [#allocation9], 4
      %s210 = int_to_ptr.vmem [resolvable:$true] %s209
      %215 = dma.vmem_to_hbm [thread:$0]  %s210, 512, %s3, [#allocation5], 256, 256, 16
    $region37: #{_lambda_.25} parent=1 // pred_fallthru
      _
    // Predicated region
    $region38: #{_lambda_.25} parent=1 // pred_check
      _
    $region39: #{_lambda_.25} parent=1 // pred_check_branch
      %217 = sbr.rel (0) target = $region41
    $region40: #{_lambda_.25} parent=1 // pred_region
      %218 = dma.done [#allocation5], 512
    $region41: #{_lambda_.25} parent=1 // pred_fallthru
      _
    %219 = vsyncpa [#allocation4], 1
    %220 = vsyncpa [#allocation7], 1
    %221 = vsyncpa [#allocation5], 1

// kernel: _lambda_.18
$region0: #{_lambda_.18}
  #allocation0 [shape = 'u32[]', space=smem, size = 0x4, offset = 0x4, fixed_abs, tag = 'smem constant byte address 0x4 - core index']
  #allocation1 [shape = 'u32[144,128]{1,0:T(1,128)}', space=vmem, size = 0x12000, scoped, tag = 'internal scratch']
  #allocation2 [shape = 'f32[16,64]{1,0:T(8,128)}', space=vmem, size = 0x2000, scoped, tag = 'scratch operand']
  %s0 = inlined_call_operand.hbm [shape: bf16[16,256], index: 0, kind: input, shape index: {}]
  %s1 = inlined_call_operand.hbm [shape: bf16[256,64], index: 1, kind: input, shape index: {}]
  %s2 = inlined_call_operand.hbm [shape: f32[1,64], index: 2, kind: input, shape index: {}]
  %s3 = inlined_call_operand.hbm [shape: bf16[16,64], index: 3, kind: input, shape index: {}]
  %s4 = inlined_call_operand.hbm [shape: f32[1,64], index: 4, kind: input, shape index: {}]
  %s5 = inlined_call_operand.hbm [shape: f32[1,64], index: 5, kind: input, shape index: {}]
  %s6 = inlined_call_operand.hbm [shape: bf16[16,64], index: 6, kind: output, shape index: {}]
  %s7 = sld [smem:[#allocation0]]
  $region66: #{_lambda_.18} parent=0
    _
  %s9 = ssub.s32 1, %s7
  %s10 = scalar_select 0, %s9, %s7
  $region1: #{_lambda_.18} parent=0
    #allocation3 [shape = 'u8[8192]{0}', space=vmem, size = 0x2000, scoped, tag = 'input window, operand 0, single buffered']
    #allocation4 [shape = 's32[1]{0}', space=sflag, size = 0x4, scoped, tag = 'scoped memory for _lambda_.18']
    #allocation5 [shape = 's32[1]{0}', space=sflag, size = 0x4, scoped, tag = 'scoped memory for _lambda_.18']
    #allocation6 [shape = 'u8[65536]{0}', space=vmem, size = 0x10000, scoped, tag = 'input window, operand 1, single buffered']
    #allocation7 [shape = 's32[1]{0}', space=sflag, size = 0x4, scoped, tag = 'scoped memory for _lambda_.18']
    #allocation8 [shape = 'u8[512]{0}', space=vmem, size = 0x400, scoped, tag = 'input window, operand 2, single buffered']
    #allocation9 [shape = 'u8[4096]{0}', space=vmem, size = 0x1000, scoped, tag = 'input window, operand 3, single buffered']
    #allocation10 [shape = 's32[1]{0}', space=sflag, size = 0x4, scoped, tag = 'scoped memory for _lambda_.18']
    #allocation11 [shape = 'u8[512]{0}', space=vmem, size = 0x400, scoped, tag = 'input window, operand 4, single buffered']
    #allocation12 [shape = 'u8[512]{0}', space=vmem, size = 0x400, scoped, tag = 'input window, operand 5, single buffered']
    #allocation13 [shape = 's32[1]{0}', space=sflag, size = 0x4, scoped, tag = 'scoped memory for _lambda_.18']
    #allocation14 [shape = 'u8[4096]{0}', space=vmem, size = 0x1000, scoped, tag = 'output window, operand 0, single buffered']
    %11 = vsyncpa [#allocation4], 0
    %12 = vsyncpa [#allocation7], 0
    %13 = vsyncpa [#allocation10], 0
    %14 = vsyncpa [#allocation13], 0
    %15 = vsyncpa [#allocation5], 0
    // Predicated region
    $region2: #{_lambda_.18} parent=1 // pred_check
      _
    $region3: #{_lambda_.18} parent=1 // pred_check_branch
      %17 = sbr.rel (0) target = $region5
    $region4: #{_lambda_.18} parent=1 // pred_region
      %s19 = ssub.s32 256, 256
      %20 = vsyncadd [#allocation4], %s19
      %s21 = sshll.u32 [#allocation3], 4
      %s22 = int_to_ptr.vmem [resolvable:$true] %s21
      %27 = dma.hbm_to_vmem [thread:$0]  %s0, 256, %s22, [#allocation4], 128, 128, 8
    $region5: #{_lambda_.18} parent=1 // pred_fallthru
      _
    // Predicated region
    $region6: #{_lambda_.18} parent=1 // pred_check
      _
    $region7: #{_lambda_.18} parent=1 // pred_check_branch
      %29 = sbr.rel (0) target = $region9
    $region8: #{_lambda_.18} parent=1 // pred_region
      %s31 = ssub.s32 2048, 2048
      %32 = vsyncadd [#allocation7], %s31
      %s33 = sshll.u32 [#allocation6], 4
      %s34 = int_to_ptr.vmem [resolvable:$true] %s33
      %39 = dma.hbm_to_vmem [thread:$0]  %s1, 2048, %s34, [#allocation7], 64, 64, 4
    $region9: #{_lambda_.18} parent=1 // pred_fallthru
      _
    // Predicated region
    $region10: #{_lambda_.18} parent=1 // pred_check
      _
    $region11: #{_lambda_.18} parent=1 // pred_check_branch
      %41 = sbr.rel (0) target = $region13
    $region12: #{_lambda_.18} parent=1 // pred_region
      %s43 = ssub.s32 16, 16
      %44 = vsyncadd [#allocation7], %s43
      %s46 = sshll.u32 [#allocation8], 4
      %s47 = int_to_ptr.vmem [resolvable:$true] %s46
      %49 = dma.hbm_to_vmem [thread:$0]  %s2, 16, %s47, [#allocation7]
    $region13: #{_lambda_.18} parent=1 // pred_fallthru
      _
    // Predicated region
    $region14: #{_lambda_.18} parent=1 // pred_check
      _
    $region15: #{_lambda_.18} parent=1 // pred_check_branch
      %51 = sbr.rel (0) target = $region17
    $region16: #{_lambda_.18} parent=1 // pred_region
      %s53 = ssub.s32 128, 128
      %54 = vsyncadd [#allocation10], %s53
      %s55 = sshll.u32 [#allocation9], 4
      %s56 = int_to_ptr.vmem [resolvable:$true] %s55
      %61 = dma.hbm_to_vmem [thread:$0]  %s3, 128, %s56, [#allocation10], 64, 64, 4
    $region17: #{_lambda_.18} parent=1 // pred_fallthru
      _
    // Predicated region
    $region18: #{_lambda_.18} parent=1 // pred_check
      _
    $region19: #{_lambda_.18} parent=1 // pred_check_branch
      %63 = sbr.rel (0) target = $region21
    $region20: #{_lambda_.18} parent=1 // pred_region
      %s65 = ssub.s32 16, 16
      %66 = vsyncadd [#allocation10], %s65
      %s68 = sshll.u32 [#allocation11], 4
      %s69 = int_to_ptr.vmem [resolvable:$true] %s68
      %71 = dma.hbm_to_vmem [thread:$0]  %s4, 16, %s69, [#allocation10]
    $region21: #{_lambda_.18} parent=1 // pred_fallthru
      _
    // Predicated region
    $region22: #{_lambda_.18} parent=1 // pred_check
      _
    $region23: #{_lambda_.18} parent=1 // pred_check_branch
      %73 = sbr.rel (0) target = $region25
    $region24: #{_lambda_.18} parent=1 // pred_region
      %s75 = ssub.s32 16, 16
      %76 = vsyncadd [#allocation13], %s75
      %s78 = sshll.u32 [#allocation12], 4
      %s79 = int_to_ptr.vmem [resolvable:$true] %s78
      %81 = dma.hbm_to_vmem [thread:$0]  %s5, 16, %s79, [#allocation13]
    $region25: #{_lambda_.18} parent=1 // pred_fallthru
      _
    // Predicated region
    $region26: #{_lambda_.18} parent=1 // pred_check
      _
    $region27: #{_lambda_.18} parent=1 // pred_check_branch
      %83 = sbr.rel (0) target = $region29
    $region28: #{_lambda_.18} parent=1 // pred_region
      %84 = dma.done [#allocation4], 256
    $region29: #{_lambda_.18} parent=1 // pred_fallthru
      _
    // Predicated region
    $region30: #{_lambda_.18} parent=1 // pred_check
      _
    $region31: #{_lambda_.18} parent=1 // pred_check_branch
      %86 = sbr.rel (0) target = $region33
    $region32: #{_lambda_.18} parent=1 // pred_region
      %87 = dma.done [#allocation7], 2048
    $region33: #{_lambda_.18} parent=1 // pred_fallthru
      _
    // Predicated region
    $region34: #{_lambda_.18} parent=1 // pred_check
      _
    $region35: #{_lambda_.18} parent=1 // pred_check_branch
      %89 = sbr.rel (0) target = $region37
    $region36: #{_lambda_.18} parent=1 // pred_region
      %90 = dma.done [#allocation7], 16
    $region37: #{_lambda_.18} parent=1 // pred_fallthru
      _
    // Predicated region
    $region38: #{_lambda_.18} parent=1 // pred_check
      _
    $region39: #{_lambda_.18} parent=1 // pred_check_branch
      %92 = sbr.rel (0) target = $region41
    $region40: #{_lambda_.18} parent=1 // pred_region
      %93 = dma.done [#allocation10], 128
    $region41: #{_lambda_.18} parent=1 // pred_fallthru
      _
    // Predicated region
    $region42: #{_lambda_.18} parent=1 // pred_check
      _
    $region43: #{_lambda_.18} parent=1 // pred_check_branch
      %95 = sbr.rel (0) target = $region45
    $region44: #{_lambda_.18} parent=1 // pred_region
      %96 = dma.done [#allocation10], 16
    $region45: #{_lambda_.18} parent=1 // pred_fallthru
      _
    // Predicated region
    $region46: #{_lambda_.18} parent=1 // pred_check
      _
    $region47: #{_lambda_.18} parent=1 // pred_check_branch
      %98 = sbr.rel (0) target = $region49
    $region48: #{_lambda_.18} parent=1 // pred_region
      %99 = dma.done [#allocation13], 16
    $region49: #{_lambda_.18} parent=1 // pred_fallthru
      _
    %p101 = scmp.eq.s32.totalorder 0, 0
    // Predicated region
    $region50: #{_lambda_.18} parent=1 // pred_check
      %p102 = pneg %p101
    $region51: #{_lambda_.18} parent=1 // pred_check_branch
      %104 = sbr.rel (%p102) target = $region53
    $region52: #{_lambda_.18} parent=1 // pred_region
      %vm105 = vcmask 523264
      %106 = vst.msk [vmem:[#allocation2] sm:$0xff] %vm105, 0.0
      %107 = vst.msk [vmem:[#allocation2 + $0x8] sm:$0xff] %vm105, 0.0
    $region53: #{_lambda_.18} parent=1 // pred_fallthru
      _
    %v108 = vld [vmem:[#allocation2] sm:$0xff]
    %v109 = vld [vmem:[#allocation2 + $0x8] sm:$0xff]
    %v110 = vld [vmem:[#allocation3] sm:$0xff]
    %v111 = vld [vmem:[#allocation3 + $0x8] sm:$0xff]
    %v112 = vld [vmem:[#allocation6] sm:$0xf]
    %v113 = vld [vmem:[#allocation6 + $0x4] sm:$0xf]
    %v114 = vld [vmem:[#allocation6 + $0x8] sm:$0xf]
    %v115 = vld [vmem:[#allocation6 + $0xc] sm:$0xf]
    %v116 = vld [vmem:[#allocation6 + $0x10] sm:$0xf]
    %v117 = vld [vmem:[#allocation6 + $0x14] sm:$0xf]
    %v118 = vld [vmem:[#allocation6 + $0x18] sm:$0xf]
    %v119 = vld [vmem:[#allocation6 + $0x1c] sm:$0xf]
    %v120 = vld [vmem:[#allocation6 + $0x20] sm:$0xf]
    %v121 = vld [vmem:[#allocation6 + $0x24] sm:$0xf]
    %v122 = vld [vmem:[#allocation6 + $0x28] sm:$0xf]
    %v123 = vld [vmem:[#allocation6 + $0x2c] sm:$0xf]
    %v124 = vld [vmem:[#allocation6 + $0x30] sm:$0xf]
    %v125 = vld [vmem:[#allocation6 + $0x34] sm:$0xf]
    %v126 = vld [vmem:[#allocation6 + $0x38] sm:$0xf]
    %v127 = vld [vmem:[#allocation6 + $0x3c] sm:$0xf]
    %v128 = vld [vmem:[#allocation6 + $0x40] sm:$0xf]
    %v129 = vld [vmem:[#allocation6 + $0x44] sm:$0xf]
    %v130 = vld [vmem:[#allocation6 + $0x48] sm:$0xf]
    %v131 = vld [vmem:[#allocation6 + $0x4c] sm:$0xf]
    %v132 = vld [vmem:[#allocation6 + $0x50] sm:$0xf]
    %v133 = vld [vmem:[#allocation6 + $0x54] sm:$0xf]
    %v134 = vld [vmem:[#allocation6 + $0x58] sm:$0xf]
    %v135 = vld [vmem:[#allocation6 + $0x5c] sm:$0xf]
    %v136 = vld [vmem:[#allocation6 + $0x60] sm:$0xf]
    %v137 = vld [vmem:[#allocation6 + $0x64] sm:$0xf]
    %v138 = vld [vmem:[#allocation6 + $0x68] sm:$0xf]
    %v139 = vld [vmem:[#allocation6 + $0x6c] sm:$0xf]
    %v140 = vld [vmem:[#allocation6 + $0x70] sm:$0xf]
    %v141 = vld [vmem:[#allocation6 + $0x74] sm:$0xf]
    %v142 = vld [vmem:[#allocation6 + $0x78] sm:$0xf]
    %v143 = vld [vmem:[#allocation6 + $0x7c] sm:$0xf]
    %v146 = vunpack.c.l.b16 %v110
    %v147 = vunpack.c.h.b16 %v110
    %v148 = vunpack.c.l.b16 %v111
    %v149 = vunpack.c.h.b16 %v111
    %v150 = vpack.c.b16 %v148, %v146
    %v151 = vpack.c.b16 %v149, %v147
    %v186 = vunpack.c.l.b16 %v112
    %v187 = vunpack.c.l.b16 %v113
    %v188 = vunpack.c.l.b16 %v114
    %v189 = vunpack.c.l.b16 %v115
    %v190 = vunpack.c.l.b16 %v116
    %v191 = vunpack.c.l.b16 %v117
    %v192 = vunpack.c.l.b16 %v118
    %v193 = vunpack.c.l.b16 %v119
    %v194 = vunpack.c.l.b16 %v120
    %v195 = vunpack.c.l.b16 %v121
    %v196 = vunpack.c.l.b16 %v122
    %v197 = vunpack.c.l.b16 %v123
    %v198 = vunpack.c.l.b16 %v124
    %v199 = vunpack.c.l.b16 %v125
    %v200 = vunpack.c.l.b16 %v126
    %v201 = vunpack.c.l.b16 %v127
    %v202 = vunpack.c.l.b16 %v128
    %v203 = vunpack.c.l.b16 %v129
    %v204 = vunpack.c.l.b16 %v130
    %v205 = vunpack.c.l.b16 %v131
    %v206 = vunpack.c.l.b16 %v132
    %v207 = vunpack.c.l.b16 %v133
    %v208 = vunpack.c.l.b16 %v134
    %v209 = vunpack.c.l.b16 %v135
    %v210 = vunpack.c.l.b16 %v136
    %v211 = vunpack.c.l.b16 %v137
    %v212 = vunpack.c.l.b16 %v138
    %v213 = vunpack.c.l.b16 %v139
    %v214 = vunpack.c.l.b16 %v140
    %v215 = vunpack.c.l.b16 %v141
    %v216 = vunpack.c.l.b16 %v142
    %v217 = vunpack.c.l.b16 %v143
    %v218 = vpack.c.b16 %v187, %v186
    %v219 = vpack.c.b16 %v189, %v188
    %v220 = vpack.c.b16 %v191, %v190
    %v221 = vpack.c.b16 %v193, %v192
    %v222 = vpack.c.b16 %v195, %v194
    %v223 = vpack.c.b16 %v197, %v196
    %v224 = vpack.c.b16 %v199, %v198
    %v225 = vpack.c.b16 %v201, %v200
    %v226 = vpack.c.b16 %v203, %v202
    %v227 = vpack.c.b16 %v205, %v204
    %v228 = vpack.c.b16 %v207, %v206
    %v229 = vpack.c.b16 %v209, %v208
    %v230 = vpack.c.b16 %v211, %v210
    %v231 = vpack.c.b16 %v213, %v212
    %v232 = vpack.c.b16 %v215, %v214
    %v233 = vpack.c.b16 %v217, %v216
    %250 = vmatprep.subr.bf16.mxu0 0
    %251 = vmatpush1.bf16.msra.mxu0 %v218
    %252 = vmatprep.subr.bf16.mxu0 0
    %253 = vmatpush1.bf16.msra.mxu0 %v219
    %254 = vmatprep.subr.bf16.mxu0 0
    %255 = vmatpush1.bf16.msra.mxu0 %v220
    %256 = vmatprep.subr.bf16.mxu0 0
    %257 = vmatpush1.bf16.msra.mxu0 %v221
    %258 = vmatprep.subr.bf16.mxu0 0
    %259 = vmatpush1.bf16.msra.mxu0 %v222
    %260 = vmatprep.subr.bf16.mxu0 0
    %261 = vmatpush1.bf16.msra.mxu0 %v223
    %262 = vmatprep.subr.bf16.mxu0 0
    %263 = vmatpush1.bf16.msra.mxu0 %v224
    %264 = vmatprep.subr.bf16.mxu0 0
    %265 = vmatpush1.bf16.msra.mxu0 %v225
    %266 = vmatprep.subr.bf16.mxu0 0
    %267 = vmatpush1.bf16.msra.mxu0 %v226
    %268 = vmatprep.subr.bf16.mxu0 0
    %269 = vmatpush1.bf16.msra.mxu0 %v227
    %270 = vmatprep.subr.bf16.mxu0 0
    %271 = vmatpush1.bf16.msra.mxu0 %v228
    %272 = vmatprep.subr.bf16.mxu0 0
    %273 = vmatpush1.bf16.msra.mxu0 %v229
    %274 = vmatprep.subr.bf16.mxu0 0
    %275 = vmatpush1.bf16.msra.mxu0 %v230
    %276 = vmatprep.subr.bf16.mxu0 0
    %277 = vmatpush1.bf16.msra.mxu0 %v231
    %278 = vmatprep.subr.bf16.mxu0 0
    %279 = vmatpush1.bf16.msra.mxu0 %v232
    %280 = vmatprep.subr.bf16.mxu0 0
    %281 = vmatpush1.bf16.msra.mxu0 %v233
    %282 = vmatprep.mubr.bf16.mxu0 %v151
    %283 = vmatmul.mubr.bf16.gmra.mrb[0].mxu0 %v150
    %v284 = vpop.f32.mrb[0].mxu0
    %v285 = vadd.f32 0.0, %v284
    %v286 = vpop.f32.mrb[0].mxu0
    %v287 = vpop.f32.mrb[0].mxu0
    %v288 = vadd.f32 0.0, %v287
    %v289 = vpop.f32.mrb[0].mxu0
    %290 = vdwg.mxu0
    %v291 = vadd.f32 %v108, %v285
    %v292 = vadd.f32 %v109, %v288
    %vm293 = vcmask 523264
    %294 = vst.msk [vmem:[#allocation2] sm:$0xff] %vm293, %v291
    %295 = vst.msk [vmem:[#allocation2 + $0x8] sm:$0xff] %vm293, %v292
    // Predicated region
    $region54: #{_lambda_.18} parent=1 // pred_check
      %p296 = pneg %p101
    $region55: #{_lambda_.18} parent=1 // pred_check_branch
      %298 = sbr.rel (%p296) target = $region57
    $region56: #{_lambda_.18} parent=1 // pred_region
      %v299 = vld [vmem:[#allocation2] sm:$0xff]
      %v300 = vld [vmem:[#allocation2 + $0x8] sm:$0xff]
      %v301 = vld [vmem:[#allocation8] sm:$0x1]
      %v303 = vlaneseq
      %v304 = vshrl.u32 %v303, 7
      %v305 = vsub.s32 0, %v304
      %v306 = vrot.slane %v301, %v305
      %v308 = vadd.f32 %v299, %v306
      %v309 = vadd.f32 %v300, %v306
      %v310 = vld [vmem:[#allocation9] sm:$0xf]
      %v311 = vld [vmem:[#allocation9 + $0x4] sm:$0xf]
      %v312 = vunpack.c.l.bf16 %v310
      %v313 = vunpack.c.l.bf16 %v311
      %v314 = vadd.f32 %v308, %v312
      %v315 = vadd.f32 %v309, %v313
      %v316 = vsel %vm293, %v314, 0.0
      %317 = vadd.xlane.f32.xlu0 %v316
      %v318 = vpop.xlane.xlu0 %317
      %v319 = vsel %vm293, %v315, 0.0
      %320 = vadd.xlane.f32.xlu0 %v319
      %v321 = vpop.xlane.xlu0 %320
      %v322 = vrcp.pop 64.0
      %v323 = vmul.f32 %v318, %v322
      %v324 = vmul.f32 %v321, %v322
      %v325 = vsub.f32 %v314, %v323
      %v326 = vsub.f32 %v315, %v324
      %v327 = vmul.f32 %v325, %v325
      %v328 = vmul.f32 %v326, %v326
      %v329 = vsel %vm293, %v327, 0.0
      %330 = vadd.xlane.f32.xlu0 %v329
      %v331 = vpop.xlane.xlu0 %330
      %v332 = vsel %vm293, %v328, 0.0
      %333 = vadd.xlane.f32.xlu0 %v332
      %v334 = vpop.xlane.xlu0 %333
      %v335 = vmul.f32 %v331, %v322
      %v336 = vmul.f32 %v334, %v322
      %v337 = vadd.f32 %v335, 1e-12
      %v338 = vadd.f32 %v336, 1e-12
      %v339 = vrsqrt.pop %v337
      %v340 = vrsqrt.pop %v338
      %v341 = vmul.f32 %v325, %v339
      %v342 = vmul.f32 %v326, %v340
      %v343 = vld [vmem:[#allocation11] sm:$0x1]
      %v345 = vlaneseq
      %v346 = vshrl.u32 %v345, 7
      %v347 = vsub.s32 0, %v346
      %v348 = vrot.slane %v343, %v347
      %v350 = vmul.f32 %v341, %v348
      %v351 = vmul.f32 %v342, %v348
      %v352 = vld [vmem:[#allocation12] sm:$0x1]
      %v354 = vlaneseq
      %v355 = vshrl.u32 %v354, 7
      %v356 = vsub.s32 0, %v355
      %v357 = vrot.slane %v352, %v356
      %v359 = vadd.f32 %v350, %v357
      %v360 = vadd.f32 %v351, %v357
      %v361 = vpack.c.bf16 %v360, %v359
      %v363 = vunpack.c.l.b16 %v361
      %v364 = vunpack.c.h.b16 %v361
      %v365 = vpack.c.b16 %v363, %v363
      %v366 = vpack.c.b16 %v364, %v364
      %vm369 = vcmask 519168
      %370 = vst.msk [vmem:[#allocation14] sm:$0xf] %vm369, %v365
      %371 = vst.msk [vmem:[#allocation14 + $0x4] sm:$0xf] %vm369, %v366
    $region57: #{_lambda_.18} parent=1 // pred_fallthru
      _
    // Predicated region
    $region58: #{_lambda_.18} parent=1 // pred_check
      _
    $region59: #{_lambda_.18} parent=1 // pred_check_branch
      %373 = sbr.rel (0) target = $region61
    $region60: #{_lambda_.18} parent=1 // pred_region
      %s375 = ssub.s32 128, 128
      %376 = vsyncadd [#allocation5], %s375
      %s377 = sshll.u32 [#allocation14], 4
      %s378 = int_to_ptr.vmem [resolvable:$true] %s377
      %383 = dma.vmem_to_hbm [thread:$0]  %s378, 128, %s6, [#allocation5], 64, 64, 4
    $region61: #{_lambda_.18} parent=1 // pred_fallthru
      _
    // Predicated region
    $region62: #{_lambda_.18} parent=1 // pred_check
      _
    $region63: #{_lambda_.18} parent=1 // pred_check_branch
      %385 = sbr.rel (0) target = $region65
    $region64: #{_lambda_.18} parent=1 // pred_region
      %386 = dma.done [#allocation5], 128
    $region65: #{_lambda_.18} parent=1 // pred_fallthru
      _
    %387 = vsyncpa [#allocation4], 1
    %388 = vsyncpa [#allocation7], 1
    %389 = vsyncpa [#allocation10], 1
    %390 = vsyncpa [#allocation13], 1
    %391 = vsyncpa [#allocation5], 1

</llo_original>
